<compile_context>
chip_gen: v6e
topology: v6e:2x2x1
jax: 0.10.0
libtpu: 0.0.40
codegen_flags: <defaults>
</compile_context>

<pallas_src>
import functools

import jax
import jax.numpy as jnp
from jax import lax
from jax.experimental import pallas as pl
from jax.experimental.pallas import tpu as pltpu

_BN_EPS = 1e-5  # PyTorch BatchNorm1d default eps


def _token_repr_kernel(x_hbm, cond_ref, gamma_ref, beta_ref,
                       sw_ref, sb_ref, hw_ref, hb_ref,
                       w1_ref, b1_ref, w2_ref, b2_ref,
                       out_ref, slab_scr,
                       *, dilation_rates, kernel_size):
    """One grid step == one UnalignedBlock; the activation lives in `out_ref` (VMEM)."""
    blk = pl.program_id(0)
    B, L, C = out_ref.shape
    BL = B * L
    K = kernel_size
    half = (K - 1) // 2

    # Block 0: DMA the stack input straight from HBM into the resident output block.
    # x has memory_space=pl.ANY (no pipelined VMEM buffers); the output block has a
    # constant index_map over the "arbitrary" block axis, so it stays resident in VMEM
    # across all blocks and is written back to HBM only once, after the last block.
    @pl.when(blk == 0)
    def _():
        pltpu.sync_copy(x_hbm, out_ref)

    # Per-block parameters for this grid step (BlockSpec already selected block `blk`,
    # and the next block's parameters DMA-prefetch behind this block's compute).
    gamma = gamma_ref[0]                       # (1, C)   BatchNorm1d weight
    beta = beta_ref[0]                         # (1, C)   BatchNorm1d bias
    bias1 = b1_ref[...]                        # (1, 1, C) conv1 bias
    bias2 = b2_ref[...]                        # (1, 1, C) conv2 bias
    cond = cond_ref[...].astype(jnp.float32)   # (B, C)   ccbn_condition

    # ConditionalBatchNorm scale/shift: Linear(C -> L) of the condition, computed once
    # per block (hoisted) and shared by both CBN applications inside this block.
    scale = (1.0 + jnp.dot(cond, sw_ref[0], preferred_element_type=jnp.float32)
             + sb_ref[0])[:, :, None]          # (B, L, 1)
    shift = (jnp.dot(cond, hw_ref[0], preferred_element_type=jnp.float32)
             + hb_ref[0])[:, :, None]          # (B, L, 1)

    def cbn_relu(h):
        # BatchNorm1d with training-mode batch statistics (per channel over B and L),
        # with normalize+affine folded into per-channel a/b computed on the (1, C)
        # stats, so the full-size work is a single FMA per element; then the
        # conditional scale/shift FMA and ReLU.
        h2 = h.reshape(BL, C)
        mean = jnp.mean(h2, axis=0, keepdims=True)                     # (1, C)
        var = jnp.mean(h2 * h2, axis=0, keepdims=True) - mean * mean   # (1, C)
        var = jnp.maximum(var, 0.0)           # guard one-pass cancellation
        a = gamma * lax.rsqrt(var + _BN_EPS)                           # (1, C)
        b = beta - mean * a                                            # (1, C)
        hn = (h2 * a + b).reshape(B, L, C)
        return jnp.maximum(scale * hn + shift, 0.0)

    def dilated_conv(h, w_ref, bias, dil):
        # Dilated 'same' Conv1d as ONE im2col MXU matmul. The K shifted copies are
        # written into a bf16 VMEM slab (tap-major 128-wide lane blocks) using XLU
        # sublane rolls; only the B*|off| boundary rows that wrap across a sequence
        # end are re-zeroed with tiny stores (no full-(B*L, C) select per tap).
        h2 = h.reshape(BL, C)
        for k in range(K):
            off = (k - half) * dil             # static per-tap input offset
            c0 = k * C
            if off == 0:
                slab_scr[:, c0:c0 + C] = h2.astype(jnp.bfloat16)
            else:
                # Rolling the flattened (B*L, C) view is a per-sequence shift except
                # for the rows that cross a batch boundary — exactly the rows that
                # 'same' padding zeroes (re-zeroed below).
                rolled = pltpu.roll(h2, shift=(-off) % BL, axis=0)
                slab_scr[:, c0:c0 + C] = rolled.astype(jnp.bfloat16)
                zeros = jnp.zeros((abs(off), C), jnp.bfloat16)
                for b in range(B):
                    if off > 0:     # taps past the end of sequence b
                        slab_scr[b * L + L - off:b * L + L, c0:c0 + C] = zeros
                    else:           # taps before the start of sequence b
                        slab_scr[b * L:b * L - off, c0:c0 + C] = zeros
        y = jnp.dot(slab_scr[...], w_ref[0], preferred_element_type=jnp.float32)
        return y.reshape(B, L, C) + bias

    # Statically-unrolled dispatch over blocks (dilation rates are compile-time),
    # gated by pl.when so each grid step executes only its own block's body.
    for bi, (d0, d1) in enumerate(dilation_rates):
        @pl.when(blk == bi)
        def _(d0=d0, d1=d1):
            x_in = out_ref[...].astype(jnp.float32)  # resident activation (skip input)
            h = cbn_relu(x_in)                       # relu_1(cond_batchnorm(x))
            h = dilated_conv(h, w1_ref, bias1, d0)   # mask_conv1
            h = cbn_relu(h)                          # relu_2(cond_batchnorm(conv1_out))
            h = dilated_conv(h, w2_ref, bias2, d1)   # mask_conv2
            out_ref[...] = (h + x_in).astype(out_ref.dtype)  # residual skip connection


def unaligned_token_representation(x, ccbn_condition, params, dilation_rates):
    """x: (B, L, C) channels-last; ccbn_condition: (B, C). Returns (B, L, C)."""
    B, L, C = x.shape
    num_blocks = len(params)
    assert num_blocks == len(dilation_rates)
    K = params[0]["w1"].shape[0]
    assert K % 2 == 1, "'same' Conv1d here assumes an odd kernel size"
    assert max(max(int(d) for d in dr) for dr in dilation_rates) * ((K - 1) // 2) < L

    # Stack per-block parameters along a leading block axis so the kernel's grid axis
    # can BlockSpec-index them (next block's weights prefetch behind current compute).
    gamma = jnp.stack([p["gamma"] for p in params])                   # (NB, 1, C)
    beta = jnp.stack([p["beta"] for p in params])                     # (NB, 1, C)
    sw = jnp.stack([p["scale_W"].T for p in params])                  # (NB, C, L)
    sb = jnp.stack([p["scale_b"][None, :] for p in params])           # (NB, 1, L)
    hw = jnp.stack([p["shift_W"].T for p in params])                  # (NB, C, L)
    hb = jnp.stack([p["shift_b"][None, :] for p in params])           # (NB, 1, L)
    # Conv weights reshaped for im2col ((K, C_in, C_out) -> (K*C_in, C_out)), bf16:
    # only MXU operands are down-cast, accumulation and elementwise stay f32.
    w1 = jnp.stack([p["w1"].reshape(K * C, C) for p in params]).astype(jnp.bfloat16)
    b1 = jnp.stack([p["b1"] for p in params])                         # (NB, 1, C)
    w2 = jnp.stack([p["w2"].reshape(K * C, C) for p in params]).astype(jnp.bfloat16)
    b2 = jnp.stack([p["b2"] for p in params])                         # (NB, 1, C)

    kernel = functools.partial(
        _token_repr_kernel,
        dilation_rates=tuple(tuple(int(d) for d in dr) for dr in dilation_rates),
        kernel_size=K)

    blocked = lambda b: (b, 0, 0)   # per-block parameter tiles

    return pl.pallas_call(
        kernel,
        out_shape=jax.ShapeDtypeStruct((B, L, C), x.dtype),
        grid=(num_blocks,),
        in_specs=[
            pl.BlockSpec(memory_space=pl.ANY),       # x: stays in HBM, DMA'd at blk==0
            pl.BlockSpec((B, C), lambda b: (0, 0)),  # ccbn_condition (tiny, resident)
            pl.BlockSpec((1, 1, C), blocked),        # gamma
            pl.BlockSpec((1, 1, C), blocked),        # beta
            pl.BlockSpec((1, C, L), blocked),        # scale_W (stored transposed)
            pl.BlockSpec((1, 1, L), blocked),        # scale_b
            pl.BlockSpec((1, C, L), blocked),        # shift_W (stored transposed)
            pl.BlockSpec((1, 1, L), blocked),        # shift_b
            pl.BlockSpec((1, K * C, C), blocked),    # w1 (im2col layout, bf16)
            pl.BlockSpec((1, 1, C), blocked),        # b1
            pl.BlockSpec((1, K * C, C), blocked),    # w2 (im2col layout, bf16)
            pl.BlockSpec((1, 1, C), blocked),        # b2
        ],
        # Constant index over the "arbitrary" block axis: the output block doubles as
        # the resident activation/accumulator and is flushed to HBM once at the end.
        out_specs=pl.BlockSpec((B, L, C), lambda b: (0, 0, 0)),
        scratch_shapes=[pltpu.VMEM((B * L, K * C), jnp.bfloat16)],  # im2col slab
        compiler_params=pltpu.CompilerParams(
            # The block axis is a sequential dependency chain through the output block.
            dimension_semantics=("arbitrary",),
            # vmem_limit_bytes: left at the per-generation default (demo footprint is
            # ~1 MiB); re-derive per generation for production B*L (<=40 MiB on v7x).
        ),
    )(x, ccbn_condition, gamma, beta, sw, sb, hw, hb, w1, b1, w2, b2)


def _spectral_normalize(w, n_iter=30):
    # nn.utils.spectral_norm: weight / sigma_max(weight). PyTorch runs one power
    # iteration per forward on a persistent u; here we use a converged estimate.
    u = jnp.full((w.shape[0],), 1.0 / jnp.sqrt(w.shape[0]), w.dtype)
    v = None
    for _ in range(n_iter):
        v = w.T @ u
        v = v / (jnp.linalg.norm(v) + 1e-12)
        u = w @ v
        u = u / (jnp.linalg.norm(u) + 1e-12)
    sigma = u @ (w @ v)
    return w / sigma


def init_params(key, num_blocks, C, L, K):
    """Deterministic synthetic parameters for each UnalignedBlock."""
    params = []
    for _ in range(num_blocks):
        key, *ks = jax.random.split(key, 9)
        params.append({
            # ConditionalBatchNorm: BatchNorm1d(C) affine params
            "gamma": jnp.ones((1, C), jnp.float32),
            "beta": jnp.zeros((1, C), jnp.float32),
            # spectral_norm(Linear(C -> seq_len)) weights/biases
            "scale_W": _spectral_normalize(
                jax.random.normal(ks[0], (L, C), jnp.float32) * 0.1),
            "scale_b": jax.random.normal(ks[1], (L,), jnp.float32) * 0.1,
            "shift_W": _spectral_normalize(
                jax.random.normal(ks[2], (L, C), jnp.float32) * 0.1),
            "shift_b": jax.random.normal(ks[3], (L,), jnp.float32) * 0.1,
            # Conv1d(C, C, K) weights in (K, C_in, C_out) layout, biases as (1, C)
            "w1": jax.random.normal(ks[4], (K, C, C), jnp.float32) / ((C * K) ** 0.5),
            "b1": jax.random.normal(ks[5], (1, C), jnp.float32) * 0.1,
            "w2": jax.random.normal(ks[6], (K, C, C), jnp.float32) / ((C * K) ** 0.5),
            "b2": jax.random.normal(ks[7], (1, C), jnp.float32) * 0.1,
        })
    return params


def _reference_forward(x, cond, params, dilation_rates):
    """Plain-JAX reference of the PyTorch forward (f32 convs, two-pass variance)."""
    h = x.astype(jnp.float32)
    B, L, C = x.shape
    for p, dil in zip(params, dilation_rates):
        scale = (1.0 + cond @ p["scale_W"].T + p["scale_b"])[:, :, None]   # (B, L, 1)
        shift = (cond @ p["shift_W"].T + p["shift_b"])[:, :, None]
        gamma = p["gamma"][None]   # (1, 1, C)
        beta = p["beta"][None]

        def cbn_relu(t):
            mean = jnp.mean(t, axis=(0, 1), keepdims=True)
            var = jnp.mean((t - mean) ** 2, axis=(0, 1), keepdims=True)
            tn = (t - mean) / jnp.sqrt(var + _BN_EPS)
            return jnp.maximum(scale * (tn * gamma + beta) + shift, 0.0)

        def conv(t, w, b, d):
            K = w.shape[0]
            pad = d * (K - 1) // 2
            tp = jnp.pad(t, ((0, 0), (pad, pad), (0, 0)))
            out = sum(tp[:, k * d:k * d + L, :] @ w[k] for k in range(K))
            return out + b[None]

        t = cbn_relu(h)
        t = conv(t, p["w1"], p["b1"], dil[0])
        t = cbn_relu(t)
        t = conv(t, p["w2"], p["b2"], dil[1])
        h = h + t
    return h


if __name__ == "__main__":
    # Small demo shapes (real module: 256 channels/features, seq_len=200).
    # C=128 keeps the channel dim lane-dense; B*L=128 rows feed the MXU
    # (production shapes with C=256 and B*L a multiple of 256 fill v6e/v7x's MXU).
    B, L, C, K = 2, 64, 128, 3
    dilation_rates = ((1, 2), (2, 4))

    key = jax.random.PRNGKey(0)
    kx, kc, kp = jax.random.split(key, 3)
    x = jax.random.normal(kx, (B, L, C), jnp.float32)    # PyTorch (B, C, L), transposed
    cond = jax.random.normal(kc, (B, C), jnp.float32)    # ccbn_condition
    params = init_params(kp, len(dilation_rates), C, L, K)

    fwd = jax.jit(functools.partial(unaligned_token_representation,
                                    dilation_rates=dilation_rates))
    out = jax.block_until_ready(fwd(x, cond, params))
    assert out.shape == (B, L, C) and out.dtype == jnp.float32

    # Numerical check against the plain-JAX reference; tolerance covers the bf16
    # MXU inputs (f32 accumulation) and the clamped one-pass variance in the kernel.
    ref = _reference_forward(x, cond, params, dilation_rates)
    max_err = float(jnp.max(jnp.abs(out - ref)))
    assert max_err < 0.25, f"kernel/reference mismatch: max abs err {max_err}"
    print("KERNEL_OK")
</pallas_src>

<mosaic_0001>
module attributes {stable_mosaic.version = 11 : i64} {
  func.func @_token_repr_kernel(%arg0: i32, %arg1: memref<2x64x128xf32, #tpu.memory_space<any>>, %arg2: memref<2x128xf32, #tpu.memory_space<vmem>>, %arg3: memref<1x1x128xf32, #tpu.memory_space<vmem>>, %arg4: memref<1x1x128xf32, #tpu.memory_space<vmem>>, %arg5: memref<1x128x64xf32, #tpu.memory_space<vmem>>, %arg6: memref<1x1x64xf32, #tpu.memory_space<vmem>>, %arg7: memref<1x128x64xf32, #tpu.memory_space<vmem>>, %arg8: memref<1x1x64xf32, #tpu.memory_space<vmem>>, %arg9: memref<1x384x128xbf16, #tpu.memory_space<vmem>>, %arg10: memref<1x1x128xf32, #tpu.memory_space<vmem>>, %arg11: memref<1x384x128xbf16, #tpu.memory_space<vmem>>, %arg12: memref<1x1x128xf32, #tpu.memory_space<vmem>>, %arg13: memref<2x64x128xf32, #tpu.memory_space<vmem>>, %arg14: memref<128x384xbf16, #tpu.memory_space<vmem>>) attributes {dimension_semantics = [#tpu.dimension_semantics<arbitrary>], iteration_bounds = array<i64: 2>, scalar_prefetch = 0 : i64, scratch_operands = 1 : i64, tpu.core_type = #tpu.core_type<tc>, window_params = [{}, {pipeline_mode = #tpu.pipeline_mode<synchronous>, transform_indices = @transform_1, window_bounds = array<i64: 2, 128>}, {transform_indices = @transform_2, window_bounds = array<i64: 1, 1, 128>}, {transform_indices = @transform_3, window_bounds = array<i64: 1, 1, 128>}, {transform_indices = @transform_4, window_bounds = array<i64: 1, 128, 64>}, {transform_indices = @transform_5, window_bounds = array<i64: 1, 1, 64>}, {transform_indices = @transform_6, window_bounds = array<i64: 1, 128, 64>}, {transform_indices = @transform_7, window_bounds = array<i64: 1, 1, 64>}, {transform_indices = @transform_8, window_bounds = array<i64: 1, 384, 128>}, {transform_indices = @transform_9, window_bounds = array<i64: 1, 1, 128>}, {transform_indices = @transform_10, window_bounds = array<i64: 1, 384, 128>}, {transform_indices = @transform_11, window_bounds = array<i64: 1, 1, 128>}, {pipeline_mode = #tpu.pipeline_mode<synchronous>, transform_indices = @transform_12, window_bounds = array<i64: 2, 64, 128>}]} {
    %c0_i32 = arith.constant 0 : i32
    %0 = arith.cmpi eq, %arg0, %c0_i32 : i32
    %1 = arith.extui %0 : i1 to i32
    %c0_i32_0 = arith.constant 0 : i32
    %2 = arith.cmpi ne, %1, %c0_i32_0 : i32
    scf.if %2 {
      "tpu.region"() ({
        %34 = tpu.sem_alloc : memref<!tpu.dma_semaphore, #tpu.memory_space<semaphore_mem>>
        tpu.enqueue_dma source(%arg1 : memref<2x64x128xf32, #tpu.memory_space<any>>) target(%arg13 : memref<2x64x128xf32, #tpu.memory_space<vmem>>) target_semaphore(%34 : memref<!tpu.dma_semaphore, #tpu.memory_space<semaphore_mem>>)
        tpu.wait_dma2 semaphore(%34 : memref<!tpu.dma_semaphore, #tpu.memory_space<semaphore_mem>>) src(%arg1 : memref<2x64x128xf32, #tpu.memory_space<any>>) dst(%arg13 : memref<2x64x128xf32, #tpu.memory_space<vmem>>)
        tpu.yield
      }) : () -> ()
    } else {
    }
    %c0 = arith.constant 0 : index
    %c0_1 = arith.constant 0 : index
    %c0_2 = arith.constant 0 : index
    %3 = vector.load %arg3[%c0, %c0_1, %c0_2] : memref<1x1x128xf32, #tpu.memory_space<vmem>>, vector<1x1x128xf32>
    %4 = vector.shape_cast %3 : vector<1x1x128xf32> to vector<1x128xf32>
    %c0_3 = arith.constant 0 : index
    %c0_4 = arith.constant 0 : index
    %c0_5 = arith.constant 0 : index
    %5 = vector.load %arg4[%c0_3, %c0_4, %c0_5] : memref<1x1x128xf32, #tpu.memory_space<vmem>>, vector<1x1x128xf32>
    %6 = vector.shape_cast %5 : vector<1x1x128xf32> to vector<1x128xf32>
    %c0_6 = arith.constant 0 : index
    %c0_7 = arith.constant 0 : index
    %c0_8 = arith.constant 0 : index
    %7 = vector.load %arg10[%c0_6, %c0_7, %c0_8] : memref<1x1x128xf32, #tpu.memory_space<vmem>>, vector<1x1x128xf32>
    %c0_9 = arith.constant 0 : index
    %c0_10 = arith.constant 0 : index
    %c0_11 = arith.constant 0 : index
    %8 = vector.load %arg12[%c0_9, %c0_10, %c0_11] : memref<1x1x128xf32, #tpu.memory_space<vmem>>, vector<1x1x128xf32>
    %c0_12 = arith.constant 0 : index
    %c0_13 = arith.constant 0 : index
    %9 = vector.load %arg2[%c0_12, %c0_13] : memref<2x128xf32, #tpu.memory_space<vmem>>, vector<2x128xf32>
    %c0_14 = arith.constant 0 : index
    %c0_15 = arith.constant 0 : index
    %c0_16 = arith.constant 0 : index
    %10 = vector.load %arg5[%c0_14, %c0_15, %c0_16] : memref<1x128x64xf32, #tpu.memory_space<vmem>>, vector<1x128x64xf32>
    %11 = vector.shape_cast %10 : vector<1x128x64xf32> to vector<128x64xf32>
    %cst = arith.constant dense<0.000000e+00> : vector<2x64xf32>
    %12 = tpu.matmul %9, %11, %cst {dimension_numbers = #tpu.dot_dimension_numbers<[1], [0], [0], [1], [0, 0, 1, 1], [], []>} : vector<2x128xf32>, vector<128x64xf32>, vector<2x64xf32> -> vector<2x64xf32>
    %cst_17 = arith.constant 1.000000e+00 : f32
    %13 = vector.broadcast %cst_17 : f32 to vector<2x64xf32>
    %14 = arith.addf %13, %12 : vector<2x64xf32>
    %c0_18 = arith.constant 0 : index
    %c0_19 = arith.constant 0 : index
    %c0_20 = arith.constant 0 : index
    %15 = vector.load %arg6[%c0_18, %c0_19, %c0_20] : memref<1x1x64xf32, #tpu.memory_space<vmem>>, vector<1x1x64xf32>
    %16 = vector.shape_cast %15 : vector<1x1x64xf32> to vector<1x64xf32>
    %17 = vector.broadcast %16 : vector<1x64xf32> to vector<2x64xf32>
    %18 = arith.addf %14, %17 : vector<2x64xf32>
    %19 = vector.shape_cast %18 : vector<2x64xf32> to vector<2x64x1xf32>
    %c0_21 = arith.constant 0 : index
    %c0_22 = arith.constant 0 : index
    %c0_23 = arith.constant 0 : index
    %20 = vector.load %arg7[%c0_21, %c0_22, %c0_23] : memref<1x128x64xf32, #tpu.memory_space<vmem>>, vector<1x128x64xf32>
    %21 = vector.shape_cast %20 : vector<1x128x64xf32> to vector<128x64xf32>
    %cst_24 = arith.constant dense<0.000000e+00> : vector<2x64xf32>
    %22 = tpu.matmul %9, %21, %cst_24 {dimension_numbers = #tpu.dot_dimension_numbers<[1], [0], [0], [1], [0, 0, 1, 1], [], []>} : vector<2x128xf32>, vector<128x64xf32>, vector<2x64xf32> -> vector<2x64xf32>
    %c0_25 = arith.constant 0 : index
    %c0_26 = arith.constant 0 : index
    %c0_27 = arith.constant 0 : index
    %23 = vector.load %arg8[%c0_25, %c0_26, %c0_27] : memref<1x1x64xf32, #tpu.memory_space<vmem>>, vector<1x1x64xf32>
    %24 = vector.shape_cast %23 : vector<1x1x64xf32> to vector<1x64xf32>
    %25 = vector.broadcast %24 : vector<1x64xf32> to vector<2x64xf32>
    %26 = arith.addf %22, %25 : vector<2x64xf32>
    %27 = vector.shape_cast %26 : vector<2x64xf32> to vector<2x64x1xf32>
    %c0_i32_28 = arith.constant 0 : i32
    %28 = arith.cmpi eq, %arg0, %c0_i32_28 : i32
    %29 = arith.extui %28 : i1 to i32
    %c0_i32_29 = arith.constant 0 : i32
    %30 = arith.cmpi ne, %29, %c0_i32_29 : i32
    scf.if %30 {
      %c0_31 = arith.constant 0 : index
      %c0_32 = arith.constant 0 : index
      %c0_33 = arith.constant 0 : index
      %34 = vector.load %arg13[%c0_31, %c0_32, %c0_33] : memref<2x64x128xf32, #tpu.memory_space<vmem>>, vector<2x64x128xf32>
      %35 = vector.shape_cast %34 : vector<2x64x128xf32> to vector<128x128xf32>
      %cst_34 = arith.constant dense<0.000000e+00> : vector<128xf32>
      %36 = vector.multi_reduction <add>, %35, %cst_34 [0] : vector<128x128xf32> to vector<128xf32>
      %37 = vector.shape_cast %36 : vector<128xf32> to vector<1x128xf32>
      %cst_35 = arith.constant 1.280000e+02 : f32
      %38 = vector.broadcast %cst_35 : f32 to vector<1x128xf32>
      %39 = arith.divf %37, %38 : vector<1x128xf32>
      %40 = arith.mulf %35, %35 : vector<128x128xf32>
      %cst_36 = arith.constant dense<0.000000e+00> : vector<128xf32>
      %41 = vector.multi_reduction <add>, %40, %cst_36 [0] : vector<128x128xf32> to vector<128xf32>
      %42 = vector.shape_cast %41 : vector<128xf32> to vector<1x128xf32>
      %cst_37 = arith.constant 1.280000e+02 : f32
      %43 = vector.broadcast %cst_37 : f32 to vector<1x128xf32>
      %44 = arith.divf %42, %43 : vector<1x128xf32>
      %45 = arith.mulf %39, %39 : vector<1x128xf32>
      %46 = arith.subf %44, %45 : vector<1x128xf32>
      %cst_38 = arith.constant 0.000000e+00 : f32
      %47 = vector.broadcast %cst_38 : f32 to vector<1x128xf32>
      %48 = arith.maximumf %46, %47 : vector<1x128xf32>
      %cst_39 = arith.constant 9.99999974E-6 : f32
      %49 = vector.broadcast %cst_39 : f32 to vector<1x128xf32>
      %50 = arith.addf %48, %49 : vector<1x128xf32>
      %51 = math.rsqrt %50 : vector<1x128xf32>
      %52 = arith.mulf %4, %51 : vector<1x128xf32>
      %53 = arith.mulf %39, %52 : vector<1x128xf32>
      %54 = arith.subf %6, %53 : vector<1x128xf32>
      %55 = vector.broadcast %52 : vector<1x128xf32> to vector<128x128xf32>
      %56 = arith.mulf %35, %55 : vector<128x128xf32>
      %57 = vector.broadcast %54 : vector<1x128xf32> to vector<128x128xf32>
      %58 = arith.addf %56, %57 : vector<128x128xf32>
      %59 = vector.shape_cast %58 : vector<128x128xf32> to vector<2x64x128xf32>
      %60 = vector.broadcast %19 : vector<2x64x1xf32> to vector<2x64x128xf32>
      %61 = arith.mulf %60, %59 : vector<2x64x128xf32>
      %62 = vector.broadcast %27 : vector<2x64x1xf32> to vector<2x64x128xf32>
      %63 = arith.addf %61, %62 : vector<2x64x128xf32>
      %cst_40 = arith.constant 0.000000e+00 : f32
      %64 = vector.broadcast %cst_40 : f32 to vector<2x64x128xf32>
      %65 = arith.maximumf %63, %64 : vector<2x64x128xf32>
      %66 = vector.shape_cast %65 : vector<2x64x128xf32> to vector<128x128xf32>
      %c1_i32_41 = arith.constant 1 : i32
      %67 = tpu.dynamic_rotate %66 by %c1_i32_41 dim 0 : vector<128x128xf32>, i32 -> vector<128x128xf32>
      %68 = arith.truncf %67 : vector<128x128xf32> to vector<128x128xbf16>
      %c0_42 = arith.constant 0 : index
      %c0_43 = arith.constant 0 : index
      %69 = vector.load %arg14[%c0_42, %c0_43] : memref<128x384xbf16, #tpu.memory_space<vmem>>, vector<128x128xbf16>
      tpu.vector_store %arg14[%c0_42, %c0_43], %68 {strides = array<i32>} : memref<128x384xbf16, #tpu.memory_space<vmem>>, vector<128x128xbf16>,
      %cst_44 = arith.constant 0.000000e+00 : bf16
      %70 = vector.broadcast %cst_44 : bf16 to vector<1x128xbf16>
      %c0_45 = arith.constant 0 : index
      %c0_46 = arith.constant 0 : index
      %71 = vector.load %arg14[%c0_45, %c0_46] : memref<128x384xbf16, #tpu.memory_space<vmem>>, vector<1x128xbf16>
      tpu.vector_store %arg14[%c0_45, %c0_46], %70 {strides = array<i32>} : memref<128x384xbf16, #tpu.memory_space<vmem>>, vector<1x128xbf16>,
      %c64 = arith.constant 64 : index
      %c0_47 = arith.constant 0 : index
      %72 = vector.load %arg14[%c64, %c0_47] : memref<128x384xbf16, #tpu.memory_space<vmem>>, vector<1x128xbf16>
      tpu.vector_store %arg14[%c64, %c0_47], %70 {strides = array<i32>} : memref<128x384xbf16, #tpu.memory_space<vmem>>, vector<1x128xbf16>,
      %73 = arith.truncf %66 : vector<128x128xf32> to vector<128x128xbf16>
      %c0_48 = arith.constant 0 : index
      %c128 = arith.constant 128 : index
      %74 = vector.load %arg14[%c0_48, %c128] : memref<128x384xbf16, #tpu.memory_space<vmem>>, vector<128x128xbf16>
      tpu.vector_store %arg14[%c0_48, %c128], %73 {strides = array<i32>} : memref<128x384xbf16, #tpu.memory_space<vmem>>, vector<128x128xbf16>,
      %c127_i32 = arith.constant 127 : i32
      %75 = tpu.dynamic_rotate %66 by %c127_i32 dim 0 : vector<128x128xf32>, i32 -> vector<128x128xf32>
      %76 = arith.truncf %75 : vector<128x128xf32> to vector<128x128xbf16>
      %c0_49 = arith.constant 0 : index
      %c256 = arith.constant 256 : index
      %77 = vector.load %arg14[%c0_49, %c256] : memref<128x384xbf16, #tpu.memory_space<vmem>>, vector<128x128xbf16>
      tpu.vector_store %arg14[%c0_49, %c256], %76 {strides = array<i32>} : memref<128x384xbf16, #tpu.memory_space<vmem>>, vector<128x128xbf16>,
      %cst_50 = arith.constant 0.000000e+00 : bf16
      %78 = vector.broadcast %cst_50 : bf16 to vector<1x128xbf16>
      %c63 = arith.constant 63 : index
      %c256_51 = arith.constant 256 : index
      %79 = vector.load %arg14[%c63, %c256_51] : memref<128x384xbf16, #tpu.memory_space<vmem>>, vector<1x128xbf16>
      tpu.vector_store %arg14[%c63, %c256_51], %78 {strides = array<i32>} : memref<128x384xbf16, #tpu.memory_space<vmem>>, vector<1x128xbf16>,
      %c127 = arith.constant 127 : index
      %c256_52 = arith.constant 256 : index
      %80 = vector.load %arg14[%c127, %c256_52] : memref<128x384xbf16, #tpu.memory_space<vmem>>, vector<1x128xbf16>
      tpu.vector_store %arg14[%c127, %c256_52], %78 {strides = array<i32>} : memref<128x384xbf16, #tpu.memory_space<vmem>>, vector<1x128xbf16>,
      %c0_53 = arith.constant 0 : index
      %c0_54 = arith.constant 0 : index
      %81 = vector.load %arg14[%c0_53, %c0_54] : memref<128x384xbf16, #tpu.memory_space<vmem>>, vector<128x384xbf16>
      %c0_55 = arith.constant 0 : index
      %c0_56 = arith.constant 0 : index
      %c0_57 = arith.constant 0 : index
      %82 = vector.load %arg9[%c0_55, %c0_56, %c0_57] : memref<1x384x128xbf16, #tpu.memory_space<vmem>>, vector<1x384x128xbf16>
      %83 = vector.shape_cast %82 : vector<1x384x128xbf16> to vector<384x128xbf16>
      %cst_58 = arith.constant dense<0.000000e+00> : vector<128x128xf32>
      %84 = tpu.matmul %81, %83, %cst_58 {dimension_numbers = #tpu.dot_dimension_numbers<[1], [0], [0], [1], [0, 0, 1, 1], [], []>} : vector<128x384xbf16>, vector<384x128xbf16>, vector<128x128xf32> -> vector<128x128xf32>
      %85 = vector.shape_cast %84 : vector<128x128xf32> to vector<2x64x128xf32>
      %86 = vector.broadcast %7 : vector<1x1x128xf32> to vector<2x64x128xf32>
      %87 = arith.addf %85, %86 : vector<2x64x128xf32>
      %88 = vector.shape_cast %87 : vector<2x64x128xf32> to vector<128x128xf32>
      %cst_59 = arith.constant dense<0.000000e+00> : vector<128xf32>
      %89 = vector.multi_reduction <add>, %88, %cst_59 [0] : vector<128x128xf32> to vector<128xf32>
      %90 = vector.shape_cast %89 : vector<128xf32> to vector<1x128xf32>
      %cst_60 = arith.constant 1.280000e+02 : f32
      %91 = vector.broadcast %cst_60 : f32 to vector<1x128xf32>
      %92 = arith.divf %90, %91 : vector<1x128xf32>
      %93 = arith.mulf %88, %88 : vector<128x128xf32>
      %cst_61 = arith.constant dense<0.000000e+00> : vector<128xf32>
      %94 = vector.multi_reduction <add>, %93, %cst_61 [0] : vector<128x128xf32> to vector<128xf32>
      %95 = vector.shape_cast %94 : vector<128xf32> to vector<1x128xf32>
      %cst_62 = arith.constant 1.280000e+02 : f32
      %96 = vector.broadcast %cst_62 : f32 to vector<1x128xf32>
      %97 = arith.divf %95, %96 : vector<1x128xf32>
      %98 = arith.mulf %92, %92 : vector<1x128xf32>
      %99 = arith.subf %97, %98 : vector<1x128xf32>
      %cst_63 = arith.constant 0.000000e+00 : f32
      %100 = vector.broadcast %cst_63 : f32 to vector<1x128xf32>
      %101 = arith.maximumf %99, %100 : vector<1x128xf32>
      %cst_64 = arith.constant 9.99999974E-6 : f32
      %102 = vector.broadcast %cst_64 : f32 to vector<1x128xf32>
      %103 = arith.addf %101, %102 : vector<1x128xf32>
      %104 = math.rsqrt %103 : vector<1x128xf32>
      %105 = arith.mulf %4, %104 : vector<1x128xf32>
      %106 = arith.mulf %92, %105 : vector<1x128xf32>
      %107 = arith.subf %6, %106 : vector<1x128xf32>
      %108 = vector.broadcast %105 : vector<1x128xf32> to vector<128x128xf32>
      %109 = arith.mulf %88, %108 : vector<128x128xf32>
      %110 = vector.broadcast %107 : vector<1x128xf32> to vector<128x128xf32>
      %111 = arith.addf %109, %110 : vector<128x128xf32>
      %112 = vector.shape_cast %111 : vector<128x128xf32> to vector<2x64x128xf32>
      %113 = vector.broadcast %19 : vector<2x64x1xf32> to vector<2x64x128xf32>
      %114 = arith.mulf %113, %112 : vector<2x64x128xf32>
      %115 = vector.broadcast %27 : vector<2x64x1xf32> to vector<2x64x128xf32>
      %116 = arith.addf %114, %115 : vector<2x64x128xf32>
      %cst_65 = arith.constant 0.000000e+00 : f32
      %117 = vector.broadcast %cst_65 : f32 to vector<2x64x128xf32>
      %118 = arith.maximumf %116, %117 : vector<2x64x128xf32>
      %119 = vector.shape_cast %118 : vector<2x64x128xf32> to vector<128x128xf32>
      %c2_i32 = arith.constant 2 : i32
      %120 = tpu.dynamic_rotate %119 by %c2_i32 dim 0 : vector<128x128xf32>, i32 -> vector<128x128xf32>
      %121 = arith.truncf %120 : vector<128x128xf32> to vector<128x128xbf16>
      %c0_66 = arith.constant 0 : index
      %c0_67 = arith.constant 0 : index
      %122 = vector.load %arg14[%c0_66, %c0_67] : memref<128x384xbf16, #tpu.memory_space<vmem>>, vector<128x128xbf16>
      tpu.vector_store %arg14[%c0_66, %c0_67], %121 {strides = array<i32>} : memref<128x384xbf16, #tpu.memory_space<vmem>>, vector<128x128xbf16>,
      %cst_68 = arith.constant 0.000000e+00 : bf16
      %123 = vector.broadcast %cst_68 : bf16 to vector<2x128xbf16>
      %c0_69 = arith.constant 0 : index
      %c0_70 = arith.constant 0 : index
      %124 = vector.load %arg14[%c0_69, %c0_70] : memref<128x384xbf16, #tpu.memory_space<vmem>>, vector<2x128xbf16>
      tpu.vector_store %arg14[%c0_69, %c0_70], %123 {strides = array<i32>} : memref<128x384xbf16, #tpu.memory_space<vmem>>, vector<2x128xbf16>,
      %c64_71 = arith.constant 64 : index
      %c0_72 = arith.constant 0 : index
      %125 = vector.load %arg14[%c64_71, %c0_72] : memref<128x384xbf16, #tpu.memory_space<vmem>>, vector<2x128xbf16>
      tpu.vector_store %arg14[%c64_71, %c0_72], %123 {strides = array<i32>} : memref<128x384xbf16, #tpu.memory_space<vmem>>, vector<2x128xbf16>,
      %126 = arith.truncf %119 : vector<128x128xf32> to vector<128x128xbf16>
      %c0_73 = arith.constant 0 : index
      %c128_74 = arith.constant 128 : index
      %127 = vector.load %arg14[%c0_73, %c128_74] : memref<128x384xbf16, #tpu.memory_space<vmem>>, vector<128x128xbf16>
      tpu.vector_store %arg14[%c0_73, %c128_74], %126 {strides = array<i32>} : memref<128x384xbf16, #tpu.memory_space<vmem>>, vector<128x128xbf16>,
      %c126_i32 = arith.constant 126 : i32
      %128 = tpu.dynamic_rotate %119 by %c126_i32 dim 0 : vector<128x128xf32>, i32 -> vector<128x128xf32>
      %129 = arith.truncf %128 : vector<128x128xf32> to vector<128x128xbf16>
      %c0_75 = arith.constant 0 : index
      %c256_76 = arith.constant 256 : index
      %130 = vector.load %arg14[%c0_75, %c256_76] : memref<128x384xbf16, #tpu.memory_space<vmem>>, vector<128x128xbf16>
      tpu.vector_store %arg14[%c0_75, %c256_76], %129 {strides = array<i32>} : memref<128x384xbf16, #tpu.memory_space<vmem>>, vector<128x128xbf16>,
      %cst_77 = arith.constant 0.000000e+00 : bf16
      %131 = vector.broadcast %cst_77 : bf16 to vector<2x128xbf16>
      %c62 = arith.constant 62 : index
      %c256_78 = arith.constant 256 : index
      %132 = vector.load %arg14[%c62, %c256_78] : memref<128x384xbf16, #tpu.memory_space<vmem>>, vector<2x128xbf16>
      tpu.vector_store %arg14[%c62, %c256_78], %131 {strides = array<i32>} : memref<128x384xbf16, #tpu.memory_space<vmem>>, vector<2x128xbf16>,
      %c126 = arith.constant 126 : index
      %c256_79 = arith.constant 256 : index
      %133 = vector.load %arg14[%c126, %c256_79] : memref<128x384xbf16, #tpu.memory_space<vmem>>, vector<2x128xbf16>
      tpu.vector_store %arg14[%c126, %c256_79], %131 {strides = array<i32>} : memref<128x384xbf16, #tpu.memory_space<vmem>>, vector<2x128xbf16>,
      %c0_80 = arith.constant 0 : index
      %c0_81 = arith.constant 0 : index
      %134 = vector.load %arg14[%c0_80, %c0_81] : memref<128x384xbf16, #tpu.memory_space<vmem>>, vector<128x384xbf16>
      %c0_82 = arith.constant 0 : index
      %c0_83 = arith.constant 0 : index
      %c0_84 = arith.constant 0 : index
      %135 = vector.load %arg11[%c0_82, %c0_83, %c0_84] : memref<1x384x128xbf16, #tpu.memory_space<vmem>>, vector<1x384x128xbf16>
      %136 = vector.shape_cast %135 : vector<1x384x128xbf16> to vector<384x128xbf16>
      %cst_85 = arith.constant dense<0.000000e+00> : vector<128x128xf32>
      %137 = tpu.matmul %134, %136, %cst_85 {dimension_numbers = #tpu.dot_dimension_numbers<[1], [0], [0], [1], [0, 0, 1, 1], [], []>} : vector<128x384xbf16>, vector<384x128xbf16>, vector<128x128xf32> -> vector<128x128xf32>
      %138 = vector.shape_cast %137 : vector<128x128xf32> to vector<2x64x128xf32>
      %139 = vector.broadcast %8 : vector<1x1x128xf32> to vector<2x64x128xf32>
      %140 = arith.addf %138, %139 : vector<2x64x128xf32>
      %141 = arith.addf %140, %34 : vector<2x64x128xf32>
      %c0_86 = arith.constant 0 : index
      %c0_87 = arith.constant 0 : index
      %c0_88 = arith.constant 0 : index
      %142 = vector.load %arg13[%c0_86, %c0_87, %c0_88] : memref<2x64x128xf32, #tpu.memory_space<vmem>>, vector<2x64x128xf32>
      tpu.vector_store %arg13[%c0_86, %c0_87, %c0_88], %141 {strides = array<i32>} : memref<2x64x128xf32, #tpu.memory_space<vmem>>, vector<2x64x128xf32>,
    } else {
    }
    %c1_i32 = arith.constant 1 : i32
    %31 = arith.cmpi eq, %arg0, %c1_i32 : i32
    %32 = arith.extui %31 : i1 to i32
    %c0_i32_30 = arith.constant 0 : i32
    %33 = arith.cmpi ne, %32, %c0_i32_30 : i32
    scf.if %33 {
      %c0_31 = arith.constant 0 : index
      %c0_32 = arith.constant 0 : index
      %c0_33 = arith.constant 0 : index
      %34 = vector.load %arg13[%c0_31, %c0_32, %c0_33] : memref<2x64x128xf32, #tpu.memory_space<vmem>>, vector<2x64x128xf32>
      %35 = vector.shape_cast %34 : vector<2x64x128xf32> to vector<128x128xf32>
      %cst_34 = arith.constant dense<0.000000e+00> : vector<128xf32>
      %36 = vector.multi_reduction <add>, %35, %cst_34 [0] : vector<128x128xf32> to vector<128xf32>
      %37 = vector.shape_cast %36 : vector<128xf32> to vector<1x128xf32>
      %cst_35 = arith.constant 1.280000e+02 : f32
      %38 = vector.broadcast %cst_35 : f32 to vector<1x128xf32>
      %39 = arith.divf %37, %38 : vector<1x128xf32>
      %40 = arith.mulf %35, %35 : vector<128x128xf32>
      %cst_36 = arith.constant dense<0.000000e+00> : vector<128xf32>
      %41 = vector.multi_reduction <add>, %40, %cst_36 [0] : vector<128x128xf32> to vector<128xf32>
      %42 = vector.shape_cast %41 : vector<128xf32> to vector<1x128xf32>
      %cst_37 = arith.constant 1.280000e+02 : f32
      %43 = vector.broadcast %cst_37 : f32 to vector<1x128xf32>
      %44 = arith.divf %42, %43 : vector<1x128xf32>
      %45 = arith.mulf %39, %39 : vector<1x128xf32>
      %46 = arith.subf %44, %45 : vector<1x128xf32>
      %cst_38 = arith.constant 0.000000e+00 : f32
      %47 = vector.broadcast %cst_38 : f32 to vector<1x128xf32>
      %48 = arith.maximumf %46, %47 : vector<1x128xf32>
      %cst_39 = arith.constant 9.99999974E-6 : f32
      %49 = vector.broadcast %cst_39 : f32 to vector<1x128xf32>
      %50 = arith.addf %48, %49 : vector<1x128xf32>
      %51 = math.rsqrt %50 : vector<1x128xf32>
      %52 = arith.mulf %4, %51 : vector<1x128xf32>
      %53 = arith.mulf %39, %52 : vector<1x128xf32>
      %54 = arith.subf %6, %53 : vector<1x128xf32>
      %55 = vector.broadcast %52 : vector<1x128xf32> to vector<128x128xf32>
      %56 = arith.mulf %35, %55 : vector<128x128xf32>
      %57 = vector.broadcast %54 : vector<1x128xf32> to vector<128x128xf32>
      %58 = arith.addf %56, %57 : vector<128x128xf32>
      %59 = vector.shape_cast %58 : vector<128x128xf32> to vector<2x64x128xf32>
      %60 = vector.broadcast %19 : vector<2x64x1xf32> to vector<2x64x128xf32>
      %61 = arith.mulf %60, %59 : vector<2x64x128xf32>
      %62 = vector.broadcast %27 : vector<2x64x1xf32> to vector<2x64x128xf32>
      %63 = arith.addf %61, %62 : vector<2x64x128xf32>
      %cst_40 = arith.constant 0.000000e+00 : f32
      %64 = vector.broadcast %cst_40 : f32 to vector<2x64x128xf32>
      %65 = arith.maximumf %63, %64 : vector<2x64x128xf32>
      %66 = vector.shape_cast %65 : vector<2x64x128xf32> to vector<128x128xf32>
      %c2_i32 = arith.constant 2 : i32
      %67 = tpu.dynamic_rotate %66 by %c2_i32 dim 0 : vector<128x128xf32>, i32 -> vector<128x128xf32>
      %68 = arith.truncf %67 : vector<128x128xf32> to vector<128x128xbf16>
      %c0_41 = arith.constant 0 : index
      %c0_42 = arith.constant 0 : index
      %69 = vector.load %arg14[%c0_41, %c0_42] : memref<128x384xbf16, #tpu.memory_space<vmem>>, vector<128x128xbf16>
      tpu.vector_store %arg14[%c0_41, %c0_42], %68 {strides = array<i32>} : memref<128x384xbf16, #tpu.memory_space<vmem>>, vector<128x128xbf16>,
      %cst_43 = arith.constant 0.000000e+00 : bf16
      %70 = vector.broadcast %cst_43 : bf16 to vector<2x128xbf16>
      %c0_44 = arith.constant 0 : index
      %c0_45 = arith.constant 0 : index
      %71 = vector.load %arg14[%c0_44, %c0_45] : memref<128x384xbf16, #tpu.memory_space<vmem>>, vector<2x128xbf16>
      tpu.vector_store %arg14[%c0_44, %c0_45], %70 {strides = array<i32>} : memref<128x384xbf16, #tpu.memory_space<vmem>>, vector<2x128xbf16>,
      %c64 = arith.constant 64 : index
      %c0_46 = arith.constant 0 : index
      %72 = vector.load %arg14[%c64, %c0_46] : memref<128x384xbf16, #tpu.memory_space<vmem>>, vector<2x128xbf16>
      tpu.vector_store %arg14[%c64, %c0_46], %70 {strides = array<i32>} : memref<128x384xbf16, #tpu.memory_space<vmem>>, vector<2x128xbf16>,
      %73 = arith.truncf %66 : vector<128x128xf32> to vector<128x128xbf16>
      %c0_47 = arith.constant 0 : index
      %c128 = arith.constant 128 : index
      %74 = vector.load %arg14[%c0_47, %c128] : memref<128x384xbf16, #tpu.memory_space<vmem>>, vector<128x128xbf16>
      tpu.vector_store %arg14[%c0_47, %c128], %73 {strides = array<i32>} : memref<128x384xbf16, #tpu.memory_space<vmem>>, vector<128x128xbf16>,
      %c126_i32 = arith.constant 126 : i32
      %75 = tpu.dynamic_rotate %66 by %c126_i32 dim 0 : vector<128x128xf32>, i32 -> vector<128x128xf32>
      %76 = arith.truncf %75 : vector<128x128xf32> to vector<128x128xbf16>
      %c0_48 = arith.constant 0 : index
      %c256 = arith.constant 256 : index
      %77 = vector.load %arg14[%c0_48, %c256] : memref<128x384xbf16, #tpu.memory_space<vmem>>, vector<128x128xbf16>
      tpu.vector_store %arg14[%c0_48, %c256], %76 {strides = array<i32>} : memref<128x384xbf16, #tpu.memory_space<vmem>>, vector<128x128xbf16>,
      %cst_49 = arith.constant 0.000000e+00 : bf16
      %78 = vector.broadcast %cst_49 : bf16 to vector<2x128xbf16>
      %c62 = arith.constant 62 : index
      %c256_50 = arith.constant 256 : index
      %79 = vector.load %arg14[%c62, %c256_50] : memref<128x384xbf16, #tpu.memory_space<vmem>>, vector<2x128xbf16>
      tpu.vector_store %arg14[%c62, %c256_50], %78 {strides = array<i32>} : memref<128x384xbf16, #tpu.memory_space<vmem>>, vector<2x128xbf16>,
      %c126 = arith.constant 126 : index
      %c256_51 = arith.constant 256 : index
      %80 = vector.load %arg14[%c126, %c256_51] : memref<128x384xbf16, #tpu.memory_space<vmem>>, vector<2x128xbf16>
      tpu.vector_store %arg14[%c126, %c256_51], %78 {strides = array<i32>} : memref<128x384xbf16, #tpu.memory_space<vmem>>, vector<2x128xbf16>,
      %c0_52 = arith.constant 0 : index
      %c0_53 = arith.constant 0 : index
      %81 = vector.load %arg14[%c0_52, %c0_53] : memref<128x384xbf16, #tpu.memory_space<vmem>>, vector<128x384xbf16>
      %c0_54 = arith.constant 0 : index
      %c0_55 = arith.constant 0 : index
      %c0_56 = arith.constant 0 : index
      %82 = vector.load %arg9[%c0_54, %c0_55, %c0_56] : memref<1x384x128xbf16, #tpu.memory_space<vmem>>, vector<1x384x128xbf16>
      %83 = vector.shape_cast %82 : vector<1x384x128xbf16> to vector<384x128xbf16>
      %cst_57 = arith.constant dense<0.000000e+00> : vector<128x128xf32>
      %84 = tpu.matmul %81, %83, %cst_57 {dimension_numbers = #tpu.dot_dimension_numbers<[1], [0], [0], [1], [0, 0, 1, 1], [], []>} : vector<128x384xbf16>, vector<384x128xbf16>, vector<128x128xf32> -> vector<128x128xf32>
      %85 = vector.shape_cast %84 : vector<128x128xf32> to vector<2x64x128xf32>
      %86 = vector.broadcast %7 : vector<1x1x128xf32> to vector<2x64x128xf32>
      %87 = arith.addf %85, %86 : vector<2x64x128xf32>
      %88 = vector.shape_cast %87 : vector<2x64x128xf32> to vector<128x128xf32>
      %cst_58 = arith.constant dense<0.000000e+00> : vector<128xf32>
      %89 = vector.multi_reduction <add>, %88, %cst_58 [0] : vector<128x128xf32> to vector<128xf32>
      %90 = vector.shape_cast %89 : vector<128xf32> to vector<1x128xf32>
      %cst_59 = arith.constant 1.280000e+02 : f32
      %91 = vector.broadcast %cst_59 : f32 to vector<1x128xf32>
      %92 = arith.divf %90, %91 : vector<1x128xf32>
      %93 = arith.mulf %88, %88 : vector<128x128xf32>
      %cst_60 = arith.constant dense<0.000000e+00> : vector<128xf32>
      %94 = vector.multi_reduction <add>, %93, %cst_60 [0] : vector<128x128xf32> to vector<128xf32>
      %95 = vector.shape_cast %94 : vector<128xf32> to vector<1x128xf32>
      %cst_61 = arith.constant 1.280000e+02 : f32
      %96 = vector.broadcast %cst_61 : f32 to vector<1x128xf32>
      %97 = arith.divf %95, %96 : vector<1x128xf32>
      %98 = arith.mulf %92, %92 : vector<1x128xf32>
      %99 = arith.subf %97, %98 : vector<1x128xf32>
      %cst_62 = arith.constant 0.000000e+00 : f32
      %100 = vector.broadcast %cst_62 : f32 to vector<1x128xf32>
      %101 = arith.maximumf %99, %100 : vector<1x128xf32>
      %cst_63 = arith.constant 9.99999974E-6 : f32
      %102 = vector.broadcast %cst_63 : f32 to vector<1x128xf32>
      %103 = arith.addf %101, %102 : vector<1x128xf32>
      %104 = math.rsqrt %103 : vector<1x128xf32>
      %105 = arith.mulf %4, %104 : vector<1x128xf32>
      %106 = arith.mulf %92, %105 : vector<1x128xf32>
      %107 = arith.subf %6, %106 : vector<1x128xf32>
      %108 = vector.broadcast %105 : vector<1x128xf32> to vector<128x128xf32>
      %109 = arith.mulf %88, %108 : vector<128x128xf32>
      %110 = vector.broadcast %107 : vector<1x128xf32> to vector<128x128xf32>
      %111 = arith.addf %109, %110 : vector<128x128xf32>
      %112 = vector.shape_cast %111 : vector<128x128xf32> to vector<2x64x128xf32>
      %113 = vector.broadcast %19 : vector<2x64x1xf32> to vector<2x64x128xf32>
      %114 = arith.mulf %113, %112 : vector<2x64x128xf32>
      %115 = vector.broadcast %27 : vector<2x64x1xf32> to vector<2x64x128xf32>
      %116 = arith.addf %114, %115 : vector<2x64x128xf32>
      %cst_64 = arith.constant 0.000000e+00 : f32
      %117 = vector.broadcast %cst_64 : f32 to vector<2x64x128xf32>
      %118 = arith.maximumf %116, %117 : vector<2x64x128xf32>
      %119 = vector.shape_cast %118 : vector<2x64x128xf32> to vector<128x128xf32>
      %c4_i32 = arith.constant 4 : i32
      %120 = tpu.dynamic_rotate %119 by %c4_i32 dim 0 : vector<128x128xf32>, i32 -> vector<128x128xf32>
      %121 = arith.truncf %120 : vector<128x128xf32> to vector<128x128xbf16>
      %c0_65 = arith.constant 0 : index
      %c0_66 = arith.constant 0 : index
      %122 = vector.load %arg14[%c0_65, %c0_66] : memref<128x384xbf16, #tpu.memory_space<vmem>>, vector<128x128xbf16>
      tpu.vector_store %arg14[%c0_65, %c0_66], %121 {strides = array<i32>} : memref<128x384xbf16, #tpu.memory_space<vmem>>, vector<128x128xbf16>,
      %cst_67 = arith.constant 0.000000e+00 : bf16
      %123 = vector.broadcast %cst_67 : bf16 to vector<4x128xbf16>
      %c0_68 = arith.constant 0 : index
      %c0_69 = arith.constant 0 : index
      %124 = vector.load %arg14[%c0_68, %c0_69] : memref<128x384xbf16, #tpu.memory_space<vmem>>, vector<4x128xbf16>
      tpu.vector_store %arg14[%c0_68, %c0_69], %123 {strides = array<i32>} : memref<128x384xbf16, #tpu.memory_space<vmem>>, vector<4x128xbf16>,
      %c64_70 = arith.constant 64 : index
      %c0_71 = arith.constant 0 : index
      %125 = vector.load %arg14[%c64_70, %c0_71] : memref<128x384xbf16, #tpu.memory_space<vmem>>, vector<4x128xbf16>
      tpu.vector_store %arg14[%c64_70, %c0_71], %123 {strides = array<i32>} : memref<128x384xbf16, #tpu.memory_space<vmem>>, vector<4x128xbf16>,
      %126 = arith.truncf %119 : vector<128x128xf32> to vector<128x128xbf16>
      %c0_72 = arith.constant 0 : index
      %c128_73 = arith.constant 128 : index
      %127 = vector.load %arg14[%c0_72, %c128_73] : memref<128x384xbf16, #tpu.memory_space<vmem>>, vector<128x128xbf16>
      tpu.vector_store %arg14[%c0_72, %c128_73], %126 {strides = array<i32>} : memref<128x384xbf16, #tpu.memory_space<vmem>>, vector<128x128xbf16>,
      %c124_i32 = arith.constant 124 : i32
      %128 = tpu.dynamic_rotate %119 by %c124_i32 dim 0 : vector<128x128xf32>, i32 -> vector<128x128xf32>
      %129 = arith.truncf %128 : vector<128x128xf32> to vector<128x128xbf16>
      %c0_74 = arith.constant 0 : index
      %c256_75 = arith.constant 256 : index
      %130 = vector.load %arg14[%c0_74, %c256_75] : memref<128x384xbf16, #tpu.memory_space<vmem>>, vector<128x128xbf16>
      tpu.vector_store %arg14[%c0_74, %c256_75], %129 {strides = array<i32>} : memref<128x384xbf16, #tpu.memory_space<vmem>>, vector<128x128xbf16>,
      %cst_76 = arith.constant 0.000000e+00 : bf16
      %131 = vector.broadcast %cst_76 : bf16 to vector<4x128xbf16>
      %c60 = arith.constant 60 : index
      %c256_77 = arith.constant 256 : index
      %132 = vector.load %arg14[%c60, %c256_77] : memref<128x384xbf16, #tpu.memory_space<vmem>>, vector<4x128xbf16>
      tpu.vector_store %arg14[%c60, %c256_77], %131 {strides = array<i32>} : memref<128x384xbf16, #tpu.memory_space<vmem>>, vector<4x128xbf16>,
      %c124 = arith.constant 124 : index
      %c256_78 = arith.constant 256 : index
      %133 = vector.load %arg14[%c124, %c256_78] : memref<128x384xbf16, #tpu.memory_space<vmem>>, vector<4x128xbf16>
      tpu.vector_store %arg14[%c124, %c256_78], %131 {strides = array<i32>} : memref<128x384xbf16, #tpu.memory_space<vmem>>, vector<4x128xbf16>,
      %c0_79 = arith.constant 0 : index
      %c0_80 = arith.constant 0 : index
      %134 = vector.load %arg14[%c0_79, %c0_80] : memref<128x384xbf16, #tpu.memory_space<vmem>>, vector<128x384xbf16>
      %c0_81 = arith.constant 0 : index
      %c0_82 = arith.constant 0 : index
      %c0_83 = arith.constant 0 : index
      %135 = vector.load %arg11[%c0_81, %c0_82, %c0_83] : memref<1x384x128xbf16, #tpu.memory_space<vmem>>, vector<1x384x128xbf16>
      %136 = vector.shape_cast %135 : vector<1x384x128xbf16> to vector<384x128xbf16>
      %cst_84 = arith.constant dense<0.000000e+00> : vector<128x128xf32>
      %137 = tpu.matmul %134, %136, %cst_84 {dimension_numbers = #tpu.dot_dimension_numbers<[1], [0], [0], [1], [0, 0, 1, 1], [], []>} : vector<128x384xbf16>, vector<384x128xbf16>, vector<128x128xf32> -> vector<128x128xf32>
      %138 = vector.shape_cast %137 : vector<128x128xf32> to vector<2x64x128xf32>
      %139 = vector.broadcast %8 : vector<1x1x128xf32> to vector<2x64x128xf32>
      %140 = arith.addf %138, %139 : vector<2x64x128xf32>
      %141 = arith.addf %140, %34 : vector<2x64x128xf32>
      %c0_85 = arith.constant 0 : index
      %c0_86 = arith.constant 0 : index
      %c0_87 = arith.constant 0 : index
      %142 = vector.load %arg13[%c0_85, %c0_86, %c0_87] : memref<2x64x128xf32, #tpu.memory_space<vmem>>, vector<2x64x128xf32>
      tpu.vector_store %arg13[%c0_85, %c0_86, %c0_87], %141 {strides = array<i32>} : memref<2x64x128xf32, #tpu.memory_space<vmem>>, vector<2x64x128xf32>,
    } else {
    }
    return
  }
  func.func @transform_1(%arg0: i32) -> (i32, i32) {
    %c0_i32 = arith.constant 0 : i32
    %c0_i32_0 = arith.constant 0 : i32
    %c0_i32_1 = arith.constant 0 : i32
    return %c0_i32, %c0_i32_0 : i32, i32
  }
  func.func @transform_2(%arg0: i32) -> (i32, i32, i32) {
    %c0_i32 = arith.constant 0 : i32
    %c0_i32_0 = arith.constant 0 : i32
    %c0_i32_1 = arith.constant 0 : i32
    return %arg0, %c0_i32, %c0_i32_0 : i32, i32, i32
  }
  func.func @transform_3(%arg0: i32) -> (i32, i32, i32) {
    %c0_i32 = arith.constant 0 : i32
    %c0_i32_0 = arith.constant 0 : i32
    %c0_i32_1 = arith.constant 0 : i32
    return %arg0, %c0_i32, %c0_i32_0 : i32, i32, i32
  }
  func.func @transform_4(%arg0: i32) -> (i32, i32, i32) {
    %c0_i32 = arith.constant 0 : i32
    %c0_i32_0 = arith.constant 0 : i32
    %c0_i32_1 = arith.constant 0 : i32
    return %arg0, %c0_i32, %c0_i32_0 : i32, i32, i32
  }
  func.func @transform_5(%arg0: i32) -> (i32, i32, i32) {
    %c0_i32 = arith.constant 0 : i32
    %c0_i32_0 = arith.constant 0 : i32
    %c0_i32_1 = arith.constant 0 : i32
    return %arg0, %c0_i32, %c0_i32_0 : i32, i32, i32
  }
  func.func @transform_6(%arg0: i32) -> (i32, i32, i32) {
    %c0_i32 = arith.constant 0 : i32
    %c0_i32_0 = arith.constant 0 : i32
    %c0_i32_1 = arith.constant 0 : i32
    return %arg0, %c0_i32, %c0_i32_0 : i32, i32, i32
  }
  func.func @transform_7(%arg0: i32) -> (i32, i32, i32) {
    %c0_i32 = arith.constant 0 : i32
    %c0_i32_0 = arith.constant 0 : i32
    %c0_i32_1 = arith.constant 0 : i32
    return %arg0, %c0_i32, %c0_i32_0 : i32, i32, i32
  }
  func.func @transform_8(%arg0: i32) -> (i32, i32, i32) {
    %c0_i32 = arith.constant 0 : i32
    %c0_i32_0 = arith.constant 0 : i32
    %c0_i32_1 = arith.constant 0 : i32
    return %arg0, %c0_i32, %c0_i32_0 : i32, i32, i32
  }
  func.func @transform_9(%arg0: i32) -> (i32, i32, i32) {
    %c0_i32 = arith.constant 0 : i32
    %c0_i32_0 = arith.constant 0 : i32
    %c0_i32_1 = arith.constant 0 : i32
    return %arg0, %c0_i32, %c0_i32_0 : i32, i32, i32
  }
  func.func @transform_10(%arg0: i32) -> (i32, i32, i32) {
    %c0_i32 = arith.constant 0 : i32
    %c0_i32_0 = arith.constant 0 : i32
    %c0_i32_1 = arith.constant 0 : i32
    return %arg0, %c0_i32, %c0_i32_0 : i32, i32, i32
  }
  func.func @transform_11(%arg0: i32) -> (i32, i32, i32) {
    %c0_i32 = arith.constant 0 : i32
    %c0_i32_0 = arith.constant 0 : i32
    %c0_i32_1 = arith.constant 0 : i32
    return %arg0, %c0_i32, %c0_i32_0 : i32, i32, i32
  }
  func.func @transform_12(%arg0: i32) -> (i32, i32, i32) {
    %c0_i32 = arith.constant 0 : i32
    %c0_i32_0 = arith.constant 0 : i32
    %c0_i32_1 = arith.constant 0 : i32
    %c0_i32_2 = arith.constant 0 : i32
    return %c0_i32, %c0_i32_0, %c0_i32_1 : i32, i32, i32
  }
}

</mosaic_0001>

<llo_original>
// kernel: unaligned_token_representation.1
$region0: #{unaligned_token_representation.1}
  #allocation0 [shape = 'u32[]', space=smem, size = 0x4, offset = 0x4, fixed_abs, tag = 'smem constant byte address 0x4 - core index']
  #allocation1 [shape = 'u32[144,128]{1,0:T(1,128)}', space=vmem, size = 0x12000, scoped, tag = 'internal scratch']
  #allocation2 [shape = 'bf16[128,384]{1,0:T(8,128)(2,1)}', space=vmem, size = 0x18000, scoped, tag = 'scratch operand']
  #allocation6 [shape = 's32[]', space=sflag, size = 0x4, offset = 0, fixed_abs, tag = 'sflag constant byte address 0x0 - dummy sync flag']
  %s0 = inlined_call_operand.vmem [shape: f32[2,64,128], index: 0, kind: input, shape index: {}]
  %s1 = inlined_call_operand.vmem [shape: f32[2,128], index: 1, kind: input, shape index: {}]
  %s2 = inlined_call_operand.vmem [shape: f32[2,1,128], index: 2, kind: input, shape index: {}]
  %s3 = inlined_call_operand.vmem [shape: f32[2,1,128], index: 3, kind: input, shape index: {}]
  %s4 = inlined_call_operand.vmem [shape: f32[2,128,64], index: 4, kind: input, shape index: {}]
  %s5 = inlined_call_operand.vmem [shape: f32[2,1,64], index: 5, kind: input, shape index: {}]
  %s6 = inlined_call_operand.vmem [shape: f32[2,128,64], index: 6, kind: input, shape index: {}]
  %s7 = inlined_call_operand.vmem [shape: f32[2,1,64], index: 7, kind: input, shape index: {}]
  %s8 = inlined_call_operand.vmem [shape: bf16[2,384,128], index: 8, kind: input, shape index: {}]
  %s9 = inlined_call_operand.vmem [shape: f32[2,1,128], index: 9, kind: input, shape index: {}]
  %s10 = inlined_call_operand.vmem [shape: bf16[2,384,128], index: 10, kind: input, shape index: {}]
  %s11 = inlined_call_operand.vmem [shape: f32[2,1,128], index: 11, kind: input, shape index: {}]
  %s12 = inlined_call_operand.hbm [shape: f32[2,64,128], index: 12, kind: output, shape index: {}]
  %s13 = sld [smem:[#allocation0]]
  $region124: #{unaligned_token_representation.1} parent=0
    _
  %s15 = ssub.s32 1, %s13
  %s16 = scalar_select 0, %s15, %s13
  $region1: #{unaligned_token_representation.1} parent=0
    #allocation3 [shape = 'u8[65536]{0}', space=vmem, size = 0x10000, scoped, tag = 'output window, operand 0, single buffered']
    #allocation4 [shape = 's32[2]{0}', space=sflag, size = 0x8, scoped, tag = 'scoped memory for unaligned_token_representation.1']
    %17 = vsyncpa [#allocation4], 0
    loop: start=0, step=1, limit=4
    $region2: #{unaligned_token_representation.1} parent=1 // loop_pre_header
      _
    $region3: #{unaligned_token_representation.1} parent=1 // loop_header
      %s19 = sphi 0, %s23
      %p20 = scmp.ge.s32.totalorder %s19, 4
      %s27 = sphi 0, %s27
      %s29 = sphi 0, %s27
      %s30 = sphi 0, %s29
      %s44 = sphi 0, %s30
      %s50 = sphi 0, %s52
      %s53 = sphi 0, %s50
      %s54 = sphi 0, %s53
      %s70 = sphi 0, %s54
      %s76 = sphi 0, %s78
      %s79 = sphi 0, %s76
      %s80 = sphi 0, %s79
      %s96 = sphi 0, %s80
      %s102 = sphi 0, %s104
      %s105 = sphi 0, %s102
      %s106 = sphi 0, %s105
      %s122 = sphi 0, %s106
      %s128 = sphi 0, %s130
      %s131 = sphi 0, %s128
      %s132 = sphi 0, %s131
      %s148 = sphi 0, %s132
      %s154 = sphi 0, %s156
      %s157 = sphi 0, %s154
      %s158 = sphi 0, %s157
      %s174 = sphi 0, %s158
      %s180 = sphi 0, %s182
      %s183 = sphi 0, %s180
      %s184 = sphi 0, %s183
      %s200 = sphi 0, %s184
      %s206 = sphi 0, %s208
      %s209 = sphi 0, %s206
      %s210 = sphi 0, %s209
      %s226 = sphi 0, %s210
      %s232 = sphi 0, %s234
      %s235 = sphi 0, %s232
      %s236 = sphi 0, %s235
      %s252 = sphi 0, %s236
      %s258 = sphi 0, %s260
      %s261 = sphi 0, %s258
      %s262 = sphi 0, %s261
      %s278 = sphi 0, %s262
      %s284 = sphi 0, %s286
      %s287 = sphi 0, %s284
      %s288 = sphi 0, %s287
      %s304 = sphi 0, %s288
      %s308 = sphi 0, %s308
      %s310 = sphi 0, %s308
      %s311 = sphi 0, %s310
      %s325 = sphi 0, %s311
    $region4: #{unaligned_token_representation.1} parent=1 // loop_header_branch
      %22 = sbr.rel (%p20) target = $region8
    $region5: #{unaligned_token_representation.1} parent=1 // loop_body
      %s24 = ssub.s32 %s19, 1
      %s25 = ssub.s32 %s19, 2
      %s26 = sadd.s32 %s19, 1
      %s28 = sadd.s32 %s27, 1
      %p31 = scmp.eq.s32.totalorder %s19, 1
      %p32 = scmp.ne.s32.totalorder %s27, %s29
      %p33 = scmp.eq.s32.totalorder %s19, 0
      %p34 = por %p32, %p33
      %p35 = scmp.ne.s32.totalorder %s27, %s29
      %p36 = scmp.eq.s32.totalorder %s24, 1
      %p37 = por %p35, %p36
      %p38 = scmp.ne.s32.totalorder %s29, %s30
      %p39 = scmp.eq.s32.totalorder %s24, 0
      %p40 = por %p38, %p39
      %p41 = scmp.ne.s32.totalorder %s29, %s30
      %p42 = scmp.eq.s32.totalorder %s25, 1
      %p43 = por %p41, %p42
      %p45 = scmp.ne.s32.totalorder %s30, %s44
      %p46 = scmp.eq.s32.totalorder %s25, 0
      %p47 = por %p45, %p46
      %s48 = ssub.s32 %s19, %s26
      %p49 = scmp.eq.s32.totalorder %s48, 0
      %s51 = sadd.s32 %s50, 1
      %s52 = scalar_select %p49, %s50, %s51
      %p55 = pneg %p49
      %p56 = scmp.eq.s32.totalorder %s19, 1
      %p57 = por %p55, %p56
      %p58 = scmp.ne.s32.totalorder %s50, %s53
      %p59 = scmp.eq.s32.totalorder %s19, 0
      %p60 = por %p58, %p59
      %p61 = scmp.ne.s32.totalorder %s50, %s53
      %p62 = scmp.eq.s32.totalorder %s24, 1
      %p63 = por %p61, %p62
      %p64 = scmp.ne.s32.totalorder %s53, %s54
      %p65 = scmp.eq.s32.totalorder %s24, 0
      %p66 = por %p64, %p65
      %p67 = scmp.ne.s32.totalorder %s53, %s54
      %p68 = scmp.eq.s32.totalorder %s25, 1
      %p69 = por %p67, %p68
      %p71 = scmp.ne.s32.totalorder %s54, %s70
      %p72 = scmp.eq.s32.totalorder %s25, 0
      %p73 = por %p71, %p72
      %s74 = ssub.s32 %s19, %s26
      %p75 = scmp.eq.s32.totalorder %s74, 0
      %s77 = sadd.s32 %s76, 1
      %s78 = scalar_select %p75, %s76, %s77
      %p81 = pneg %p75
      %p82 = scmp.eq.s32.totalorder %s19, 1
      %p83 = por %p81, %p82
      %p84 = scmp.ne.s32.totalorder %s76, %s79
      %p85 = scmp.eq.s32.totalorder %s19, 0
      %p86 = por %p84, %p85
      %p87 = scmp.ne.s32.totalorder %s76, %s79
      %p88 = scmp.eq.s32.totalorder %s24, 1
      %p89 = por %p87, %p88
      %p90 = scmp.ne.s32.totalorder %s79, %s80
      %p91 = scmp.eq.s32.totalorder %s24, 0
      %p92 = por %p90, %p91
      %p93 = scmp.ne.s32.totalorder %s79, %s80
      %p94 = scmp.eq.s32.totalorder %s25, 1
      %p95 = por %p93, %p94
      %p97 = scmp.ne.s32.totalorder %s80, %s96
      %p98 = scmp.eq.s32.totalorder %s25, 0
      %p99 = por %p97, %p98
      %s100 = ssub.s32 %s19, %s26
      %p101 = scmp.eq.s32.totalorder %s100, 0
      %s103 = sadd.s32 %s102, 1
      %s104 = scalar_select %p101, %s102, %s103
      %p107 = pneg %p101
      %p108 = scmp.eq.s32.totalorder %s19, 1
      %p109 = por %p107, %p108
      %p110 = scmp.ne.s32.totalorder %s102, %s105
      %p111 = scmp.eq.s32.totalorder %s19, 0
      %p112 = por %p110, %p111
      %p113 = scmp.ne.s32.totalorder %s102, %s105
      %p114 = scmp.eq.s32.totalorder %s24, 1
      %p115 = por %p113, %p114
      %p116 = scmp.ne.s32.totalorder %s105, %s106
      %p117 = scmp.eq.s32.totalorder %s24, 0
      %p118 = por %p116, %p117
      %p119 = scmp.ne.s32.totalorder %s105, %s106
      %p120 = scmp.eq.s32.totalorder %s25, 1
      %p121 = por %p119, %p120
      %p123 = scmp.ne.s32.totalorder %s106, %s122
      %p124 = scmp.eq.s32.totalorder %s25, 0
      %p125 = por %p123, %p124
      %s126 = ssub.s32 %s19, %s26
      %p127 = scmp.eq.s32.totalorder %s126, 0
      %s129 = sadd.s32 %s128, 1
      %s130 = scalar_select %p127, %s128, %s129
      %p133 = pneg %p127
      %p134 = scmp.eq.s32.totalorder %s19, 1
      %p135 = por %p133, %p134
      %p136 = scmp.ne.s32.totalorder %s128, %s131
      %p137 = scmp.eq.s32.totalorder %s19, 0
      %p138 = por %p136, %p137
      %p139 = scmp.ne.s32.totalorder %s128, %s131
      %p140 = scmp.eq.s32.totalorder %s24, 1
      %p141 = por %p139, %p140
      %p142 = scmp.ne.s32.totalorder %s131, %s132
      %p143 = scmp.eq.s32.totalorder %s24, 0
      %p144 = por %p142, %p143
      %p145 = scmp.ne.s32.totalorder %s131, %s132
      %p146 = scmp.eq.s32.totalorder %s25, 1
      %p147 = por %p145, %p146
      %p149 = scmp.ne.s32.totalorder %s132, %s148
      %p150 = scmp.eq.s32.totalorder %s25, 0
      %p151 = por %p149, %p150
      %s152 = ssub.s32 %s19, %s26
      %p153 = scmp.eq.s32.totalorder %s152, 0
      %s155 = sadd.s32 %s154, 1
      %s156 = scalar_select %p153, %s154, %s155
      %p159 = pneg %p153
      %p160 = scmp.eq.s32.totalorder %s19, 1
      %p161 = por %p159, %p160
      %p162 = scmp.ne.s32.totalorder %s154, %s157
      %p163 = scmp.eq.s32.totalorder %s19, 0
      %p164 = por %p162, %p163
      %p165 = scmp.ne.s32.totalorder %s154, %s157
      %p166 = scmp.eq.s32.totalorder %s24, 1
      %p167 = por %p165, %p166
      %p168 = scmp.ne.s32.totalorder %s157, %s158
      %p169 = scmp.eq.s32.totalorder %s24, 0
      %p170 = por %p168, %p169
      %p171 = scmp.ne.s32.totalorder %s157, %s158
      %p172 = scmp.eq.s32.totalorder %s25, 1
      %p173 = por %p171, %p172
      %p175 = scmp.ne.s32.totalorder %s158, %s174
      %p176 = scmp.eq.s32.totalorder %s25, 0
      %p177 = por %p175, %p176
      %s178 = ssub.s32 %s19, %s26
      %p179 = scmp.eq.s32.totalorder %s178, 0
      %s181 = sadd.s32 %s180, 1
      %s182 = scalar_select %p179, %s180, %s181
      %p185 = pneg %p179
      %p186 = scmp.eq.s32.totalorder %s19, 1
      %p187 = por %p185, %p186
      %p188 = scmp.ne.s32.totalorder %s180, %s183
      %p189 = scmp.eq.s32.totalorder %s19, 0
      %p190 = por %p188, %p189
      %p191 = scmp.ne.s32.totalorder %s180, %s183
      %p192 = scmp.eq.s32.totalorder %s24, 1
      %p193 = por %p191, %p192
      %p194 = scmp.ne.s32.totalorder %s183, %s184
      %p195 = scmp.eq.s32.totalorder %s24, 0
      %p196 = por %p194, %p195
      %p197 = scmp.ne.s32.totalorder %s183, %s184
      %p198 = scmp.eq.s32.totalorder %s25, 1
      %p199 = por %p197, %p198
      %p201 = scmp.ne.s32.totalorder %s184, %s200
      %p202 = scmp.eq.s32.totalorder %s25, 0
      %p203 = por %p201, %p202
      %s204 = ssub.s32 %s19, %s26
      %p205 = scmp.eq.s32.totalorder %s204, 0
      %s207 = sadd.s32 %s206, 1
      %s208 = scalar_select %p205, %s206, %s207
      %p211 = pneg %p205
      %p212 = scmp.eq.s32.totalorder %s19, 1
      %p213 = por %p211, %p212
      %p214 = scmp.ne.s32.totalorder %s206, %s209
      %p215 = scmp.eq.s32.totalorder %s19, 0
      %p216 = por %p214, %p215
      %p217 = scmp.ne.s32.totalorder %s206, %s209
      %p218 = scmp.eq.s32.totalorder %s24, 1
      %p219 = por %p217, %p218
      %p220 = scmp.ne.s32.totalorder %s209, %s210
      %p221 = scmp.eq.s32.totalorder %s24, 0
      %p222 = por %p220, %p221
      %p223 = scmp.ne.s32.totalorder %s209, %s210
      %p224 = scmp.eq.s32.totalorder %s25, 1
      %p225 = por %p223, %p224
      %p227 = scmp.ne.s32.totalorder %s210, %s226
      %p228 = scmp.eq.s32.totalorder %s25, 0
      %p229 = por %p227, %p228
      %s230 = ssub.s32 %s19, %s26
      %p231 = scmp.eq.s32.totalorder %s230, 0
      %s233 = sadd.s32 %s232, 1
      %s234 = scalar_select %p231, %s232, %s233
      %p237 = pneg %p231
      %p238 = scmp.eq.s32.totalorder %s19, 1
      %p239 = por %p237, %p238
      %p240 = scmp.ne.s32.totalorder %s232, %s235
      %p241 = scmp.eq.s32.totalorder %s19, 0
      %p242 = por %p240, %p241
      %p243 = scmp.ne.s32.totalorder %s232, %s235
      %p244 = scmp.eq.s32.totalorder %s24, 1
      %p245 = por %p243, %p244
      %p246 = scmp.ne.s32.totalorder %s235, %s236
      %p247 = scmp.eq.s32.totalorder %s24, 0
      %p248 = por %p246, %p247
      %p249 = scmp.ne.s32.totalorder %s235, %s236
      %p250 = scmp.eq.s32.totalorder %s25, 1
      %p251 = por %p249, %p250
      %p253 = scmp.ne.s32.totalorder %s236, %s252
      %p254 = scmp.eq.s32.totalorder %s25, 0
      %p255 = por %p253, %p254
      %s256 = ssub.s32 %s19, %s26
      %p257 = scmp.eq.s32.totalorder %s256, 0
      %s259 = sadd.s32 %s258, 1
      %s260 = scalar_select %p257, %s258, %s259
      %p263 = pneg %p257
      %p264 = scmp.eq.s32.totalorder %s19, 1
      %p265 = por %p263, %p264
      %p266 = scmp.ne.s32.totalorder %s258, %s261
      %p267 = scmp.eq.s32.totalorder %s19, 0
      %p268 = por %p266, %p267
      %p269 = scmp.ne.s32.totalorder %s258, %s261
      %p270 = scmp.eq.s32.totalorder %s24, 1
      %p271 = por %p269, %p270
      %p272 = scmp.ne.s32.totalorder %s261, %s262
      %p273 = scmp.eq.s32.totalorder %s24, 0
      %p274 = por %p272, %p273
      %p275 = scmp.ne.s32.totalorder %s261, %s262
      %p276 = scmp.eq.s32.totalorder %s25, 1
      %p277 = por %p275, %p276
      %p279 = scmp.ne.s32.totalorder %s262, %s278
      %p280 = scmp.eq.s32.totalorder %s25, 0
      %p281 = por %p279, %p280
      %s282 = ssub.s32 %s19, %s26
      %p283 = scmp.eq.s32.totalorder %s282, 0
      %s285 = sadd.s32 %s284, 1
      %s286 = scalar_select %p283, %s284, %s285
      %p289 = pneg %p283
      %p290 = scmp.eq.s32.totalorder %s19, 1
      %p291 = por %p289, %p290
      %p292 = scmp.ne.s32.totalorder %s284, %s287
      %p293 = scmp.eq.s32.totalorder %s19, 0
      %p294 = por %p292, %p293
      %p295 = scmp.ne.s32.totalorder %s284, %s287
      %p296 = scmp.eq.s32.totalorder %s24, 1
      %p297 = por %p295, %p296
      %p298 = scmp.ne.s32.totalorder %s287, %s288
      %p299 = scmp.eq.s32.totalorder %s24, 0
      %p300 = por %p298, %p299
      %p301 = scmp.ne.s32.totalorder %s287, %s288
      %p302 = scmp.eq.s32.totalorder %s25, 1
      %p303 = por %p301, %p302
      %p305 = scmp.ne.s32.totalorder %s288, %s304
      %p306 = scmp.eq.s32.totalorder %s25, 0
      %p307 = por %p305, %p306
      %s309 = sadd.s32 %s308, 1
      %p312 = scmp.eq.s32.totalorder %s19, 1
      %p313 = scmp.ne.s32.totalorder %s308, %s310
      %p314 = scmp.eq.s32.totalorder %s19, 0
      %p315 = por %p313, %p314
      %p316 = scmp.ne.s32.totalorder %s308, %s310
      %p317 = scmp.eq.s32.totalorder %s24, 1
      %p318 = por %p316, %p317
      %p319 = scmp.ne.s32.totalorder %s310, %s311
      %p320 = scmp.eq.s32.totalorder %s24, 0
      %p321 = por %p319, %p320
      %p322 = scmp.ne.s32.totalorder %s310, %s311
      %p323 = scmp.eq.s32.totalorder %s25, 1
      %p324 = por %p322, %p323
      %p326 = scmp.ne.s32.totalorder %s311, %s325
      %p327 = scmp.eq.s32.totalorder %s25, 0
      %p328 = por %p326, %p327
      %p329 = scmp.le.s32.totalorder 1, %s19
      %p330 = scmp.lt.s32.totalorder %s19, 3
      %p331 = pnand %p329, %p330
      %p332 = pneg %p331
      // Predicated region
      $region9: #{unaligned_token_representation.1} parent=5 // pred_check
        _
      $region10: #{unaligned_token_representation.1} parent=5 // pred_check_branch
        %334 = sbr.rel (%p331) target = $region12
      $region11: #{unaligned_token_representation.1} parent=5 // pred_region
        %s335 = ssub.s32 %s19, 1
        // Predicated region
        $region13: #{unaligned_token_representation.1} parent=11 // pred_check
          %p336 = pneg %p40
        $region14: #{unaligned_token_representation.1} parent=11 // pred_check_branch
          %338 = sbr.rel (%p336) target = $region16
        $region15: #{unaligned_token_representation.1} parent=11 // pred_region
          _
        $region16: #{unaligned_token_representation.1} parent=11 // pred_fallthru
          _
      $region12: #{unaligned_token_representation.1} parent=5 // pred_fallthru
        _
      %p339 = scmp.lt.s32.totalorder %s19, 2
      // Predicated region
      $region17: #{unaligned_token_representation.1} parent=5 // pred_check
        %p340 = pneg %p339
      $region18: #{unaligned_token_representation.1} parent=5 // pred_check_branch
        %342 = sbr.rel (%p340) target = $region20
      $region19: #{unaligned_token_representation.1} parent=5 // pred_region
        // Predicated region
        $region21: #{unaligned_token_representation.1} parent=19 // pred_check
          %p343 = pneg %p60
        $region22: #{unaligned_token_representation.1} parent=19 // pred_check_branch
          %345 = sbr.rel (%p343) target = $region24
        $region23: #{unaligned_token_representation.1} parent=19 // pred_region
          %p346 = scmp.lt.s32.totalorder %s19, 1
          %s347 = scalar_select %p346, %s19, 1
          %s348 = scalar_lea.vmem %s2, %s347
        $region24: #{unaligned_token_representation.1} parent=19 // pred_fallthru
          _
        // Predicated region
        $region25: #{unaligned_token_representation.1} parent=19 // pred_check
          %p349 = pneg %p86
        $region26: #{unaligned_token_representation.1} parent=19 // pred_check_branch
          %351 = sbr.rel (%p349) target = $region28
        $region27: #{unaligned_token_representation.1} parent=19 // pred_region
          %p352 = scmp.lt.s32.totalorder %s19, 1
          %s353 = scalar_select %p352, %s19, 1
          %s354 = scalar_lea.vmem %s3, %s353
        $region28: #{unaligned_token_representation.1} parent=19 // pred_fallthru
          _
        // Predicated region
        $region29: #{unaligned_token_representation.1} parent=19 // pred_check
          %p355 = pneg %p112
        $region30: #{unaligned_token_representation.1} parent=19 // pred_check_branch
          %357 = sbr.rel (%p355) target = $region32
        $region31: #{unaligned_token_representation.1} parent=19 // pred_region
          %p358 = scmp.lt.s32.totalorder %s19, 1
          %s359 = scalar_select %p358, %s19, 1
          %s360 = smul.addr %s359, 16
          %s361 = smul.addr %s360, 8
          %s362 = scalar_lea.vmem %s4, %s361
        $region32: #{unaligned_token_representation.1} parent=19 // pred_fallthru
          _
        // Predicated region
        $region33: #{unaligned_token_representation.1} parent=19 // pred_check
          %p363 = pneg %p138
        $region34: #{unaligned_token_representation.1} parent=19 // pred_check_branch
          %365 = sbr.rel (%p363) target = $region36
        $region35: #{unaligned_token_representation.1} parent=19 // pred_region
          %p366 = scmp.lt.s32.totalorder %s19, 1
          %s367 = scalar_select %p366, %s19, 1
          %s368 = scalar_lea.vmem %s5, %s367
        $region36: #{unaligned_token_representation.1} parent=19 // pred_fallthru
          _
        // Predicated region
        $region37: #{unaligned_token_representation.1} parent=19 // pred_check
          %p369 = pneg %p164
        $region38: #{unaligned_token_representation.1} parent=19 // pred_check_branch
          %371 = sbr.rel (%p369) target = $region40
        $region39: #{unaligned_token_representation.1} parent=19 // pred_region
          %p372 = scmp.lt.s32.totalorder %s19, 1
          %s373 = scalar_select %p372, %s19, 1
          %s374 = smul.addr %s373, 16
          %s375 = smul.addr %s374, 8
          %s376 = scalar_lea.vmem %s6, %s375
        $region40: #{unaligned_token_representation.1} parent=19 // pred_fallthru
          _
        // Predicated region
        $region41: #{unaligned_token_representation.1} parent=19 // pred_check
          %p377 = pneg %p190
        $region42: #{unaligned_token_representation.1} parent=19 // pred_check_branch
          %379 = sbr.rel (%p377) target = $region44
        $region43: #{unaligned_token_representation.1} parent=19 // pred_region
          %p380 = scmp.lt.s32.totalorder %s19, 1
          %s381 = scalar_select %p380, %s19, 1
          %s382 = scalar_lea.vmem %s7, %s381
        $region44: #{unaligned_token_representation.1} parent=19 // pred_fallthru
          _
        // Predicated region
        $region45: #{unaligned_token_representation.1} parent=19 // pred_check
          %p383 = pneg %p216
        $region46: #{unaligned_token_representation.1} parent=19 // pred_check_branch
          %385 = sbr.rel (%p383) target = $region48
        $region47: #{unaligned_token_representation.1} parent=19 // pred_region
          %p386 = scmp.lt.s32.totalorder %s19, 1
          %s387 = scalar_select %p386, %s19, 1
          %s388 = smul.addr %s387, 48
          %s389 = smul.addr %s388, 4
          %s390 = scalar_lea.vmem %s8, %s389
        $region48: #{unaligned_token_representation.1} parent=19 // pred_fallthru
          _
        // Predicated region
        $region49: #{unaligned_token_representation.1} parent=19 // pred_check
          %p391 = pneg %p242
        $region50: #{unaligned_token_representation.1} parent=19 // pred_check_branch
          %393 = sbr.rel (%p391) target = $region52
        $region51: #{unaligned_token_representation.1} parent=19 // pred_region
          %p394 = scmp.lt.s32.totalorder %s19, 1
          %s395 = scalar_select %p394, %s19, 1
          %s396 = scalar_lea.vmem %s9, %s395
        $region52: #{unaligned_token_representation.1} parent=19 // pred_fallthru
          _
        // Predicated region
        $region53: #{unaligned_token_representation.1} parent=19 // pred_check
          %p397 = pneg %p268
        $region54: #{unaligned_token_representation.1} parent=19 // pred_check_branch
          %399 = sbr.rel (%p397) target = $region56
        $region55: #{unaligned_token_representation.1} parent=19 // pred_region
          %p400 = scmp.lt.s32.totalorder %s19, 1
          %s401 = scalar_select %p400, %s19, 1
          %s402 = smul.addr %s401, 48
          %s403 = smul.addr %s402, 4
          %s404 = scalar_lea.vmem %s10, %s403
        $region56: #{unaligned_token_representation.1} parent=19 // pred_fallthru
          _
        // Predicated region
        $region57: #{unaligned_token_representation.1} parent=19 // pred_check
          %p405 = pneg %p294
        $region58: #{unaligned_token_representation.1} parent=19 // pred_check_branch
          %407 = sbr.rel (%p405) target = $region60
        $region59: #{unaligned_token_representation.1} parent=19 // pred_region
          %p408 = scmp.lt.s32.totalorder %s19, 1
          %s409 = scalar_select %p408, %s19, 1
          %s410 = scalar_lea.vmem %s11, %s409
        $region60: #{unaligned_token_representation.1} parent=19 // pred_fallthru
          _
      $region20: #{unaligned_token_representation.1} parent=5 // pred_fallthru
        _
      %p411 = scmp.le.s32.totalorder 1, %s19
      %p412 = scmp.lt.s32.totalorder %s19, 3
      %p413 = pnand %p411, %p412
      %p414 = pneg %p413
      // Predicated region
      $region61: #{unaligned_token_representation.1} parent=5 // pred_check
        _
      $region62: #{unaligned_token_representation.1} parent=5 // pred_check_branch
        %416 = sbr.rel (%p413) target = $region64
      $region63: #{unaligned_token_representation.1} parent=5 // pred_region
        %s417 = ssub.s32 %s19, 1
        %p418 = pneg %p40
        %p419 = pneg %p37
        %p420 = scmp.lt.s32.totalorder %s24, 1
        %s421 = scalar_select %p420, %s24, 1
        %s422 = scalar_lea.vmem %s2, %s421
        %p423 = pneg %p66
        %p424 = pneg %p63
        %p425 = scmp.lt.s32.totalorder %s24, 1
        %s426 = scalar_select %p425, %s24, 1
        %s427 = scalar_lea.vmem %s3, %s426
        %p428 = pneg %p92
        %p429 = pneg %p89
        %p430 = scmp.lt.s32.totalorder %s24, 1
        %s431 = scalar_select %p430, %s24, 1
        %s432 = smul.addr %s431, 16
        %s433 = smul.addr %s432, 8
        %s434 = scalar_lea.vmem %s4, %s433
        %p435 = pneg %p118
        %p436 = pneg %p115
        %p437 = scmp.lt.s32.totalorder %s24, 1
        %s438 = scalar_select %p437, %s24, 1
        %s439 = scalar_lea.vmem %s5, %s438
        %p440 = pneg %p144
        %p441 = pneg %p141
        %p442 = scmp.lt.s32.totalorder %s24, 1
        %s443 = scalar_select %p442, %s24, 1
        %s444 = smul.addr %s443, 16
        %s445 = smul.addr %s444, 8
        %s446 = scalar_lea.vmem %s6, %s445
        %p447 = pneg %p170
        %p448 = pneg %p167
        %p449 = scmp.lt.s32.totalorder %s24, 1
        %s450 = scalar_select %p449, %s24, 1
        %s451 = scalar_lea.vmem %s7, %s450
        %p452 = pneg %p196
        %p453 = pneg %p193
        %p454 = scmp.lt.s32.totalorder %s24, 1
        %s455 = scalar_select %p454, %s24, 1
        %s456 = smul.addr %s455, 48
        %s457 = smul.addr %s456, 4
        %s458 = scalar_lea.vmem %s8, %s457
        %p459 = pneg %p222
        %p460 = pneg %p219
        %p461 = scmp.lt.s32.totalorder %s24, 1
        %s462 = scalar_select %p461, %s24, 1
        %s463 = scalar_lea.vmem %s9, %s462
        %p464 = pneg %p248
        %p465 = pneg %p245
        %p466 = scmp.lt.s32.totalorder %s24, 1
        %s467 = scalar_select %p466, %s24, 1
        %s468 = smul.addr %s467, 48
        %s469 = smul.addr %s468, 4
        %s470 = scalar_lea.vmem %s10, %s469
        %p471 = pneg %p274
        %p472 = pneg %p271
        %p473 = scmp.lt.s32.totalorder %s24, 1
        %s474 = scalar_select %p473, %s24, 1
        %s475 = scalar_lea.vmem %s11, %s474
        %p476 = pneg %p300
        %p477 = pneg %p297
        %p478 = pneg %p321
        %p479 = pneg %p318
        %p480 = scmp.lt.s32.totalorder %s24, 1
        %s481 = scalar_select %p480, %s24, 1
        %s482 = scalar_lea.vmem %s2, %s481
        %p483 = scmp.lt.s32.totalorder %s24, 1
        %s484 = scalar_select %p483, %s24, 1
        %s485 = scalar_lea.vmem %s3, %s484
        %p486 = scmp.lt.s32.totalorder %s24, 1
        %s487 = scalar_select %p486, %s24, 1
        %s488 = smul.addr %s487, 16
        %s489 = smul.addr %s488, 8
        %s490 = scalar_lea.vmem %s4, %s489
        %p491 = scmp.lt.s32.totalorder %s24, 1
        %s492 = scalar_select %p491, %s24, 1
        %s493 = scalar_lea.vmem %s5, %s492
        %p494 = scmp.lt.s32.totalorder %s24, 1
        %s495 = scalar_select %p494, %s24, 1
        %s496 = smul.addr %s495, 16
        %s497 = smul.addr %s496, 8
        %s498 = scalar_lea.vmem %s6, %s497
        %p499 = scmp.lt.s32.totalorder %s24, 1
        %s500 = scalar_select %p499, %s24, 1
        %s501 = scalar_lea.vmem %s7, %s500
        %p502 = scmp.lt.s32.totalorder %s24, 1
        %s503 = scalar_select %p502, %s24, 1
        %s504 = smul.addr %s503, 48
        %s505 = smul.addr %s504, 4
        %s506 = scalar_lea.vmem %s8, %s505
        %p507 = scmp.lt.s32.totalorder %s24, 1
        %s508 = scalar_select %p507, %s24, 1
        %s509 = scalar_lea.vmem %s9, %s508
        %p510 = scmp.lt.s32.totalorder %s24, 1
        %s511 = scalar_select %p510, %s24, 1
        %s512 = smul.addr %s511, 48
        %s513 = smul.addr %s512, 4
        %s514 = scalar_lea.vmem %s10, %s513
        %p515 = scmp.lt.s32.totalorder %s24, 1
        %s516 = scalar_select %p515, %s24, 1
        %s517 = scalar_lea.vmem %s11, %s516
        %p519 = scmp.eq.s32.totalorder %s24, 0
        // Predicated region
        $region65: #{unaligned_token_representation.1} parent=63 // pred_check
          %p520 = pneg %p519
        $region66: #{unaligned_token_representation.1} parent=63 // pred_check_branch
          %522 = sbr.rel (%p520) target = $region68
        $region67: #{unaligned_token_representation.1} parent=63 // pred_region
          $region69: #{unaligned_token_representation.1} parent=67
            #allocation5 [shape = 's32[1]{0}', space=sflag, size = 0x4, scoped, tag = 'scoped memory for unaligned_token_representation.1']
            %p524 = scmp.lt.u32.totalorder 128, 8
            %p525 = pneg %p524
            // Predicated region
            $region70: #{unaligned_token_representation.1} parent=69 // pred_check
              _
            $region71: #{unaligned_token_representation.1} parent=69 // pred_check_branch
              %527 = sbr.rel (%p524) target = $region73
            $region72: #{unaligned_token_representation.1} parent=69 // pred_region
              %s543 = sand.u32 128, 7
              %p544 = scmp.eq.s32.totalorder %s543, 0
              // Predicated region
              $region85: #{unaligned_token_representation.1} parent=72 // pred_check
                %p545 = pneg %p544
              $region86: #{unaligned_token_representation.1} parent=72 // pred_check_branch
                %547 = sbr.rel (%p545) target = $region88
              $region87: #{unaligned_token_representation.1} parent=72 // pred_region
                loop: start=0, step=1, limit=1
                $region89: #{unaligned_token_representation.1} parent=87 // loop_pre_header
                  _
                $region90: #{unaligned_token_representation.1} parent=87 // loop_header
                  %s549 = sphi 0, %s553
                  %p550 = scmp.ge.s32.totalorder %s549, 1
                  %s554 = sphi %s0, %s0
                  %s555 = sphi [#allocation3], [#allocation3]
                $region91: #{unaligned_token_representation.1} parent=87 // loop_header_branch
                  %552 = sbr.rel (%p550) target = $region95
                $region92: #{unaligned_token_representation.1} parent=87 // loop_body
                  %v556 = vld [vmem:[%s554] sm:$0xff]
                  %557 = vst [vmem:[%s555] sm:$0xff] %v556
                  %v558 = vld [vmem:[%s554 + $0x8] sm:$0xff]
                  %559 = vst [vmem:[%s555 + $0x8] sm:$0xff] %v558
                  %v560 = vld [vmem:[%s554 + $0x10] sm:$0xff]
                  %561 = vst [vmem:[%s555 + $0x10] sm:$0xff] %v560
                  %v562 = vld [vmem:[%s554 + $0x18] sm:$0xff]
                  %563 = vst [vmem:[%s555 + $0x18] sm:$0xff] %v562
                  %v564 = vld [vmem:[%s554 + $0x20] sm:$0xff]
                  %565 = vst [vmem:[%s555 + $0x20] sm:$0xff] %v564
                  %v566 = vld [vmem:[%s554 + $0x28] sm:$0xff]
                  %567 = vst [vmem:[%s555 + $0x28] sm:$0xff] %v566
                  %v568 = vld [vmem:[%s554 + $0x30] sm:$0xff]
                  %569 = vst [vmem:[%s555 + $0x30] sm:$0xff] %v568
                  %v570 = vld [vmem:[%s554 + $0x38] sm:$0xff]
                  %571 = vst [vmem:[%s555 + $0x38] sm:$0xff] %v570
                  %v572 = vld [vmem:[%s554 + $0x40] sm:$0xff]
                  %573 = vst [vmem:[%s555 + $0x40] sm:$0xff] %v572
                  %v574 = vld [vmem:[%s554 + $0x48] sm:$0xff]
                  %575 = vst [vmem:[%s555 + $0x48] sm:$0xff] %v574
                  %v576 = vld [vmem:[%s554 + $0x50] sm:$0xff]
                  %577 = vst [vmem:[%s555 + $0x50] sm:$0xff] %v576
                  %v578 = vld [vmem:[%s554 + $0x58] sm:$0xff]
                  %579 = vst [vmem:[%s555 + $0x58] sm:$0xff] %v578
                  %v580 = vld [vmem:[%s554 + $0x60] sm:$0xff]
                  %581 = vst [vmem:[%s555 + $0x60] sm:$0xff] %v580
                  %v582 = vld [vmem:[%s554 + $0x68] sm:$0xff]
                  %583 = vst [vmem:[%s555 + $0x68] sm:$0xff] %v582
                  %v584 = vld [vmem:[%s554 + $0x70] sm:$0xff]
                  %585 = vst [vmem:[%s555 + $0x70] sm:$0xff] %v584
                  %v586 = vld [vmem:[%s554 + $0x78] sm:$0xff]
                  %587 = vst [vmem:[%s555 + $0x78] sm:$0xff] %v586
                $region93: #{unaligned_token_representation.1} parent=87 // loop_footer
                  %s553 = sadd.s32 1, %s549
                $region94: #{unaligned_token_representation.1} parent=87 // loop_footer_branch
                  %548 = sbr.rel target = $region90
                $region95: #{unaligned_token_representation.1} parent=87 // loop_exit
                  _
              $region88: #{unaligned_token_representation.1} parent=72 // pred_fallthru
                _
              %p588 = pneg %p544
              // Predicated region
              $region96: #{unaligned_token_representation.1} parent=72 // pred_check
                _
              $region97: #{unaligned_token_representation.1} parent=72 // pred_check_branch
                %590 = sbr.rel (%p544) target = $region99
              $region98: #{unaligned_token_representation.1} parent=72 // pred_region
                %s591 = sand.u32 128, 7
              $region99: #{unaligned_token_representation.1} parent=72 // pred_fallthru
                _
            $region73: #{unaligned_token_representation.1} parent=69 // pred_fallthru
              _
            // Predicated region
            $region74: #{unaligned_token_representation.1} parent=69 // pred_check
              %p528 = pneg %p524
            $region75: #{unaligned_token_representation.1} parent=69 // pred_check_branch
              %530 = sbr.rel (%p528) target = $region77
            $region76: #{unaligned_token_representation.1} parent=69 // pred_region
              %s531 = sshll.u32 1, 128
              %s532 = ssub.s32 %s531, 1
              loop: start=0, step=1, limit=1
              $region78: #{unaligned_token_representation.1} parent=76 // loop_pre_header
                _
              $region79: #{unaligned_token_representation.1} parent=76 // loop_header
                %s534 = sphi 0, %s538
                %p535 = scmp.ge.s32.totalorder %s534, 1
                %s539 = sphi %s0, %s0
                %s540 = sphi [#allocation3], [#allocation3]
              $region80: #{unaligned_token_representation.1} parent=76 // loop_header_branch
                %537 = sbr.rel (%p535) target = $region84
              $region81: #{unaligned_token_representation.1} parent=76 // loop_body
                %v541 = vld [vmem:[%s539] sm:%s532]
                %542 = vst [vmem:[%s540] sm:%s532] %v541
              $region82: #{unaligned_token_representation.1} parent=76 // loop_footer
                %s538 = sadd.s32 1, %s534
              $region83: #{unaligned_token_representation.1} parent=76 // loop_footer_branch
                %533 = sbr.rel target = $region79
              $region84: #{unaligned_token_representation.1} parent=76 // loop_exit
                _
            $region77: #{unaligned_token_representation.1} parent=69 // pred_fallthru
              _
            // Predicated region
            $region100: #{unaligned_token_representation.1} parent=69 // pred_check
              _
            $region101: #{unaligned_token_representation.1} parent=69 // pred_check_branch
              %594 = sbr.rel (0) target = $region103
            $region102: #{unaligned_token_representation.1} parent=69 // pred_region
              %595 = vsyncadd [#allocation5], 2048
            $region103: #{unaligned_token_representation.1} parent=69 // pred_fallthru
              _
            %s596 = smul.u32 2, 64
            %s597 = smul.u32 %s596, 1
            %s598 = sshll.u32 %s597, 4
            %599 = dma.done [#allocation5], %s598
        $region68: #{unaligned_token_representation.1} parent=63 // pred_fallthru
          _
        %v600 = vld [vmem:[%s482] sm:$0x1]
        %v601 = vld [vmem:[%s485] sm:$0x1]
        %v602 = vld [vmem:[%s509] sm:$0x1]
        %v603 = vld [vmem:[%s517] sm:$0x1]
        %v604 = vld [vmem:[%s1] sm:$0x3]
        %v605 = vld [vmem:[%s490] sm:$0xff]
        %v606 = vld [vmem:[%s490 + $0x8] sm:$0xff]
        %v607 = vld [vmem:[%s490 + $0x10] sm:$0xff]
        %v608 = vld [vmem:[%s490 + $0x18] sm:$0xff]
        %v609 = vld [vmem:[%s490 + $0x20] sm:$0xff]
        %v610 = vld [vmem:[%s490 + $0x28] sm:$0xff]
        %v611 = vld [vmem:[%s490 + $0x30] sm:$0xff]
        %v612 = vld [vmem:[%s490 + $0x38] sm:$0xff]
        %v613 = vld [vmem:[%s490 + $0x40] sm:$0xff]
        %v614 = vld [vmem:[%s490 + $0x48] sm:$0xff]
        %v615 = vld [vmem:[%s490 + $0x50] sm:$0xff]
        %v616 = vld [vmem:[%s490 + $0x58] sm:$0xff]
        %v617 = vld [vmem:[%s490 + $0x60] sm:$0xff]
        %v618 = vld [vmem:[%s490 + $0x68] sm:$0xff]
        %v619 = vld [vmem:[%s490 + $0x70] sm:$0xff]
        %v620 = vld [vmem:[%s490 + $0x78] sm:$0xff]
        %621 = vmatprep.subr.mxu0 0.0
        %622 = vmatpush1.msra.mxu0 %v620
        %623 = vmatprep.subr.mxu0 0.0
        %624 = vmatpush1.msra.mxu0 %v619
        %625 = vmatprep.subr.mxu0 0.0
        %626 = vmatpush1.msra.mxu0 %v618
        %627 = vmatprep.subr.mxu0 0.0
        %628 = vmatpush1.msra.mxu0 %v617
        %629 = vmatprep.subr.mxu0 0.0
        %630 = vmatpush1.msra.mxu0 %v616
        %631 = vmatprep.subr.mxu0 0.0
        %632 = vmatpush1.msra.mxu0 %v615
        %633 = vmatprep.subr.mxu0 0.0
        %634 = vmatpush1.msra.mxu0 %v614
        %635 = vmatprep.subr.mxu0 0.0
        %636 = vmatpush1.msra.mxu0 %v613
        %637 = vmatprep.subr.mxu0 0.0
        %638 = vmatpush1.msra.mxu0 %v612
        %639 = vmatprep.subr.mxu0 0.0
        %640 = vmatpush1.msra.mxu0 %v611
        %641 = vmatprep.subr.mxu0 0.0
        %642 = vmatpush1.msra.mxu0 %v610
        %643 = vmatprep.subr.mxu0 0.0
        %644 = vmatpush1.msra.mxu0 %v609
        %645 = vmatprep.subr.mxu0 0.0
        %646 = vmatpush1.msra.mxu0 %v608
        %647 = vmatprep.subr.mxu0 0.0
        %648 = vmatpush1.msra.mxu0 %v607
        %649 = vmatprep.subr.mxu0 0.0
        %650 = vmatpush1.msra.mxu0 %v606
        %651 = vmatprep.subr.mxu0 0.0
        %652 = vmatpush1.msra.mxu0 %v605
        %653 = vmatprep.subr.mxu0 0.0
        %654 = vmatpush2.msra.mxu0 0.0
        %655 = vmatprep.subr.mxu0 0.0
        %656 = vmatpush2.msra.mxu0 0.0
        %657 = vmatprep.subr.mxu0 0.0
        %658 = vmatpush2.msra.mxu0 0.0
        %659 = vmatprep.subr.mxu0 0.0
        %660 = vmatpush2.msra.mxu0 0.0
        %661 = vmatprep.subr.mxu0 0.0
        %662 = vmatpush2.msra.mxu0 0.0
        %663 = vmatprep.subr.mxu0 0.0
        %664 = vmatpush2.msra.mxu0 0.0
        %665 = vmatprep.subr.mxu0 0.0
        %666 = vmatpush2.msra.mxu0 0.0
        %667 = vmatprep.subr.mxu0 0.0
        %668 = vmatpush2.msra.mxu0 0.0
        %669 = vmatprep.subr.mxu0 0.0
        %670 = vmatpush2.msra.mxu0 0.0
        %671 = vmatprep.subr.mxu0 0.0
        %672 = vmatpush2.msra.mxu0 0.0
        %673 = vmatprep.subr.mxu0 0.0
        %674 = vmatpush2.msra.mxu0 0.0
        %675 = vmatprep.subr.mxu0 0.0
        %676 = vmatpush2.msra.mxu0 0.0
        %677 = vmatprep.subr.mxu0 0.0
        %678 = vmatpush2.msra.mxu0 0.0
        %679 = vmatprep.subr.mxu0 0.0
        %680 = vmatpush2.msra.mxu0 0.0
        %681 = vmatprep.subr.mxu0 0.0
        %682 = vmatpush2.msra.mxu0 0.0
        %683 = vmatprep.subr.mxu0 0.0
        %684 = vmatpush2.msra.mxu0 0.0
        %685 = vmatprep.mubr.f32.mxu0 0.0
        %686 = vmatmul.mubr.f32.gmra.mxu0 %v604
        %v687 = vpop.f32.mrf.mxu0
        %v688 = vadd.f32 1.0, %v687
        %v689 = vpop.f32.mrf.mxu0
        %690 = vdwg.mxu0
        %v691 = vld [vmem:[%s493] sm:$0x1]
        %v693 = vlaneseq
        %v694 = vshrl.u32 %v693, 7
        %v695 = vsub.s32 0, %v694
        %v696 = vrot.slane %v691, %v695
        %v698 = vadd.f32 %v688, %v696
        %v699 = vlaneseq
        %v700 = vshrl.u32 %v699, 7
        %v701 = vsub.s32 0, %v700
        %v702 = vrot.slane %v698, %v701
        %704 = vbcast.lane.b32.xlu0 %v702, 256
        %v705 = vpop.permute.xlu0 %704
        %s707 = sor.u32 256, 8
        %708 = vbcast.lane.b32.xlu0 %v702, %s707
        %v709 = vpop.permute.xlu0 %708
        %s711 = sor.u32 256, 16
        %712 = vbcast.lane.b32.xlu0 %v702, %s711
        %v713 = vpop.permute.xlu0 %712
        %s715 = sor.u32 256, 24
        %716 = vbcast.lane.b32.xlu0 %v702, %s715
        %v717 = vpop.permute.xlu0 %716
        %s719 = sor.u32 256, 32
        %720 = vbcast.lane.b32.xlu0 %v702, %s719
        %v721 = vpop.permute.xlu0 %720
        %s723 = sor.u32 256, 40
        %724 = vbcast.lane.b32.xlu0 %v702, %s723
        %v725 = vpop.permute.xlu0 %724
        %s727 = sor.u32 256, 48
        %728 = vbcast.lane.b32.xlu0 %v702, %s727
        %v729 = vpop.permute.xlu0 %728
        %s731 = sor.u32 256, 56
        %732 = vbcast.lane.b32.xlu0 %v702, %s731
        %v733 = vpop.permute.xlu0 %732
        %v734 = vlaneseq
        %v735 = vshrl.u32 %v734, 7
        %v736 = vsub.s32 1, %v735
        %v737 = vrot.slane %v698, %v736
        %739 = vbcast.lane.b32.xlu0 %v737, 256
        %v740 = vpop.permute.xlu0 %739
        %s742 = sor.u32 256, 8
        %743 = vbcast.lane.b32.xlu0 %v737, %s742
        %v744 = vpop.permute.xlu0 %743
        %s746 = sor.u32 256, 16
        %747 = vbcast.lane.b32.xlu0 %v737, %s746
        %v748 = vpop.permute.xlu0 %747
        %s750 = sor.u32 256, 24
        %751 = vbcast.lane.b32.xlu0 %v737, %s750
        %v752 = vpop.permute.xlu0 %751
        %s754 = sor.u32 256, 32
        %755 = vbcast.lane.b32.xlu0 %v737, %s754
        %v756 = vpop.permute.xlu0 %755
        %s758 = sor.u32 256, 40
        %759 = vbcast.lane.b32.xlu0 %v737, %s758
        %v760 = vpop.permute.xlu0 %759
        %s762 = sor.u32 256, 48
        %763 = vbcast.lane.b32.xlu0 %v737, %s762
        %v764 = vpop.permute.xlu0 %763
        %s766 = sor.u32 256, 56
        %767 = vbcast.lane.b32.xlu0 %v737, %s766
        %v768 = vpop.permute.xlu0 %767
        %v769 = vld [vmem:[%s498] sm:$0xff]
        %v770 = vld [vmem:[%s498 + $0x8] sm:$0xff]
        %v771 = vld [vmem:[%s498 + $0x10] sm:$0xff]
        %v772 = vld [vmem:[%s498 + $0x18] sm:$0xff]
        %v773 = vld [vmem:[%s498 + $0x20] sm:$0xff]
        %v774 = vld [vmem:[%s498 + $0x28] sm:$0xff]
        %v775 = vld [vmem:[%s498 + $0x30] sm:$0xff]
        %v776 = vld [vmem:[%s498 + $0x38] sm:$0xff]
        %v777 = vld [vmem:[%s498 + $0x40] sm:$0xff]
        %v778 = vld [vmem:[%s498 + $0x48] sm:$0xff]
        %v779 = vld [vmem:[%s498 + $0x50] sm:$0xff]
        %v780 = vld [vmem:[%s498 + $0x58] sm:$0xff]
        %v781 = vld [vmem:[%s498 + $0x60] sm:$0xff]
        %v782 = vld [vmem:[%s498 + $0x68] sm:$0xff]
        %v783 = vld [vmem:[%s498 + $0x70] sm:$0xff]
        %v784 = vld [vmem:[%s498 + $0x78] sm:$0xff]
        %v785 = vld [vmem:[%s501] sm:$0x1]
        %v787 = vlaneseq
        %v788 = vshrl.u32 %v787, 7
        %v789 = vsub.s32 0, %v788
        %v790 = vrot.slane %v785, %v789
        %792 = vmatprep.subr.mxu0 0.0
        %793 = vmatpush1.msra.mxu0 %v784
        %794 = vmatprep.subr.mxu0 0.0
        %795 = vmatpush1.msra.mxu0 %v783
        %796 = vmatprep.subr.mxu0 0.0
        %797 = vmatpush1.msra.mxu0 %v782
        %798 = vmatprep.subr.mxu0 0.0
        %799 = vmatpush1.msra.mxu0 %v781
        %800 = vmatprep.subr.mxu0 0.0
        %801 = vmatpush1.msra.mxu0 %v780
        %802 = vmatprep.subr.mxu0 0.0
        %803 = vmatpush1.msra.mxu0 %v779
        %804 = vmatprep.subr.mxu0 0.0
        %805 = vmatpush1.msra.mxu0 %v778
        %806 = vmatprep.subr.mxu0 0.0
        %807 = vmatpush1.msra.mxu0 %v777
        %808 = vmatprep.subr.mxu0 0.0
        %809 = vmatpush1.msra.mxu0 %v776
        %810 = vmatprep.subr.mxu0 0.0
        %811 = vmatpush1.msra.mxu0 %v775
        %812 = vmatprep.subr.mxu0 0.0
        %813 = vmatpush1.msra.mxu0 %v774
        %814 = vmatprep.subr.mxu0 0.0
        %815 = vmatpush1.msra.mxu0 %v773
        %816 = vmatprep.subr.mxu0 0.0
        %817 = vmatpush1.msra.mxu0 %v772
        %818 = vmatprep.subr.mxu0 0.0
        %819 = vmatpush1.msra.mxu0 %v771
        %820 = vmatprep.subr.mxu0 0.0
        %821 = vmatpush1.msra.mxu0 %v770
        %822 = vmatprep.subr.mxu0 0.0
        %823 = vmatpush1.msra.mxu0 %v769
        %824 = vmatprep.subr.mxu0 0.0
        %825 = vmatpush2.msra.mxu0 0.0
        %826 = vmatprep.subr.mxu0 0.0
        %827 = vmatpush2.msra.mxu0 0.0
        %828 = vmatprep.subr.mxu0 0.0
        %829 = vmatpush2.msra.mxu0 0.0
        %830 = vmatprep.subr.mxu0 0.0
        %831 = vmatpush2.msra.mxu0 0.0
        %832 = vmatprep.subr.mxu0 0.0
        %833 = vmatpush2.msra.mxu0 0.0
        %834 = vmatprep.subr.mxu0 0.0
        %835 = vmatpush2.msra.mxu0 0.0
        %836 = vmatprep.subr.mxu0 0.0
        %837 = vmatpush2.msra.mxu0 0.0
        %838 = vmatprep.subr.mxu0 0.0
        %839 = vmatpush2.msra.mxu0 0.0
        %840 = vmatprep.subr.mxu0 0.0
        %841 = vmatpush2.msra.mxu0 0.0
        %842 = vmatprep.subr.mxu0 0.0
        %843 = vmatpush2.msra.mxu0 0.0
        %844 = vmatprep.subr.mxu0 0.0
        %845 = vmatpush2.msra.mxu0 0.0
        %846 = vmatprep.subr.mxu0 0.0
        %847 = vmatpush2.msra.mxu0 0.0
        %848 = vmatprep.subr.mxu0 0.0
        %849 = vmatpush2.msra.mxu0 0.0
        %850 = vmatprep.subr.mxu0 0.0
        %851 = vmatpush2.msra.mxu0 0.0
        %852 = vmatprep.subr.mxu0 0.0
        %853 = vmatpush2.msra.mxu0 0.0
        %854 = vmatprep.subr.mxu0 0.0
        %855 = vmatpush2.msra.mxu0 0.0
        %856 = vmatprep.mubr.f32.mxu0 0.0
        %857 = vmatmul.mubr.f32.gmra.mxu0 %v604
        %v858 = vpop.f32.mrf.mxu0
        %v859 = vadd.f32 %v790, %v858
        %v860 = vpop.f32.mrf.mxu0
        %861 = vdwg.mxu0
        %v862 = vlaneseq
        %v863 = vshrl.u32 %v862, 7
        %v864 = vsub.s32 0, %v863
        %v865 = vrot.slane %v859, %v864
        %867 = vbcast.lane.b32.xlu0 %v865, 256
        %v868 = vpop.permute.xlu0 %867
        %s870 = sor.u32 256, 8
        %871 = vbcast.lane.b32.xlu0 %v865, %s870
        %v872 = vpop.permute.xlu0 %871
        %s874 = sor.u32 256, 16
        %875 = vbcast.lane.b32.xlu0 %v865, %s874
        %v876 = vpop.permute.xlu0 %875
        %s878 = sor.u32 256, 24
        %879 = vbcast.lane.b32.xlu0 %v865, %s878
        %v880 = vpop.permute.xlu0 %879
        %s882 = sor.u32 256, 32
        %883 = vbcast.lane.b32.xlu0 %v865, %s882
        %v884 = vpop.permute.xlu0 %883
        %s886 = sor.u32 256, 40
        %887 = vbcast.lane.b32.xlu0 %v865, %s886
        %v888 = vpop.permute.xlu0 %887
        %s890 = sor.u32 256, 48
        %891 = vbcast.lane.b32.xlu0 %v865, %s890
        %v892 = vpop.permute.xlu0 %891
        %s894 = sor.u32 256, 56
        %895 = vbcast.lane.b32.xlu0 %v865, %s894
        %v896 = vpop.permute.xlu0 %895
        %v897 = vlaneseq
        %v898 = vshrl.u32 %v897, 7
        %v899 = vsub.s32 1, %v898
        %v900 = vrot.slane %v859, %v899
        %902 = vbcast.lane.b32.xlu0 %v900, 256
        %v903 = vpop.permute.xlu0 %902
        %s905 = sor.u32 256, 8
        %906 = vbcast.lane.b32.xlu0 %v900, %s905
        %v907 = vpop.permute.xlu0 %906
        %s909 = sor.u32 256, 16
        %910 = vbcast.lane.b32.xlu0 %v900, %s909
        %v911 = vpop.permute.xlu0 %910
        %s913 = sor.u32 256, 24
        %914 = vbcast.lane.b32.xlu0 %v900, %s913
        %v915 = vpop.permute.xlu0 %914
        %s917 = sor.u32 256, 32
        %918 = vbcast.lane.b32.xlu0 %v900, %s917
        %v919 = vpop.permute.xlu0 %918
        %s921 = sor.u32 256, 40
        %922 = vbcast.lane.b32.xlu0 %v900, %s921
        %v923 = vpop.permute.xlu0 %922
        %s925 = sor.u32 256, 48
        %926 = vbcast.lane.b32.xlu0 %v900, %s925
        %v927 = vpop.permute.xlu0 %926
        %s929 = sor.u32 256, 56
        %930 = vbcast.lane.b32.xlu0 %v900, %s929
        %v931 = vpop.permute.xlu0 %930
        // Predicated region
        $region104: #{unaligned_token_representation.1} parent=63 // pred_check
          %p932 = pneg %p519
        $region105: #{unaligned_token_representation.1} parent=63 // pred_check_branch
          %934 = sbr.rel (%p932) target = $region107
        $region106: #{unaligned_token_representation.1} parent=63 // pred_region
          %v935 = vld [vmem:[#allocation3] sm:$0xff]
          %v936 = vld [vmem:[#allocation3 + $0x8] sm:$0xff]
          %v937 = vld [vmem:[#allocation3 + $0x10] sm:$0xff]
          %v938 = vld [vmem:[#allocation3 + $0x18] sm:$0xff]
          %v939 = vld [vmem:[#allocation3 + $0x20] sm:$0xff]
          %v940 = vld [vmem:[#allocation3 + $0x28] sm:$0xff]
          %v941 = vld [vmem:[#allocation3 + $0x30] sm:$0xff]
          %v942 = vld [vmem:[#allocation3 + $0x38] sm:$0xff]
          %v943 = vld [vmem:[#allocation3 + $0x40] sm:$0xff]
          %v944 = vld [vmem:[#allocation3 + $0x48] sm:$0xff]
          %v945 = vld [vmem:[#allocation3 + $0x50] sm:$0xff]
          %v946 = vld [vmem:[#allocation3 + $0x58] sm:$0xff]
          %v947 = vld [vmem:[#allocation3 + $0x60] sm:$0xff]
          %v948 = vld [vmem:[#allocation3 + $0x68] sm:$0xff]
          %v949 = vld [vmem:[#allocation3 + $0x70] sm:$0xff]
          %v950 = vld [vmem:[#allocation3 + $0x78] sm:$0xff]
          %v951 = vadd.f32 %v935, %v936
          %v952 = vadd.f32 %v951, %v937
          %v953 = vadd.f32 %v952, %v938
          %v954 = vadd.f32 %v953, %v939
          %v955 = vadd.f32 %v954, %v940
          %v956 = vadd.f32 %v955, %v941
          %v957 = vadd.f32 %v956, %v942
          %v958 = vadd.f32 %v957, %v943
          %v959 = vadd.f32 %v958, %v944
          %v960 = vadd.f32 %v959, %v945
          %v961 = vadd.f32 %v960, %v946
          %v962 = vadd.f32 %v961, %v947
          %v963 = vadd.f32 %v962, %v948
          %v964 = vadd.f32 %v963, %v949
          %v965 = vadd.f32 %v964, %v950
          %v966 = vrot.slane %v965, 4
          %v967 = vadd.f32 %v965, %v966
          %v968 = vrot.slane %v967, 2
          %v969 = vadd.f32 %v967, %v968
          %v970 = vrot.slane %v969, 1
          %v971 = vadd.f32 %v969, %v970
          %v972 = vrcp.pop 128.0
          %v973 = vmul.f32 %v971, %v972
          %v974 = vmul.f32 %v935, %v935
          %v975 = vmul.f32 %v936, %v936
          %v976 = vmul.f32 %v937, %v937
          %v977 = vmul.f32 %v938, %v938
          %v978 = vmul.f32 %v939, %v939
          %v979 = vmul.f32 %v940, %v940
          %v980 = vmul.f32 %v941, %v941
          %v981 = vmul.f32 %v942, %v942
          %v982 = vmul.f32 %v943, %v943
          %v983 = vmul.f32 %v944, %v944
          %v984 = vmul.f32 %v945, %v945
          %v985 = vmul.f32 %v946, %v946
          %v986 = vmul.f32 %v947, %v947
          %v987 = vmul.f32 %v948, %v948
          %v988 = vmul.f32 %v949, %v949
          %v989 = vmul.f32 %v950, %v950
          %v990 = vadd.f32 %v974, %v975
          %v991 = vadd.f32 %v990, %v976
          %v992 = vadd.f32 %v991, %v977
          %v993 = vadd.f32 %v992, %v978
          %v994 = vadd.f32 %v993, %v979
          %v995 = vadd.f32 %v994, %v980
          %v996 = vadd.f32 %v995, %v981
          %v997 = vadd.f32 %v996, %v982
          %v998 = vadd.f32 %v997, %v983
          %v999 = vadd.f32 %v998, %v984
          %v1000 = vadd.f32 %v999, %v985
          %v1001 = vadd.f32 %v1000, %v986
          %v1002 = vadd.f32 %v1001, %v987
          %v1003 = vadd.f32 %v1002, %v988
          %v1004 = vadd.f32 %v1003, %v989
          %v1005 = vrot.slane %v1004, 4
          %v1006 = vadd.f32 %v1004, %v1005
          %v1007 = vrot.slane %v1006, 2
          %v1008 = vadd.f32 %v1006, %v1007
          %v1009 = vrot.slane %v1008, 1
          %v1010 = vadd.f32 %v1008, %v1009
          %v1011 = vmul.f32 %v1010, %v972
          %v1012 = vmul.f32 %v973, %v973
          %v1013 = vsub.f32 %v1011, %v1012
          %v1014 = vmax.f32 %v1013, 0.0
          %v1015 = vadd.f32 %v1014, 1e-05
          %v1016 = vrsqrt.pop %v1015
          %v1017 = vmul.f32 %v600, %v1016
          %v1018 = vmul.f32 %v973, %v1017
          %v1019 = vsub.f32 %v601, %v1018
          %v1021 = vlaneseq
          %v1022 = vshrl.u32 %v1021, 7
          %v1023 = vsub.s32 0, %v1022
          %v1024 = vrot.slane %v1017, %v1023
          %v1026 = vmul.f32 %v935, %v1024
          %v1027 = vmul.f32 %v936, %v1024
          %v1028 = vmul.f32 %v937, %v1024
          %v1029 = vmul.f32 %v938, %v1024
          %v1030 = vmul.f32 %v939, %v1024
          %v1031 = vmul.f32 %v940, %v1024
          %v1032 = vmul.f32 %v941, %v1024
          %v1033 = vmul.f32 %v942, %v1024
          %v1034 = vmul.f32 %v943, %v1024
          %v1035 = vmul.f32 %v944, %v1024
          %v1036 = vmul.f32 %v945, %v1024
          %v1037 = vmul.f32 %v946, %v1024
          %v1038 = vmul.f32 %v947, %v1024
          %v1039 = vmul.f32 %v948, %v1024
          %v1040 = vmul.f32 %v949, %v1024
          %v1041 = vmul.f32 %v950, %v1024
          %v1043 = vlaneseq
          %v1044 = vshrl.u32 %v1043, 7
          %v1045 = vsub.s32 0, %v1044
          %v1046 = vrot.slane %v1019, %v1045
          %v1048 = vadd.f32 %v1026, %v1046
          %v1049 = vadd.f32 %v1027, %v1046
          %v1050 = vadd.f32 %v1028, %v1046
          %v1051 = vadd.f32 %v1029, %v1046
          %v1052 = vadd.f32 %v1030, %v1046
          %v1053 = vadd.f32 %v1031, %v1046
          %v1054 = vadd.f32 %v1032, %v1046
          %v1055 = vadd.f32 %v1033, %v1046
          %v1056 = vadd.f32 %v1034, %v1046
          %v1057 = vadd.f32 %v1035, %v1046
          %v1058 = vadd.f32 %v1036, %v1046
          %v1059 = vadd.f32 %v1037, %v1046
          %v1060 = vadd.f32 %v1038, %v1046
          %v1061 = vadd.f32 %v1039, %v1046
          %v1062 = vadd.f32 %v1040, %v1046
          %v1063 = vadd.f32 %v1041, %v1046
          %v1064 = vmul.f32 %v705, %v1048
          %v1065 = vmul.f32 %v709, %v1049
          %v1066 = vmul.f32 %v713, %v1050
          %v1067 = vmul.f32 %v717, %v1051
          %v1068 = vmul.f32 %v721, %v1052
          %v1069 = vmul.f32 %v725, %v1053
          %v1070 = vmul.f32 %v729, %v1054
          %v1071 = vmul.f32 %v733, %v1055
          %v1072 = vmul.f32 %v740, %v1056
          %v1073 = vmul.f32 %v744, %v1057
          %v1074 = vmul.f32 %v748, %v1058
          %v1075 = vmul.f32 %v752, %v1059
          %v1076 = vmul.f32 %v756, %v1060
          %v1077 = vmul.f32 %v760, %v1061
          %v1078 = vmul.f32 %v764, %v1062
          %v1079 = vmul.f32 %v768, %v1063
          %v1080 = vadd.f32 %v1064, %v868
          %v1081 = vadd.f32 %v1065, %v872
          %v1082 = vadd.f32 %v1066, %v876
          %v1083 = vadd.f32 %v1067, %v880
          %v1084 = vadd.f32 %v1068, %v884
          %v1085 = vadd.f32 %v1069, %v888
          %v1086 = vadd.f32 %v1070, %v892
          %v1087 = vadd.f32 %v1071, %v896
          %v1088 = vadd.f32 %v1072, %v903
          %v1089 = vadd.f32 %v1073, %v907
          %v1090 = vadd.f32 %v1074, %v911
          %v1091 = vadd.f32 %v1075, %v915
          %v1092 = vadd.f32 %v1076, %v919
          %v1093 = vadd.f32 %v1077, %v923
          %v1094 = vadd.f32 %v1078, %v927
          %v1095 = vadd.f32 %v1079, %v931
          %v1096 = vmax.f32 %v1080, 0.0
          %v1097 = vmax.f32 %v1081, 0.0
          %v1098 = vmax.f32 %v1082, 0.0
          %v1099 = vmax.f32 %v1083, 0.0
          %v1100 = vmax.f32 %v1084, 0.0
          %v1101 = vmax.f32 %v1085, 0.0
          %v1102 = vmax.f32 %v1086, 0.0
          %v1103 = vmax.f32 %v1087, 0.0
          %v1104 = vmax.f32 %v1088, 0.0
          %v1105 = vmax.f32 %v1089, 0.0
          %v1106 = vmax.f32 %v1090, 0.0
          %v1107 = vmax.f32 %v1091, 0.0
          %v1108 = vmax.f32 %v1092, 0.0
          %v1109 = vmax.f32 %v1093, 0.0
          %v1110 = vmax.f32 %v1094, 0.0
          %v1111 = vmax.f32 %v1095, 0.0
          %v1112 = vrot.slane %v1096, 7
          %v1113 = vrot.slane %v1097, 7
          %v1114 = vrot.slane %v1098, 7
          %v1115 = vrot.slane %v1099, 7
          %v1116 = vrot.slane %v1100, 7
          %v1117 = vrot.slane %v1101, 7
          %v1118 = vrot.slane %v1102, 7
          %v1119 = vrot.slane %v1103, 7
          %v1120 = vrot.slane %v1104, 7
          %v1121 = vrot.slane %v1105, 7
          %v1122 = vrot.slane %v1106, 7
          %v1123 = vrot.slane %v1107, 7
          %v1124 = vrot.slane %v1108, 7
          %v1125 = vrot.slane %v1109, 7
          %v1126 = vrot.slane %v1110, 7
          %v1127 = vrot.slane %v1111, 7
          %v1128 = vlaneseq
          %v1129 = vshrl.u32 %v1128, 7
          %vm1130 = vcmp.lt.s32.totalorder %v1129, 1
          %v1131 = vsel %vm1130, %v1126, %v1127
          %v1132 = vsel %vm1130, %v1125, %v1126
          %v1133 = vsel %vm1130, %v1124, %v1125
          %v1134 = vsel %vm1130, %v1123, %v1124
          %v1135 = vsel %vm1130, %v1122, %v1123
          %v1136 = vsel %vm1130, %v1121, %v1122
          %v1137 = vsel %vm1130, %v1120, %v1121
          %v1138 = vsel %vm1130, %v1119, %v1120
          %v1139 = vsel %vm1130, %v1118, %v1119
          %v1140 = vsel %vm1130, %v1117, %v1118
          %v1141 = vsel %vm1130, %v1116, %v1117
          %v1142 = vsel %vm1130, %v1115, %v1116
          %v1143 = vsel %vm1130, %v1114, %v1115
          %v1144 = vsel %vm1130, %v1113, %v1114
          %v1145 = vsel %vm1130, %v1112, %v1113
          %v1146 = vsel %vm1130, %v1127, %v1112
          %v1147 = vpack.c.bf16 %v1145, %v1146
          %v1148 = vpack.c.bf16 %v1143, %v1144
          %v1149 = vpack.c.bf16 %v1141, %v1142
          %v1150 = vpack.c.bf16 %v1139, %v1140
          %v1151 = vpack.c.bf16 %v1137, %v1138
          %v1152 = vpack.c.bf16 %v1135, %v1136
          %v1153 = vpack.c.bf16 %v1133, %v1134
          %v1154 = vpack.c.bf16 %v1131, %v1132
          %v1163 = vunpack.c.l.b16 %v1147
          %v1164 = vunpack.c.h.b16 %v1147
          %v1165 = vunpack.c.l.b16 %v1148
          %v1166 = vunpack.c.h.b16 %v1148
          %v1167 = vunpack.c.l.b16 %v1149
          %v1168 = vunpack.c.h.b16 %v1149
          %v1169 = vunpack.c.l.b16 %v1150
          %v1170 = vunpack.c.h.b16 %v1150
          %v1171 = vunpack.c.l.b16 %v1151
          %v1172 = vunpack.c.h.b16 %v1151
          %v1173 = vunpack.c.l.b16 %v1152
          %v1174 = vunpack.c.h.b16 %v1152
          %v1175 = vunpack.c.l.b16 %v1153
          %v1176 = vunpack.c.h.b16 %v1153
          %v1177 = vunpack.c.l.b16 %v1154
          %v1178 = vunpack.c.h.b16 %v1154
          %v1179 = vpack.c.b16 %v1163, %v1163
          %v1180 = vpack.c.b16 %v1164, %v1164
          %v1181 = vpack.c.b16 %v1165, %v1165
          %v1182 = vpack.c.b16 %v1166, %v1166
          %v1183 = vpack.c.b16 %v1167, %v1167
          %v1184 = vpack.c.b16 %v1168, %v1168
          %v1185 = vpack.c.b16 %v1169, %v1169
          %v1186 = vpack.c.b16 %v1170, %v1170
          %v1187 = vpack.c.b16 %v1171, %v1171
          %v1188 = vpack.c.b16 %v1172, %v1172
          %v1189 = vpack.c.b16 %v1173, %v1173
          %v1190 = vpack.c.b16 %v1174, %v1174
          %v1191 = vpack.c.b16 %v1175, %v1175
          %v1192 = vpack.c.b16 %v1176, %v1176
          %v1193 = vpack.c.b16 %v1177, %v1177
          %v1194 = vpack.c.b16 %v1178, %v1178
          %1211 = vst [vmem:[#allocation2] sm:$0xf] %v1179
          %1212 = vst [vmem:[#allocation2 + $0xc] sm:$0xf] %v1180
          %1213 = vst [vmem:[#allocation2 + $0x18] sm:$0xf] %v1181
          %1214 = vst [vmem:[#allocation2 + $0x24] sm:$0xf] %v1182
          %1215 = vst [vmem:[#allocation2 + $0x30] sm:$0xf] %v1183
          %1216 = vst [vmem:[#allocation2 + $0x3c] sm:$0xf] %v1184
          %1217 = vst [vmem:[#allocation2 + $0x48] sm:$0xf] %v1185
          %1218 = vst [vmem:[#allocation2 + $0x54] sm:$0xf] %v1186
          %1219 = vst [vmem:[#allocation2 + $0x60] sm:$0xf] %v1187
          %1220 = vst [vmem:[#allocation2 + $0x6c] sm:$0xf] %v1188
          %1221 = vst [vmem:[#allocation2 + $0x78] sm:$0xf] %v1189
          %1222 = vst [vmem:[#allocation2 + $0x84] sm:$0xf] %v1190
          %1223 = vst [vmem:[#allocation2 + $0x90] sm:$0xf] %v1191
          %1224 = vst [vmem:[#allocation2 + $0x9c] sm:$0xf] %v1192
          %1225 = vst [vmem:[#allocation2 + $0xa8] sm:$0xf] %v1193
          %1226 = vst [vmem:[#allocation2 + $0xb4] sm:$0xf] %v1194
          %vm1227 = vcmask 1040384
          %vm1228 = vsmask.f32 256
          %vm1229 = vmand %vm1227, %vm1228
          %v1230 = vld [vmem:[#allocation2] sm:$0x1]
          %v1231 = vsel %vm1229, 0, %v1230
          %1232 = vst [vmem:[#allocation2] sm:$0x1] %v1231
          %v1233 = vld [vmem:[#allocation2 + $0x60] sm:$0x1]
          %v1234 = vsel %vm1229, 0, %v1233
          %1235 = vst [vmem:[#allocation2 + $0x60] sm:$0x1] %v1234
          %v1236 = vpack.c.bf16 %v1097, %v1096
          %v1237 = vpack.c.bf16 %v1099, %v1098
          %v1238 = vpack.c.bf16 %v1101, %v1100
          %v1239 = vpack.c.bf16 %v1103, %v1102
          %v1240 = vpack.c.bf16 %v1105, %v1104
          %v1241 = vpack.c.bf16 %v1107, %v1106
          %v1242 = vpack.c.bf16 %v1109, %v1108
          %v1243 = vpack.c.bf16 %v1111, %v1110
          %v1252 = vunpack.c.l.b16 %v1236
          %v1253 = vunpack.c.h.b16 %v1236
          %v1254 = vunpack.c.l.b16 %v1237
          %v1255 = vunpack.c.h.b16 %v1237
          %v1256 = vunpack.c.l.b16 %v1238
          %v1257 = vunpack.c.h.b16 %v1238
          %v1258 = vunpack.c.l.b16 %v1239
          %v1259 = vunpack.c.h.b16 %v1239
          %v1260 = vunpack.c.l.b16 %v1240
          %v1261 = vunpack.c.h.b16 %v1240
          %v1262 = vunpack.c.l.b16 %v1241
          %v1263 = vunpack.c.h.b16 %v1241
          %v1264 = vunpack.c.l.b16 %v1242
          %v1265 = vunpack.c.h.b16 %v1242
          %v1266 = vunpack.c.l.b16 %v1243
          %v1267 = vunpack.c.h.b16 %v1243
          %v1268 = vpack.c.b16 %v1252, %v1252
          %v1269 = vpack.c.b16 %v1253, %v1253
          %v1270 = vpack.c.b16 %v1254, %v1254
          %v1271 = vpack.c.b16 %v1255, %v1255
          %v1272 = vpack.c.b16 %v1256, %v1256
          %v1273 = vpack.c.b16 %v1257, %v1257
          %v1274 = vpack.c.b16 %v1258, %v1258
          %v1275 = vpack.c.b16 %v1259, %v1259
          %v1276 = vpack.c.b16 %v1260, %v1260
          %v1277 = vpack.c.b16 %v1261, %v1261
          %v1278 = vpack.c.b16 %v1262, %v1262
          %v1279 = vpack.c.b16 %v1263, %v1263
          %v1280 = vpack.c.b16 %v1264, %v1264
          %v1281 = vpack.c.b16 %v1265, %v1265
          %v1282 = vpack.c.b16 %v1266, %v1266
          %v1283 = vpack.c.b16 %v1267, %v1267
          %1300 = vst [vmem:[#allocation2 + $0x4] sm:$0xf] %v1268
          %1301 = vst [vmem:[#allocation2 + $0x10] sm:$0xf] %v1269
          %1302 = vst [vmem:[#allocation2 + $0x1c] sm:$0xf] %v1270
          %1303 = vst [vmem:[#allocation2 + $0x28] sm:$0xf] %v1271
          %1304 = vst [vmem:[#allocation2 + $0x34] sm:$0xf] %v1272
          %1305 = vst [vmem:[#allocation2 + $0x40] sm:$0xf] %v1273
          %1306 = vst [vmem:[#allocation2 + $0x4c] sm:$0xf] %v1274
          %1307 = vst [vmem:[#allocation2 + $0x58] sm:$0xf] %v1275
          %1308 = vst [vmem:[#allocation2 + $0x64] sm:$0xf] %v1276
          %1309 = vst [vmem:[#allocation2 + $0x70] sm:$0xf] %v1277
          %1310 = vst [vmem:[#allocation2 + $0x7c] sm:$0xf] %v1278
          %1311 = vst [vmem:[#allocation2 + $0x88] sm:$0xf] %v1279
          %1312 = vst [vmem:[#allocation2 + $0x94] sm:$0xf] %v1280
          %1313 = vst [vmem:[#allocation2 + $0xa0] sm:$0xf] %v1281
          %1314 = vst [vmem:[#allocation2 + $0xac] sm:$0xf] %v1282
          %1315 = vst [vmem:[#allocation2 + $0xb8] sm:$0xf] %v1283
          %v1316 = vrot.slane %v1096, 1
          %v1317 = vrot.slane %v1097, 1
          %v1318 = vrot.slane %v1098, 1
          %v1319 = vrot.slane %v1099, 1
          %v1320 = vrot.slane %v1100, 1
          %v1321 = vrot.slane %v1101, 1
          %v1322 = vrot.slane %v1102, 1
          %v1323 = vrot.slane %v1103, 1
          %v1324 = vrot.slane %v1104, 1
          %v1325 = vrot.slane %v1105, 1
          %v1326 = vrot.slane %v1106, 1
          %v1327 = vrot.slane %v1107, 1
          %v1328 = vrot.slane %v1108, 1
          %v1329 = vrot.slane %v1109, 1
          %v1330 = vrot.slane %v1110, 1
          %v1331 = vrot.slane %v1111, 1
          %vm1332 = vcmp.lt.s32.totalorder %v1129, 7
          %v1333 = vsel %vm1332, %v1330, %v1331
          %v1334 = vsel %vm1332, %v1329, %v1330
          %v1335 = vsel %vm1332, %v1328, %v1329
          %v1336 = vsel %vm1332, %v1327, %v1328
          %v1337 = vsel %vm1332, %v1326, %v1327
          %v1338 = vsel %vm1332, %v1325, %v1326
          %v1339 = vsel %vm1332, %v1324, %v1325
          %v1340 = vsel %vm1332, %v1323, %v1324
          %v1341 = vsel %vm1332, %v1322, %v1323
          %v1342 = vsel %vm1332, %v1321, %v1322
          %v1343 = vsel %vm1332, %v1320, %v1321
          %v1344 = vsel %vm1332, %v1319, %v1320
          %v1345 = vsel %vm1332, %v1318, %v1319
          %v1346 = vsel %vm1332, %v1317, %v1318
          %v1347 = vsel %vm1332, %v1316, %v1317
          %v1348 = vsel %vm1332, %v1331, %v1316
          %v1349 = vpack.c.bf16 %v1346, %v1347
          %v1350 = vpack.c.bf16 %v1344, %v1345
          %v1351 = vpack.c.bf16 %v1342, %v1343
          %v1352 = vpack.c.bf16 %v1340, %v1341
          %v1353 = vpack.c.bf16 %v1338, %v1339
          %v1354 = vpack.c.bf16 %v1336, %v1337
          %v1355 = vpack.c.bf16 %v1334, %v1335
          %v1356 = vpack.c.bf16 %v1348, %v1333
          %v1365 = vunpack.c.l.b16 %v1349
          %v1366 = vunpack.c.h.b16 %v1349
          %v1367 = vunpack.c.l.b16 %v1350
          %v1368 = vunpack.c.h.b16 %v1350
          %v1369 = vunpack.c.l.b16 %v1351
          %v1370 = vunpack.c.h.b16 %v1351
          %v1371 = vunpack.c.l.b16 %v1352
          %v1372 = vunpack.c.h.b16 %v1352
          %v1373 = vunpack.c.l.b16 %v1353
          %v1374 = vunpack.c.h.b16 %v1353
          %v1375 = vunpack.c.l.b16 %v1354
          %v1376 = vunpack.c.h.b16 %v1354
          %v1377 = vunpack.c.l.b16 %v1355
          %v1378 = vunpack.c.h.b16 %v1355
          %v1379 = vunpack.c.l.b16 %v1356
          %v1380 = vunpack.c.h.b16 %v1356
          %v1381 = vpack.c.b16 %v1365, %v1365
          %v1382 = vpack.c.b16 %v1366, %v1366
          %v1383 = vpack.c.b16 %v1367, %v1367
          %v1384 = vpack.c.b16 %v1368, %v1368
          %v1385 = vpack.c.b16 %v1369, %v1369
          %v1386 = vpack.c.b16 %v1370, %v1370
          %v1387 = vpack.c.b16 %v1371, %v1371
          %v1388 = vpack.c.b16 %v1372, %v1372
          %v1389 = vpack.c.b16 %v1373, %v1373
          %v1390 = vpack.c.b16 %v1374, %v1374
          %v1391 = vpack.c.b16 %v1375, %v1375
          %v1392 = vpack.c.b16 %v1376, %v1376
          %v1393 = vpack.c.b16 %v1377, %v1377
          %v1394 = vpack.c.b16 %v1378, %v1378
          %v1395 = vpack.c.b16 %v1379, %v1379
          %v1396 = vpack.c.b16 %v1380, %v1380
          %1413 = vst [vmem:[#allocation2 + $0x8] sm:$0xf] %v1381
          %1414 = vst [vmem:[#allocation2 + $0x14] sm:$0xf] %v1382
          %1415 = vst [vmem:[#allocation2 + $0x20] sm:$0xf] %v1383
          %1416 = vst [vmem:[#allocation2 + $0x2c] sm:$0xf] %v1384
          %1417 = vst [vmem:[#allocation2 + $0x38] sm:$0xf] %v1385
          %1418 = vst [vmem:[#allocation2 + $0x44] sm:$0xf] %v1386
          %1419 = vst [vmem:[#allocation2 + $0x50] sm:$0xf] %v1387
          %1420 = vst [vmem:[#allocation2 + $0x5c] sm:$0xf] %v1388
          %1421 = vst [vmem:[#allocation2 + $0x68] sm:$0xf] %v1389
          %1422 = vst [vmem:[#allocation2 + $0x74] sm:$0xf] %v1390
          %1423 = vst [vmem:[#allocation2 + $0x80] sm:$0xf] %v1391
          %1424 = vst [vmem:[#allocation2 + $0x8c] sm:$0xf] %v1392
          %1425 = vst [vmem:[#allocation2 + $0x98] sm:$0xf] %v1393
          %1426 = vst [vmem:[#allocation2 + $0xa4] sm:$0xf] %v1394
          %1427 = vst [vmem:[#allocation2 + $0xb0] sm:$0xf] %v1395
          %1428 = vst [vmem:[#allocation2 + $0xbc] sm:$0xf] %v1396
          %vm1429 = vcmask 1043459
          %vm1430 = vsmask.f32 7950
          %vm1431 = vmand %vm1429, %vm1430
          %v1432 = vld [vmem:[#allocation2 + $0x5c] sm:$0x8]
          %v1433 = vsel %vm1431, 0, %v1432
          %1434 = vst [vmem:[#allocation2 + $0x5c] sm:$0x8] %v1433
          %v1435 = vld [vmem:[#allocation2 + $0xbc] sm:$0x8]
          %v1436 = vsel %vm1431, 0, %v1435
          %1437 = vst [vmem:[#allocation2 + $0xbc] sm:$0x8] %v1436
          %v1438 = vld [vmem:[#allocation2] sm:$0xff]
          %v1439 = vld [vmem:[#allocation2 + $0x8] sm:$0xf]
          %v1440 = vld [vmem:[#allocation2 + $0xc] sm:$0xff]
          %v1441 = vld [vmem:[#allocation2 + $0x14] sm:$0xf]
          %v1442 = vld [vmem:[#allocation2 + $0x18] sm:$0xff]
          %v1443 = vld [vmem:[#allocation2 + $0x20] sm:$0xf]
          %v1444 = vld [vmem:[#allocation2 + $0x24] sm:$0xff]
          %v1445 = vld [vmem:[#allocation2 + $0x2c] sm:$0xf]
          %v1446 = vld [vmem:[#allocation2 + $0x30] sm:$0xff]
          %v1447 = vld [vmem:[#allocation2 + $0x38] sm:$0xf]
          %v1448 = vld [vmem:[#allocation2 + $0x3c] sm:$0xff]
          %v1449 = vld [vmem:[#allocation2 + $0x44] sm:$0xf]
          %v1450 = vld [vmem:[#allocation2 + $0x48] sm:$0xff]
          %v1451 = vld [vmem:[#allocation2 + $0x50] sm:$0xf]
          %v1452 = vld [vmem:[#allocation2 + $0x54] sm:$0xff]
          %v1453 = vld [vmem:[#allocation2 + $0x5c] sm:$0xf]
          %v1454 = vld [vmem:[#allocation2 + $0x60] sm:$0xff]
          %v1455 = vld [vmem:[#allocation2 + $0x68] sm:$0xf]
          %v1456 = vld [vmem:[#allocation2 + $0x6c] sm:$0xff]
          %v1457 = vld [vmem:[#allocation2 + $0x74] sm:$0xf]
          %v1458 = vld [vmem:[#allocation2 + $0x78] sm:$0xff]
          %v1459 = vld [vmem:[#allocation2 + $0x80] sm:$0xf]
          %v1460 = vld [vmem:[#allocation2 + $0x84] sm:$0xff]
          %v1461 = vld [vmem:[#allocation2 + $0x8c] sm:$0xf]
          %v1462 = vld [vmem:[#allocation2 + $0x90] sm:$0xff]
          %v1463 = vld [vmem:[#allocation2 + $0x98] sm:$0xf]
          %v1464 = vld [vmem:[#allocation2 + $0x9c] sm:$0xff]
          %v1465 = vld [vmem:[#allocation2 + $0xa4] sm:$0xf]
          %v1466 = vld [vmem:[#allocation2 + $0xa8] sm:$0xff]
          %v1467 = vld [vmem:[#allocation2 + $0xb0] sm:$0xf]
          %v1468 = vld [vmem:[#allocation2 + $0xb4] sm:$0xff]
          %v1469 = vld [vmem:[#allocation2 + $0xbc] sm:$0xf]
          %v1470 = vld [vmem:[%s506] sm:$0xf]
          %v1471 = vld [vmem:[%s506 + $0x4] sm:$0xf]
          %v1472 = vld [vmem:[%s506 + $0x8] sm:$0xf]
          %v1473 = vld [vmem:[%s506 + $0xc] sm:$0xf]
          %v1474 = vld [vmem:[%s506 + $0x10] sm:$0xf]
          %v1475 = vld [vmem:[%s506 + $0x14] sm:$0xf]
          %v1476 = vld [vmem:[%s506 + $0x18] sm:$0xf]
          %v1477 = vld [vmem:[%s506 + $0x1c] sm:$0xf]
          %v1478 = vld [vmem:[%s506 + $0x20] sm:$0xf]
          %v1479 = vld [vmem:[%s506 + $0x24] sm:$0xf]
          %v1480 = vld [vmem:[%s506 + $0x28] sm:$0xf]
          %v1481 = vld [vmem:[%s506 + $0x2c] sm:$0xf]
          %v1482 = vld [vmem:[%s506 + $0x30] sm:$0xf]
          %v1483 = vld [vmem:[%s506 + $0x34] sm:$0xf]
          %v1484 = vld [vmem:[%s506 + $0x38] sm:$0xf]
          %v1485 = vld [vmem:[%s506 + $0x3c] sm:$0xf]
          %v1486 = vld [vmem:[%s506 + $0x40] sm:$0xf]
          %v1487 = vld [vmem:[%s506 + $0x44] sm:$0xf]
          %v1488 = vld [vmem:[%s506 + $0x48] sm:$0xf]
          %v1489 = vld [vmem:[%s506 + $0x4c] sm:$0xf]
          %v1490 = vld [vmem:[%s506 + $0x50] sm:$0xf]
          %v1491 = vld [vmem:[%s506 + $0x54] sm:$0xf]
          %v1492 = vld [vmem:[%s506 + $0x58] sm:$0xf]
          %v1493 = vld [vmem:[%s506 + $0x5c] sm:$0xf]
          %v1494 = vld [vmem:[%s506 + $0x60] sm:$0xf]
          %v1495 = vld [vmem:[%s506 + $0x64] sm:$0xf]
          %v1496 = vld [vmem:[%s506 + $0x68] sm:$0xf]
          %v1497 = vld [vmem:[%s506 + $0x6c] sm:$0xf]
          %v1498 = vld [vmem:[%s506 + $0x70] sm:$0xf]
          %v1499 = vld [vmem:[%s506 + $0x74] sm:$0xf]
          %v1500 = vld [vmem:[%s506 + $0x78] sm:$0xf]
          %v1501 = vld [vmem:[%s506 + $0x7c] sm:$0xf]
          %v1502 = vld [vmem:[%s506 + $0x80] sm:$0xf]
          %v1503 = vld [vmem:[%s506 + $0x84] sm:$0xf]
          %v1504 = vld [vmem:[%s506 + $0x88] sm:$0xf]
          %v1505 = vld [vmem:[%s506 + $0x8c] sm:$0xf]
          %v1506 = vld [vmem:[%s506 + $0x90] sm:$0xf]
          %v1507 = vld [vmem:[%s506 + $0x94] sm:$0xf]
          %v1508 = vld [vmem:[%s506 + $0x98] sm:$0xf]
          %v1509 = vld [vmem:[%s506 + $0x9c] sm:$0xf]
          %v1510 = vld [vmem:[%s506 + $0xa0] sm:$0xf]
          %v1511 = vld [vmem:[%s506 + $0xa4] sm:$0xf]
          %v1512 = vld [vmem:[%s506 + $0xa8] sm:$0xf]
          %v1513 = vld [vmem:[%s506 + $0xac] sm:$0xf]
          %v1514 = vld [vmem:[%s506 + $0xb0] sm:$0xf]
          %v1515 = vld [vmem:[%s506 + $0xb4] sm:$0xf]
          %v1516 = vld [vmem:[%s506 + $0xb8] sm:$0xf]
          %v1517 = vld [vmem:[%s506 + $0xbc] sm:$0xf]
          %v1550 = vunpack.c.l.b16 %v1438
          %v1551 = vunpack.c.h.b16 %v1438
          %v1552 = vunpack.c.l.b16 %v1439
          %v1553 = vunpack.c.l.b16 %v1440
          %v1554 = vunpack.c.h.b16 %v1440
          %v1555 = vunpack.c.l.b16 %v1441
          %v1556 = vunpack.c.l.b16 %v1442
          %v1557 = vunpack.c.h.b16 %v1442
          %v1558 = vunpack.c.l.b16 %v1443
          %v1559 = vunpack.c.l.b16 %v1444
          %v1560 = vunpack.c.h.b16 %v1444
          %v1561 = vunpack.c.l.b16 %v1445
          %v1562 = vunpack.c.l.b16 %v1446
          %v1563 = vunpack.c.h.b16 %v1446
          %v1564 = vunpack.c.l.b16 %v1447
          %v1565 = vunpack.c.l.b16 %v1448
          %v1566 = vunpack.c.h.b16 %v1448
          %v1567 = vunpack.c.l.b16 %v1449
          %v1568 = vunpack.c.l.b16 %v1450
          %v1569 = vunpack.c.h.b16 %v1450
          %v1570 = vunpack.c.l.b16 %v1451
          %v1571 = vunpack.c.l.b16 %v1452
          %v1572 = vunpack.c.h.b16 %v1452
          %v1573 = vunpack.c.l.b16 %v1453
          %v1574 = vunpack.c.l.b16 %v1454
          %v1575 = vunpack.c.h.b16 %v1454
          %v1576 = vunpack.c.l.b16 %v1455
          %v1577 = vunpack.c.l.b16 %v1456
          %v1578 = vunpack.c.h.b16 %v1456
          %v1579 = vunpack.c.l.b16 %v1457
          %v1580 = vunpack.c.l.b16 %v1458
          %v1581 = vunpack.c.h.b16 %v1458
          %v1582 = vunpack.c.l.b16 %v1459
          %v1583 = vunpack.c.l.b16 %v1460
          %v1584 = vunpack.c.h.b16 %v1460
          %v1585 = vunpack.c.l.b16 %v1461
          %v1586 = vunpack.c.l.b16 %v1462
          %v1587 = vunpack.c.h.b16 %v1462
          %v1588 = vunpack.c.l.b16 %v1463
          %v1589 = vunpack.c.l.b16 %v1464
          %v1590 = vunpack.c.h.b16 %v1464
          %v1591 = vunpack.c.l.b16 %v1465
          %v1592 = vunpack.c.l.b16 %v1466
          %v1593 = vunpack.c.h.b16 %v1466
          %v1594 = vunpack.c.l.b16 %v1467
          %v1595 = vunpack.c.l.b16 %v1468
          %v1596 = vunpack.c.h.b16 %v1468
          %v1597 = vunpack.c.l.b16 %v1469
          %v1598 = vpack.c.b16 %v1553, %v1550
          %v1599 = vpack.c.b16 %v1554, %v1551
          %v1600 = vpack.c.b16 %v1555, %v1552
          %v1601 = vpack.c.b16 %v1559, %v1556
          %v1602 = vpack.c.b16 %v1560, %v1557
          %v1603 = vpack.c.b16 %v1561, %v1558
          %v1604 = vpack.c.b16 %v1565, %v1562
          %v1605 = vpack.c.b16 %v1566, %v1563
          %v1606 = vpack.c.b16 %v1567, %v1564
          %v1607 = vpack.c.b16 %v1571, %v1568
          %v1608 = vpack.c.b16 %v1572, %v1569
          %v1609 = vpack.c.b16 %v1573, %v1570
          %v1610 = vpack.c.b16 %v1577, %v1574
          %v1611 = vpack.c.b16 %v1578, %v1575
          %v1612 = vpack.c.b16 %v1579, %v1576
          %v1613 = vpack.c.b16 %v1583, %v1580
          %v1614 = vpack.c.b16 %v1584, %v1581
          %v1615 = vpack.c.b16 %v1585, %v1582
          %v1616 = vpack.c.b16 %v1589, %v1586
          %v1617 = vpack.c.b16 %v1590, %v1587
          %v1618 = vpack.c.b16 %v1591, %v1588
          %v1619 = vpack.c.b16 %v1595, %v1592
          %v1620 = vpack.c.b16 %v1596, %v1593
          %v1621 = vpack.c.b16 %v1597, %v1594
          %v1694 = vunpack.c.l.b16 %v1470
          %v1695 = vunpack.c.l.b16 %v1471
          %v1696 = vunpack.c.l.b16 %v1472
          %v1697 = vunpack.c.l.b16 %v1473
          %v1698 = vunpack.c.l.b16 %v1474
          %v1699 = vunpack.c.l.b16 %v1475
          %v1700 = vunpack.c.l.b16 %v1476
          %v1701 = vunpack.c.l.b16 %v1477
          %v1702 = vunpack.c.l.b16 %v1478
          %v1703 = vunpack.c.l.b16 %v1479
          %v1704 = vunpack.c.l.b16 %v1480
          %v1705 = vunpack.c.l.b16 %v1481
          %v1706 = vunpack.c.l.b16 %v1482
          %v1707 = vunpack.c.l.b16 %v1483
          %v1708 = vunpack.c.l.b16 %v1484
          %v1709 = vunpack.c.l.b16 %v1485
          %v1710 = vunpack.c.l.b16 %v1486
          %v1711 = vunpack.c.l.b16 %v1487
          %v1712 = vunpack.c.l.b16 %v1488
          %v1713 = vunpack.c.l.b16 %v1489
          %v1714 = vunpack.c.l.b16 %v1490
          %v1715 = vunpack.c.l.b16 %v1491
          %v1716 = vunpack.c.l.b16 %v1492
          %v1717 = vunpack.c.l.b16 %v1493
          %v1718 = vunpack.c.l.b16 %v1494
          %v1719 = vunpack.c.l.b16 %v1495
          %v1720 = vunpack.c.l.b16 %v1496
          %v1721 = vunpack.c.l.b16 %v1497
          %v1722 = vunpack.c.l.b16 %v1498
          %v1723 = vunpack.c.l.b16 %v1499
          %v1724 = vunpack.c.l.b16 %v1500
          %v1725 = vunpack.c.l.b16 %v1501
          %v1726 = vunpack.c.l.b16 %v1502
          %v1727 = vunpack.c.l.b16 %v1503
          %v1728 = vunpack.c.l.b16 %v1504
          %v1729 = vunpack.c.l.b16 %v1505
          %v1730 = vunpack.c.l.b16 %v1506
          %v1731 = vunpack.c.l.b16 %v1507
          %v1732 = vunpack.c.l.b16 %v1508
          %v1733 = vunpack.c.l.b16 %v1509
          %v1734 = vunpack.c.l.b16 %v1510
          %v1735 = vunpack.c.l.b16 %v1511
          %v1736 = vunpack.c.l.b16 %v1512
          %v1737 = vunpack.c.l.b16 %v1513
          %v1738 = vunpack.c.l.b16 %v1514
          %v1739 = vunpack.c.l.b16 %v1515
          %v1740 = vunpack.c.l.b16 %v1516
          %v1741 = vunpack.c.l.b16 %v1517
          %v1742 = vpack.c.b16 %v1695, %v1694
          %v1743 = vpack.c.b16 %v1697, %v1696
          %v1744 = vpack.c.b16 %v1699, %v1698
          %v1745 = vpack.c.b16 %v1701, %v1700
          %v1746 = vpack.c.b16 %v1703, %v1702
          %v1747 = vpack.c.b16 %v1705, %v1704
          %v1748 = vpack.c.b16 %v1707, %v1706
          %v1749 = vpack.c.b16 %v1709, %v1708
          %v1750 = vpack.c.b16 %v1711, %v1710
          %v1751 = vpack.c.b16 %v1713, %v1712
          %v1752 = vpack.c.b16 %v1715, %v1714
          %v1753 = vpack.c.b16 %v1717, %v1716
          %v1754 = vpack.c.b16 %v1719, %v1718
          %v1755 = vpack.c.b16 %v1721, %v1720
          %v1756 = vpack.c.b16 %v1723, %v1722
          %v1757 = vpack.c.b16 %v1725, %v1724
          %v1758 = vpack.c.b16 %v1727, %v1726
          %v1759 = vpack.c.b16 %v1729, %v1728
          %v1760 = vpack.c.b16 %v1731, %v1730
          %v1761 = vpack.c.b16 %v1733, %v1732
          %v1762 = vpack.c.b16 %v1735, %v1734
          %v1763 = vpack.c.b16 %v1737, %v1736
          %v1764 = vpack.c.b16 %v1739, %v1738
          %v1765 = vpack.c.b16 %v1741, %v1740
          %1790 = vmatprep.subr.bf16.mxu0 0
          %1791 = vmatpush1.bf16.msra.mxu0 %v1749
          %1792 = vmatprep.subr.bf16.mxu0 0
          %1793 = vmatpush1.bf16.msra.mxu0 %v1748
          %1794 = vmatprep.subr.bf16.mxu0 0
          %1795 = vmatpush1.bf16.msra.mxu0 %v1747
          %1796 = vmatprep.subr.bf16.mxu0 0
          %1797 = vmatpush1.bf16.msra.mxu0 %v1746
          %1798 = vmatprep.subr.bf16.mxu0 0
          %1799 = vmatpush1.bf16.msra.mxu0 %v1745
          %1800 = vmatprep.subr.bf16.mxu0 0
          %1801 = vmatpush1.bf16.msra.mxu0 %v1744
          %1802 = vmatprep.subr.bf16.mxu0 0
          %1803 = vmatpush1.bf16.msra.mxu0 %v1743
          %1804 = vmatprep.subr.bf16.mxu0 0
          %1805 = vmatpush1.bf16.msra.mxu0 %v1742
          %1806 = vmatprep.subr.bf16.mxu0 0
          %1807 = vmatpush2.bf16.msra.mxu0 %v1757
          %1808 = vmatprep.subr.bf16.mxu0 0
          %1809 = vmatpush2.bf16.msra.mxu0 %v1756
          %1810 = vmatprep.subr.bf16.mxu0 0
          %1811 = vmatpush2.bf16.msra.mxu0 %v1755
          %1812 = vmatprep.subr.bf16.mxu0 0
          %1813 = vmatpush2.bf16.msra.mxu0 %v1754
          %1814 = vmatprep.subr.bf16.mxu0 0
          %1815 = vmatpush2.bf16.msra.mxu0 %v1753
          %1816 = vmatprep.subr.bf16.mxu0 0
          %1817 = vmatpush2.bf16.msra.mxu0 %v1752
          %1818 = vmatprep.subr.bf16.mxu0 0
          %1819 = vmatpush2.bf16.msra.mxu0 %v1751
          %1820 = vmatprep.subr.bf16.mxu0 0
          %1821 = vmatpush2.bf16.msra.mxu0 %v1750
          %1822 = vmatprep.mubr.bf16.mxu0 %v1599
          %1823 = vmatmul.mubr.bf16.gmra.mxu0 %v1598
          %v1824 = vpop.f32.mrf.mxu0
          %v1825 = vadd.f32 0.0, %v1824
          %v1826 = vpop.f32.mrf.mxu0
          %v1827 = vpop.f32.mrf.mxu0
          %v1828 = vadd.f32 0.0, %v1827
          %v1829 = vpop.f32.mrf.mxu0
          %1830 = vmatprep.mubr.bf16.mxu0 %v1602
          %1831 = vmatmul.mubr.bf16.gmra.mxu0 %v1601
          %v1832 = vpop.f32.mrf.mxu0
          %v1833 = vadd.f32 0.0, %v1832
          %v1834 = vpop.f32.mrf.mxu0
          %v1835 = vpop.f32.mrf.mxu0
          %v1836 = vadd.f32 0.0, %v1835
          %v1837 = vpop.f32.mrf.mxu0
          %1838 = vmatprep.mubr.bf16.mxu0 %v1605
          %1839 = vmatmul.mubr.bf16.gmra.mxu0 %v1604
          %v1840 = vpop.f32.mrf.mxu0
          %v1841 = vadd.f32 0.0, %v1840
          %v1842 = vpop.f32.mrf.mxu0
          %v1843 = vpop.f32.mrf.mxu0
          %v1844 = vadd.f32 0.0, %v1843
          %v1845 = vpop.f32.mrf.mxu0
          %1846 = vmatprep.mubr.bf16.mxu0 %v1608
          %1847 = vmatmul.mubr.bf16.gmra.mxu0 %v1607
          %v1848 = vpop.f32.mrf.mxu0
          %v1849 = vadd.f32 0.0, %v1848
          %v1850 = vpop.f32.mrf.mxu0
          %v1851 = vpop.f32.mrf.mxu0
          %v1852 = vadd.f32 0.0, %v1851
          %v1853 = vpop.f32.mrf.mxu0
          %1854 = vmatprep.mubr.bf16.mxu0 %v1611
          %1855 = vmatmul.mubr.bf16.gmra.mxu0 %v1610
          %v1856 = vpop.f32.mrf.mxu0
          %v1857 = vadd.f32 0.0, %v1856
          %v1858 = vpop.f32.mrf.mxu0
          %v1859 = vpop.f32.mrf.mxu0
          %v1860 = vadd.f32 0.0, %v1859
          %v1861 = vpop.f32.mrf.mxu0
          %1862 = vmatprep.mubr.bf16.mxu0 %v1614
          %1863 = vmatmul.mubr.bf16.gmra.mxu0 %v1613
          %v1864 = vpop.f32.mrf.mxu0
          %v1865 = vadd.f32 0.0, %v1864
          %v1866 = vpop.f32.mrf.mxu0
          %v1867 = vpop.f32.mrf.mxu0
          %v1868 = vadd.f32 0.0, %v1867
          %v1869 = vpop.f32.mrf.mxu0
          %1870 = vmatprep.mubr.bf16.mxu0 %v1617
          %1871 = vmatmul.mubr.bf16.gmra.mxu0 %v1616
          %v1872 = vpop.f32.mrf.mxu0
          %v1873 = vadd.f32 0.0, %v1872
          %v1874 = vpop.f32.mrf.mxu0
          %v1875 = vpop.f32.mrf.mxu0
          %v1876 = vadd.f32 0.0, %v1875
          %v1877 = vpop.f32.mrf.mxu0
          %1878 = vmatprep.mubr.bf16.mxu0 %v1620
          %1879 = vmatmul.mubr.bf16.gmra.mxu0 %v1619
          %v1880 = vpop.f32.mrf.mxu0
          %v1881 = vadd.f32 0.0, %v1880
          %v1882 = vpop.f32.mrf.mxu0
          %v1883 = vpop.f32.mrf.mxu0
          %v1884 = vadd.f32 0.0, %v1883
          %v1885 = vpop.f32.mrf.mxu0
          %1886 = vdwg.mxu0
          %1887 = vmatprep.subr.bf16.mxu0 0
          %1888 = vmatpush1.bf16.msra.mxu0 %v1765
          %1889 = vmatprep.subr.bf16.mxu0 0
          %1890 = vmatpush1.bf16.msra.mxu0 %v1764
          %1891 = vmatprep.subr.bf16.mxu0 0
          %1892 = vmatpush1.bf16.msra.mxu0 %v1763
          %1893 = vmatprep.subr.bf16.mxu0 0
          %1894 = vmatpush1.bf16.msra.mxu0 %v1762
          %1895 = vmatprep.subr.bf16.mxu0 0
          %1896 = vmatpush1.bf16.msra.mxu0 %v1761
          %1897 = vmatprep.subr.bf16.mxu0 0
          %1898 = vmatpush1.bf16.msra.mxu0 %v1760
          %1899 = vmatprep.subr.bf16.mxu0 0
          %1900 = vmatpush1.bf16.msra.mxu0 %v1759
          %1901 = vmatprep.subr.bf16.mxu0 0
          %1902 = vmatpush1.bf16.msra.mxu0 %v1758
          %1903 = vmatprep.subr.bf16.mxu0 0
          %1904 = vmatpush2.bf16.msra.mxu0 0
          %1905 = vmatprep.subr.bf16.mxu0 0
          %1906 = vmatpush2.bf16.msra.mxu0 0
          %1907 = vmatprep.subr.bf16.mxu0 0
          %1908 = vmatpush2.bf16.msra.mxu0 0
          %1909 = vmatprep.subr.bf16.mxu0 0
          %1910 = vmatpush2.bf16.msra.mxu0 0
          %1911 = vmatprep.subr.bf16.mxu0 0
          %1912 = vmatpush2.bf16.msra.mxu0 0
          %1913 = vmatprep.subr.bf16.mxu0 0
          %1914 = vmatpush2.bf16.msra.mxu0 0
          %1915 = vmatprep.subr.bf16.mxu0 0
          %1916 = vmatpush2.bf16.msra.mxu0 0
          %1917 = vmatprep.subr.bf16.mxu0 0
          %1918 = vmatpush2.bf16.msra.mxu0 0
          %1919 = vmatprep.mubr.bf16.mxu0 0
          %1920 = vmatmul.mubr.bf16.gmra.mxu0 %v1600
          %v1921 = vpop.f32.mrf.mxu0
          %v1922 = vadd.f32 %v1825, %v1921
          %v1923 = vpop.f32.mrf.mxu0
          %v1924 = vpop.f32.mrf.mxu0
          %v1925 = vadd.f32 %v1828, %v1924
          %v1926 = vpop.f32.mrf.mxu0
          %1927 = vmatprep.mubr.bf16.mxu0 0
          %1928 = vmatmul.mubr.bf16.gmra.mxu0 %v1603
          %v1929 = vpop.f32.mrf.mxu0
          %v1930 = vadd.f32 %v1833, %v1929
          %v1931 = vpop.f32.mrf.mxu0
          %v1932 = vpop.f32.mrf.mxu0
          %v1933 = vadd.f32 %v1836, %v1932
          %v1934 = vpop.f32.mrf.mxu0
          %1935 = vmatprep.mubr.bf16.mxu0 0
          %1936 = vmatmul.mubr.bf16.gmra.mxu0 %v1606
          %v1937 = vpop.f32.mrf.mxu0
          %v1938 = vadd.f32 %v1841, %v1937
          %v1939 = vpop.f32.mrf.mxu0
          %v1940 = vpop.f32.mrf.mxu0
          %v1941 = vadd.f32 %v1844, %v1940
          %v1942 = vpop.f32.mrf.mxu0
          %1943 = vmatprep.mubr.bf16.mxu0 0
          %1944 = vmatmul.mubr.bf16.gmra.mxu0 %v1609
          %v1945 = vpop.f32.mrf.mxu0
          %v1946 = vadd.f32 %v1849, %v1945
          %v1947 = vpop.f32.mrf.mxu0
          %v1948 = vpop.f32.mrf.mxu0
          %v1949 = vadd.f32 %v1852, %v1948
          %v1950 = vpop.f32.mrf.mxu0
          %1951 = vmatprep.mubr.bf16.mxu0 0
          %1952 = vmatmul.mubr.bf16.gmra.mxu0 %v1612
          %v1953 = vpop.f32.mrf.mxu0
          %v1954 = vadd.f32 %v1857, %v1953
          %v1955 = vpop.f32.mrf.mxu0
          %v1956 = vpop.f32.mrf.mxu0
          %v1957 = vadd.f32 %v1860, %v1956
          %v1958 = vpop.f32.mrf.mxu0
          %1959 = vmatprep.mubr.bf16.mxu0 0
          %1960 = vmatmul.mubr.bf16.gmra.mxu0 %v1615
          %v1961 = vpop.f32.mrf.mxu0
          %v1962 = vadd.f32 %v1865, %v1961
          %v1963 = vpop.f32.mrf.mxu0
          %v1964 = vpop.f32.mrf.mxu0
          %v1965 = vadd.f32 %v1868, %v1964
          %v1966 = vpop.f32.mrf.mxu0
          %1967 = vmatprep.mubr.bf16.mxu0 0
          %1968 = vmatmul.mubr.bf16.gmra.mxu0 %v1618
          %v1969 = vpop.f32.mrf.mxu0
          %v1970 = vadd.f32 %v1873, %v1969
          %v1971 = vpop.f32.mrf.mxu0
          %v1972 = vpop.f32.mrf.mxu0
          %v1973 = vadd.f32 %v1876, %v1972
          %v1974 = vpop.f32.mrf.mxu0
          %1975 = vmatprep.mubr.bf16.mxu0 0
          %1976 = vmatmul.mubr.bf16.gmra.mxu0 %v1621
          %v1977 = vpop.f32.mrf.mxu0
          %v1978 = vadd.f32 %v1881, %v1977
          %v1979 = vpop.f32.mrf.mxu0
          %v1980 = vpop.f32.mrf.mxu0
          %v1981 = vadd.f32 %v1884, %v1980
          %v1982 = vpop.f32.mrf.mxu0
          %1983 = vdwg.mxu0
          %v1985 = vlaneseq
          %v1986 = vshrl.u32 %v1985, 7
          %v1987 = vsub.s32 0, %v1986
          %v1988 = vrot.slane %v602, %v1987
          %v1990 = vadd.f32 %v1922, %v1988
          %v1991 = vadd.f32 %v1925, %v1988
          %v1992 = vadd.f32 %v1930, %v1988
          %v1993 = vadd.f32 %v1933, %v1988
          %v1994 = vadd.f32 %v1938, %v1988
          %v1995 = vadd.f32 %v1941, %v1988
          %v1996 = vadd.f32 %v1946, %v1988
          %v1997 = vadd.f32 %v1949, %v1988
          %v1998 = vadd.f32 %v1954, %v1988
          %v1999 = vadd.f32 %v1957, %v1988
          %v2000 = vadd.f32 %v1962, %v1988
          %v2001 = vadd.f32 %v1965, %v1988
          %v2002 = vadd.f32 %v1970, %v1988
          %v2003 = vadd.f32 %v1973, %v1988
          %v2004 = vadd.f32 %v1978, %v1988
          %v2005 = vadd.f32 %v1981, %v1988
          %v2006 = vadd.f32 %v1990, %v1991
          %v2007 = vadd.f32 %v2006, %v1992
          %v2008 = vadd.f32 %v2007, %v1993
          %v2009 = vadd.f32 %v2008, %v1994
          %v2010 = vadd.f32 %v2009, %v1995
          %v2011 = vadd.f32 %v2010, %v1996
          %v2012 = vadd.f32 %v2011, %v1997
          %v2013 = vadd.f32 %v2012, %v1998
          %v2014 = vadd.f32 %v2013, %v1999
          %v2015 = vadd.f32 %v2014, %v2000
          %v2016 = vadd.f32 %v2015, %v2001
          %v2017 = vadd.f32 %v2016, %v2002
          %v2018 = vadd.f32 %v2017, %v2003
          %v2019 = vadd.f32 %v2018, %v2004
          %v2020 = vadd.f32 %v2019, %v2005
          %v2021 = vrot.slane %v2020, 4
          %v2022 = vadd.f32 %v2020, %v2021
          %v2023 = vrot.slane %v2022, 2
          %v2024 = vadd.f32 %v2022, %v2023
          %v2025 = vrot.slane %v2024, 1
          %v2026 = vadd.f32 %v2024, %v2025
          %v2027 = vmul.f32 %v2026, %v972
          %v2028 = vmul.f32 %v1990, %v1990
          %v2029 = vmul.f32 %v1991, %v1991
          %v2030 = vmul.f32 %v1992, %v1992
          %v2031 = vmul.f32 %v1993, %v1993
          %v2032 = vmul.f32 %v1994, %v1994
          %v2033 = vmul.f32 %v1995, %v1995
          %v2034 = vmul.f32 %v1996, %v1996
          %v2035 = vmul.f32 %v1997, %v1997
          %v2036 = vmul.f32 %v1998, %v1998
          %v2037 = vmul.f32 %v1999, %v1999
          %v2038 = vmul.f32 %v2000, %v2000
          %v2039 = vmul.f32 %v2001, %v2001
          %v2040 = vmul.f32 %v2002, %v2002
          %v2041 = vmul.f32 %v2003, %v2003
          %v2042 = vmul.f32 %v2004, %v2004
          %v2043 = vmul.f32 %v2005, %v2005
          %v2044 = vadd.f32 %v2028, %v2029
          %v2045 = vadd.f32 %v2044, %v2030
          %v2046 = vadd.f32 %v2045, %v2031
          %v2047 = vadd.f32 %v2046, %v2032
          %v2048 = vadd.f32 %v2047, %v2033
          %v2049 = vadd.f32 %v2048, %v2034
          %v2050 = vadd.f32 %v2049, %v2035
          %v2051 = vadd.f32 %v2050, %v2036
          %v2052 = vadd.f32 %v2051, %v2037
          %v2053 = vadd.f32 %v2052, %v2038
          %v2054 = vadd.f32 %v2053, %v2039
          %v2055 = vadd.f32 %v2054, %v2040
          %v2056 = vadd.f32 %v2055, %v2041
          %v2057 = vadd.f32 %v2056, %v2042
          %v2058 = vadd.f32 %v2057, %v2043
          %v2059 = vrot.slane %v2058, 4
          %v2060 = vadd.f32 %v2058, %v2059
          %v2061 = vrot.slane %v2060, 2
          %v2062 = vadd.f32 %v2060, %v2061
          %v2063 = vrot.slane %v2062, 1
          %v2064 = vadd.f32 %v2062, %v2063
          %v2065 = vmul.f32 %v2064, %v972
          %v2066 = vmul.f32 %v2027, %v2027
          %v2067 = vsub.f32 %v2065, %v2066
          %v2068 = vmax.f32 %v2067, 0.0
          %v2069 = vadd.f32 %v2068, 1e-05
          %v2070 = vrsqrt.pop %v2069
          %v2071 = vmul.f32 %v600, %v2070
          %v2072 = vmul.f32 %v2027, %v2071
          %v2073 = vsub.f32 %v601, %v2072
          %v2075 = vlaneseq
          %v2076 = vshrl.u32 %v2075, 7
          %v2077 = vsub.s32 0, %v2076
          %v2078 = vrot.slane %v2071, %v2077
          %v2080 = vmul.f32 %v1990, %v2078
          %v2081 = vmul.f32 %v1991, %v2078
          %v2082 = vmul.f32 %v1992, %v2078
          %v2083 = vmul.f32 %v1993, %v2078
          %v2084 = vmul.f32 %v1994, %v2078
          %v2085 = vmul.f32 %v1995, %v2078
          %v2086 = vmul.f32 %v1996, %v2078
          %v2087 = vmul.f32 %v1997, %v2078
          %v2088 = vmul.f32 %v1998, %v2078
          %v2089 = vmul.f32 %v1999, %v2078
          %v2090 = vmul.f32 %v2000, %v2078
          %v2091 = vmul.f32 %v2001, %v2078
          %v2092 = vmul.f32 %v2002, %v2078
          %v2093 = vmul.f32 %v2003, %v2078
          %v2094 = vmul.f32 %v2004, %v2078
          %v2095 = vmul.f32 %v2005, %v2078
          %v2097 = vlaneseq
          %v2098 = vshrl.u32 %v2097, 7
          %v2099 = vsub.s32 0, %v2098
          %v2100 = vrot.slane %v2073, %v2099
          %v2102 = vadd.f32 %v2080, %v2100
          %v2103 = vadd.f32 %v2081, %v2100
          %v2104 = vadd.f32 %v2082, %v2100
          %v2105 = vadd.f32 %v2083, %v2100
          %v2106 = vadd.f32 %v2084, %v2100
          %v2107 = vadd.f32 %v2085, %v2100
          %v2108 = vadd.f32 %v2086, %v2100
          %v2109 = vadd.f32 %v2087, %v2100
          %v2110 = vadd.f32 %v2088, %v2100
          %v2111 = vadd.f32 %v2089, %v2100
          %v2112 = vadd.f32 %v2090, %v2100
          %v2113 = vadd.f32 %v2091, %v2100
          %v2114 = vadd.f32 %v2092, %v2100
          %v2115 = vadd.f32 %v2093, %v2100
          %v2116 = vadd.f32 %v2094, %v2100
          %v2117 = vadd.f32 %v2095, %v2100
          %v2118 = vmul.f32 %v705, %v2102
          %v2119 = vmul.f32 %v709, %v2103
          %v2120 = vmul.f32 %v713, %v2104
          %v2121 = vmul.f32 %v717, %v2105
          %v2122 = vmul.f32 %v721, %v2106
          %v2123 = vmul.f32 %v725, %v2107
          %v2124 = vmul.f32 %v729, %v2108
          %v2125 = vmul.f32 %v733, %v2109
          %v2126 = vmul.f32 %v740, %v2110
          %v2127 = vmul.f32 %v744, %v2111
          %v2128 = vmul.f32 %v748, %v2112
          %v2129 = vmul.f32 %v752, %v2113
          %v2130 = vmul.f32 %v756, %v2114
          %v2131 = vmul.f32 %v760, %v2115
          %v2132 = vmul.f32 %v764, %v2116
          %v2133 = vmul.f32 %v768, %v2117
          %v2134 = vadd.f32 %v2118, %v868
          %v2135 = vadd.f32 %v2119, %v872
          %v2136 = vadd.f32 %v2120, %v876
          %v2137 = vadd.f32 %v2121, %v880
          %v2138 = vadd.f32 %v2122, %v884
          %v2139 = vadd.f32 %v2123, %v888
          %v2140 = vadd.f32 %v2124, %v892
          %v2141 = vadd.f32 %v2125, %v896
          %v2142 = vadd.f32 %v2126, %v903
          %v2143 = vadd.f32 %v2127, %v907
          %v2144 = vadd.f32 %v2128, %v911
          %v2145 = vadd.f32 %v2129, %v915
          %v2146 = vadd.f32 %v2130, %v919
          %v2147 = vadd.f32 %v2131, %v923
          %v2148 = vadd.f32 %v2132, %v927
          %v2149 = vadd.f32 %v2133, %v931
          %v2150 = vmax.f32 %v2134, 0.0
          %v2151 = vmax.f32 %v2135, 0.0
          %v2152 = vmax.f32 %v2136, 0.0
          %v2153 = vmax.f32 %v2137, 0.0
          %v2154 = vmax.f32 %v2138, 0.0
          %v2155 = vmax.f32 %v2139, 0.0
          %v2156 = vmax.f32 %v2140, 0.0
          %v2157 = vmax.f32 %v2141, 0.0
          %v2158 = vmax.f32 %v2142, 0.0
          %v2159 = vmax.f32 %v2143, 0.0
          %v2160 = vmax.f32 %v2144, 0.0
          %v2161 = vmax.f32 %v2145, 0.0
          %v2162 = vmax.f32 %v2146, 0.0
          %v2163 = vmax.f32 %v2147, 0.0
          %v2164 = vmax.f32 %v2148, 0.0
          %v2165 = vmax.f32 %v2149, 0.0
          %v2166 = vrot.slane %v2150, 6
          %v2167 = vrot.slane %v2151, 6
          %v2168 = vrot.slane %v2152, 6
          %v2169 = vrot.slane %v2153, 6
          %v2170 = vrot.slane %v2154, 6
          %v2171 = vrot.slane %v2155, 6
          %v2172 = vrot.slane %v2156, 6
          %v2173 = vrot.slane %v2157, 6
          %v2174 = vrot.slane %v2158, 6
          %v2175 = vrot.slane %v2159, 6
          %v2176 = vrot.slane %v2160, 6
          %v2177 = vrot.slane %v2161, 6
          %v2178 = vrot.slane %v2162, 6
          %v2179 = vrot.slane %v2163, 6
          %v2180 = vrot.slane %v2164, 6
          %v2181 = vrot.slane %v2165, 6
          %vm2182 = vcmp.lt.s32.totalorder %v1129, 2
          %v2183 = vsel %vm2182, %v2180, %v2181
          %v2184 = vsel %vm2182, %v2179, %v2180
          %v2185 = vsel %vm2182, %v2178, %v2179
          %v2186 = vsel %vm2182, %v2177, %v2178
          %v2187 = vsel %vm2182, %v2176, %v2177
          %v2188 = vsel %vm2182, %v2175, %v2176
          %v2189 = vsel %vm2182, %v2174, %v2175
          %v2190 = vsel %vm2182, %v2173, %v2174
          %v2191 = vsel %vm2182, %v2172, %v2173
          %v2192 = vsel %vm2182, %v2171, %v2172
          %v2193 = vsel %vm2182, %v2170, %v2171
          %v2194 = vsel %vm2182, %v2169, %v2170
          %v2195 = vsel %vm2182, %v2168, %v2169
          %v2196 = vsel %vm2182, %v2167, %v2168
          %v2197 = vsel %vm2182, %v2166, %v2167
          %v2198 = vsel %vm2182, %v2181, %v2166
          %v2199 = vpack.c.bf16 %v2197, %v2198
          %v2200 = vpack.c.bf16 %v2195, %v2196
          %v2201 = vpack.c.bf16 %v2193, %v2194
          %v2202 = vpack.c.bf16 %v2191, %v2192
          %v2203 = vpack.c.bf16 %v2189, %v2190
          %v2204 = vpack.c.bf16 %v2187, %v2188
          %v2205 = vpack.c.bf16 %v2185, %v2186
          %v2206 = vpack.c.bf16 %v2183, %v2184
          %v2215 = vunpack.c.l.b16 %v2199
          %v2216 = vunpack.c.h.b16 %v2199
          %v2217 = vunpack.c.l.b16 %v2200
          %v2218 = vunpack.c.h.b16 %v2200
          %v2219 = vunpack.c.l.b16 %v2201
          %v2220 = vunpack.c.h.b16 %v2201
          %v2221 = vunpack.c.l.b16 %v2202
          %v2222 = vunpack.c.h.b16 %v2202
          %v2223 = vunpack.c.l.b16 %v2203
          %v2224 = vunpack.c.h.b16 %v2203
          %v2225 = vunpack.c.l.b16 %v2204
          %v2226 = vunpack.c.h.b16 %v2204
          %v2227 = vunpack.c.l.b16 %v2205
          %v2228 = vunpack.c.h.b16 %v2205
          %v2229 = vunpack.c.l.b16 %v2206
          %v2230 = vunpack.c.h.b16 %v2206
          %v2231 = vpack.c.b16 %v2215, %v2215
          %v2232 = vpack.c.b16 %v2216, %v2216
          %v2233 = vpack.c.b16 %v2217, %v2217
          %v2234 = vpack.c.b16 %v2218, %v2218
          %v2235 = vpack.c.b16 %v2219, %v2219
          %v2236 = vpack.c.b16 %v2220, %v2220
          %v2237 = vpack.c.b16 %v2221, %v2221
          %v2238 = vpack.c.b16 %v2222, %v2222
          %v2239 = vpack.c.b16 %v2223, %v2223
          %v2240 = vpack.c.b16 %v2224, %v2224
          %v2241 = vpack.c.b16 %v2225, %v2225
          %v2242 = vpack.c.b16 %v2226, %v2226
          %v2243 = vpack.c.b16 %v2227, %v2227
          %v2244 = vpack.c.b16 %v2228, %v2228
          %v2245 = vpack.c.b16 %v2229, %v2229
          %v2246 = vpack.c.b16 %v2230, %v2230
          %2263 = vst [vmem:[#allocation2] sm:$0xf] %v2231
          %2264 = vst [vmem:[#allocation2 + $0xc] sm:$0xf] %v2232
          %2265 = vst [vmem:[#allocation2 + $0x18] sm:$0xf] %v2233
          %2266 = vst [vmem:[#allocation2 + $0x24] sm:$0xf] %v2234
          %2267 = vst [vmem:[#allocation2 + $0x30] sm:$0xf] %v2235
          %2268 = vst [vmem:[#allocation2 + $0x3c] sm:$0xf] %v2236
          %2269 = vst [vmem:[#allocation2 + $0x48] sm:$0xf] %v2237
          %2270 = vst [vmem:[#allocation2 + $0x54] sm:$0xf] %v2238
          %2271 = vst [vmem:[#allocation2 + $0x60] sm:$0xf] %v2239
          %2272 = vst [vmem:[#allocation2 + $0x6c] sm:$0xf] %v2240
          %2273 = vst [vmem:[#allocation2 + $0x78] sm:$0xf] %v2241
          %2274 = vst [vmem:[#allocation2 + $0x84] sm:$0xf] %v2242
          %2275 = vst [vmem:[#allocation2 + $0x90] sm:$0xf] %v2243
          %2276 = vst [vmem:[#allocation2 + $0x9c] sm:$0xf] %v2244
          %2277 = vst [vmem:[#allocation2 + $0xa8] sm:$0xf] %v2245
          %2278 = vst [vmem:[#allocation2 + $0xb4] sm:$0xf] %v2246
          %2279 = vst [vmem:[#allocation2] sm:$0x1] 0
          %2280 = vst [vmem:[#allocation2 + $0x60] sm:$0x1] 0
          %v2281 = vpack.c.bf16 %v2151, %v2150
          %v2282 = vpack.c.bf16 %v2153, %v2152
          %v2283 = vpack.c.bf16 %v2155, %v2154
          %v2284 = vpack.c.bf16 %v2157, %v2156
          %v2285 = vpack.c.bf16 %v2159, %v2158
          %v2286 = vpack.c.bf16 %v2161, %v2160
          %v2287 = vpack.c.bf16 %v2163, %v2162
          %v2288 = vpack.c.bf16 %v2165, %v2164
          %v2297 = vunpack.c.l.b16 %v2281
          %v2298 = vunpack.c.h.b16 %v2281
          %v2299 = vunpack.c.l.b16 %v2282
          %v2300 = vunpack.c.h.b16 %v2282
          %v2301 = vunpack.c.l.b16 %v2283
          %v2302 = vunpack.c.h.b16 %v2283
          %v2303 = vunpack.c.l.b16 %v2284
          %v2304 = vunpack.c.h.b16 %v2284
          %v2305 = vunpack.c.l.b16 %v2285
          %v2306 = vunpack.c.h.b16 %v2285
          %v2307 = vunpack.c.l.b16 %v2286
          %v2308 = vunpack.c.h.b16 %v2286
          %v2309 = vunpack.c.l.b16 %v2287
          %v2310 = vunpack.c.h.b16 %v2287
          %v2311 = vunpack.c.l.b16 %v2288
          %v2312 = vunpack.c.h.b16 %v2288
          %v2313 = vpack.c.b16 %v2297, %v2297
          %v2314 = vpack.c.b16 %v2298, %v2298
          %v2315 = vpack.c.b16 %v2299, %v2299
          %v2316 = vpack.c.b16 %v2300, %v2300
          %v2317 = vpack.c.b16 %v2301, %v2301
          %v2318 = vpack.c.b16 %v2302, %v2302
          %v2319 = vpack.c.b16 %v2303, %v2303
          %v2320 = vpack.c.b16 %v2304, %v2304
          %v2321 = vpack.c.b16 %v2305, %v2305
          %v2322 = vpack.c.b16 %v2306, %v2306
          %v2323 = vpack.c.b16 %v2307, %v2307
          %v2324 = vpack.c.b16 %v2308, %v2308
          %v2325 = vpack.c.b16 %v2309, %v2309
          %v2326 = vpack.c.b16 %v2310, %v2310
          %v2327 = vpack.c.b16 %v2311, %v2311
          %v2328 = vpack.c.b16 %v2312, %v2312
          %2345 = vst [vmem:[#allocation2 + $0x4] sm:$0xf] %v2313
          %2346 = vst [vmem:[#allocation2 + $0x10] sm:$0xf] %v2314
          %2347 = vst [vmem:[#allocation2 + $0x1c] sm:$0xf] %v2315
          %2348 = vst [vmem:[#allocation2 + $0x28] sm:$0xf] %v2316
          %2349 = vst [vmem:[#allocation2 + $0x34] sm:$0xf] %v2317
          %2350 = vst [vmem:[#allocation2 + $0x40] sm:$0xf] %v2318
          %2351 = vst [vmem:[#allocation2 + $0x4c] sm:$0xf] %v2319
          %2352 = vst [vmem:[#allocation2 + $0x58] sm:$0xf] %v2320
          %2353 = vst [vmem:[#allocation2 + $0x64] sm:$0xf] %v2321
          %2354 = vst [vmem:[#allocation2 + $0x70] sm:$0xf] %v2322
          %2355 = vst [vmem:[#allocation2 + $0x7c] sm:$0xf] %v2323
          %2356 = vst [vmem:[#allocation2 + $0x88] sm:$0xf] %v2324
          %2357 = vst [vmem:[#allocation2 + $0x94] sm:$0xf] %v2325
          %2358 = vst [vmem:[#allocation2 + $0xa0] sm:$0xf] %v2326
          %2359 = vst [vmem:[#allocation2 + $0xac] sm:$0xf] %v2327
          %2360 = vst [vmem:[#allocation2 + $0xb8] sm:$0xf] %v2328
          %v2361 = vrot.slane %v2150, 2
          %v2362 = vrot.slane %v2151, 2
          %v2363 = vrot.slane %v2152, 2
          %v2364 = vrot.slane %v2153, 2
          %v2365 = vrot.slane %v2154, 2
          %v2366 = vrot.slane %v2155, 2
          %v2367 = vrot.slane %v2156, 2
          %v2368 = vrot.slane %v2157, 2
          %v2369 = vrot.slane %v2158, 2
          %v2370 = vrot.slane %v2159, 2
          %v2371 = vrot.slane %v2160, 2
          %v2372 = vrot.slane %v2161, 2
          %v2373 = vrot.slane %v2162, 2
          %v2374 = vrot.slane %v2163, 2
          %v2375 = vrot.slane %v2164, 2
          %v2376 = vrot.slane %v2165, 2
          %vm2377 = vcmp.lt.s32.totalorder %v1129, 6
          %v2378 = vsel %vm2377, %v2375, %v2376
          %v2379 = vsel %vm2377, %v2374, %v2375
          %v2380 = vsel %vm2377, %v2373, %v2374
          %v2381 = vsel %vm2377, %v2372, %v2373
          %v2382 = vsel %vm2377, %v2371, %v2372
          %v2383 = vsel %vm2377, %v2370, %v2371
          %v2384 = vsel %vm2377, %v2369, %v2370
          %v2385 = vsel %vm2377, %v2368, %v2369
          %v2386 = vsel %vm2377, %v2367, %v2368
          %v2387 = vsel %vm2377, %v2366, %v2367
          %v2388 = vsel %vm2377, %v2365, %v2366
          %v2389 = vsel %vm2377, %v2364, %v2365
          %v2390 = vsel %vm2377, %v2363, %v2364
          %v2391 = vsel %vm2377, %v2362, %v2363
          %v2392 = vsel %vm2377, %v2361, %v2362
          %v2393 = vsel %vm2377, %v2376, %v2361
          %v2394 = vpack.c.bf16 %v2391, %v2392
          %v2395 = vpack.c.bf16 %v2389, %v2390
          %v2396 = vpack.c.bf16 %v2387, %v2388
          %v2397 = vpack.c.bf16 %v2385, %v2386
          %v2398 = vpack.c.bf16 %v2383, %v2384
          %v2399 = vpack.c.bf16 %v2381, %v2382
          %v2400 = vpack.c.bf16 %v2379, %v2380
          %v2401 = vpack.c.bf16 %v2393, %v2378
          %v2410 = vunpack.c.l.b16 %v2394
          %v2411 = vunpack.c.h.b16 %v2394
          %v2412 = vunpack.c.l.b16 %v2395
          %v2413 = vunpack.c.h.b16 %v2395
          %v2414 = vunpack.c.l.b16 %v2396
          %v2415 = vunpack.c.h.b16 %v2396
          %v2416 = vunpack.c.l.b16 %v2397
          %v2417 = vunpack.c.h.b16 %v2397
          %v2418 = vunpack.c.l.b16 %v2398
          %v2419 = vunpack.c.h.b16 %v2398
          %v2420 = vunpack.c.l.b16 %v2399
          %v2421 = vunpack.c.h.b16 %v2399
          %v2422 = vunpack.c.l.b16 %v2400
          %v2423 = vunpack.c.h.b16 %v2400
          %v2424 = vunpack.c.l.b16 %v2401
          %v2425 = vunpack.c.h.b16 %v2401
          %v2426 = vpack.c.b16 %v2410, %v2410
          %v2427 = vpack.c.b16 %v2411, %v2411
          %v2428 = vpack.c.b16 %v2412, %v2412
          %v2429 = vpack.c.b16 %v2413, %v2413
          %v2430 = vpack.c.b16 %v2414, %v2414
          %v2431 = vpack.c.b16 %v2415, %v2415
          %v2432 = vpack.c.b16 %v2416, %v2416
          %v2433 = vpack.c.b16 %v2417, %v2417
          %v2434 = vpack.c.b16 %v2418, %v2418
          %v2435 = vpack.c.b16 %v2419, %v2419
          %v2436 = vpack.c.b16 %v2420, %v2420
          %v2437 = vpack.c.b16 %v2421, %v2421
          %v2438 = vpack.c.b16 %v2422, %v2422
          %v2439 = vpack.c.b16 %v2423, %v2423
          %v2440 = vpack.c.b16 %v2424, %v2424
          %v2441 = vpack.c.b16 %v2425, %v2425
          %2458 = vst [vmem:[#allocation2 + $0x8] sm:$0xf] %v2426
          %2459 = vst [vmem:[#allocation2 + $0x14] sm:$0xf] %v2427
          %2460 = vst [vmem:[#allocation2 + $0x20] sm:$0xf] %v2428
          %2461 = vst [vmem:[#allocation2 + $0x2c] sm:$0xf] %v2429
          %2462 = vst [vmem:[#allocation2 + $0x38] sm:$0xf] %v2430
          %2463 = vst [vmem:[#allocation2 + $0x44] sm:$0xf] %v2431
          %2464 = vst [vmem:[#allocation2 + $0x50] sm:$0xf] %v2432
          %2465 = vst [vmem:[#allocation2 + $0x5c] sm:$0xf] %v2433
          %2466 = vst [vmem:[#allocation2 + $0x68] sm:$0xf] %v2434
          %2467 = vst [vmem:[#allocation2 + $0x74] sm:$0xf] %v2435
          %2468 = vst [vmem:[#allocation2 + $0x80] sm:$0xf] %v2436
          %2469 = vst [vmem:[#allocation2 + $0x8c] sm:$0xf] %v2437
          %2470 = vst [vmem:[#allocation2 + $0x98] sm:$0xf] %v2438
          %2471 = vst [vmem:[#allocation2 + $0xa4] sm:$0xf] %v2439
          %2472 = vst [vmem:[#allocation2 + $0xb0] sm:$0xf] %v2440
          %2473 = vst [vmem:[#allocation2 + $0xbc] sm:$0xf] %v2441
          %2474 = vst [vmem:[#allocation2 + $0x5c] sm:$0x8] 0
          %2475 = vst [vmem:[#allocation2 + $0xbc] sm:$0x8] 0
          %v2476 = vld [vmem:[#allocation2] sm:$0xff]
          %v2477 = vld [vmem:[#allocation2 + $0x8] sm:$0xf]
          %v2478 = vld [vmem:[#allocation2 + $0xc] sm:$0xff]
          %v2479 = vld [vmem:[#allocation2 + $0x14] sm:$0xf]
          %v2480 = vld [vmem:[#allocation2 + $0x18] sm:$0xff]
          %v2481 = vld [vmem:[#allocation2 + $0x20] sm:$0xf]
          %v2482 = vld [vmem:[#allocation2 + $0x24] sm:$0xff]
          %v2483 = vld [vmem:[#allocation2 + $0x2c] sm:$0xf]
          %v2484 = vld [vmem:[#allocation2 + $0x30] sm:$0xff]
          %v2485 = vld [vmem:[#allocation2 + $0x38] sm:$0xf]
          %v2486 = vld [vmem:[#allocation2 + $0x3c] sm:$0xff]
          %v2487 = vld [vmem:[#allocation2 + $0x44] sm:$0xf]
          %v2488 = vld [vmem:[#allocation2 + $0x48] sm:$0xff]
          %v2489 = vld [vmem:[#allocation2 + $0x50] sm:$0xf]
          %v2490 = vld [vmem:[#allocation2 + $0x54] sm:$0xff]
          %v2491 = vld [vmem:[#allocation2 + $0x5c] sm:$0xf]
          %v2492 = vld [vmem:[#allocation2 + $0x60] sm:$0xff]
          %v2493 = vld [vmem:[#allocation2 + $0x68] sm:$0xf]
          %v2494 = vld [vmem:[#allocation2 + $0x6c] sm:$0xff]
          %v2495 = vld [vmem:[#allocation2 + $0x74] sm:$0xf]
          %v2496 = vld [vmem:[#allocation2 + $0x78] sm:$0xff]
          %v2497 = vld [vmem:[#allocation2 + $0x80] sm:$0xf]
          %v2498 = vld [vmem:[#allocation2 + $0x84] sm:$0xff]
          %v2499 = vld [vmem:[#allocation2 + $0x8c] sm:$0xf]
          %v2500 = vld [vmem:[#allocation2 + $0x90] sm:$0xff]
          %v2501 = vld [vmem:[#allocation2 + $0x98] sm:$0xf]
          %v2502 = vld [vmem:[#allocation2 + $0x9c] sm:$0xff]
          %v2503 = vld [vmem:[#allocation2 + $0xa4] sm:$0xf]
          %v2504 = vld [vmem:[#allocation2 + $0xa8] sm:$0xff]
          %v2505 = vld [vmem:[#allocation2 + $0xb0] sm:$0xf]
          %v2506 = vld [vmem:[#allocation2 + $0xb4] sm:$0xff]
          %v2507 = vld [vmem:[#allocation2 + $0xbc] sm:$0xf]
          %v2508 = vld [vmem:[%s514] sm:$0xf]
          %v2509 = vld [vmem:[%s514 + $0x4] sm:$0xf]
          %v2510 = vld [vmem:[%s514 + $0x8] sm:$0xf]
          %v2511 = vld [vmem:[%s514 + $0xc] sm:$0xf]
          %v2512 = vld [vmem:[%s514 + $0x10] sm:$0xf]
          %v2513 = vld [vmem:[%s514 + $0x14] sm:$0xf]
          %v2514 = vld [vmem:[%s514 + $0x18] sm:$0xf]
          %v2515 = vld [vmem:[%s514 + $0x1c] sm:$0xf]
          %v2516 = vld [vmem:[%s514 + $0x20] sm:$0xf]
          %v2517 = vld [vmem:[%s514 + $0x24] sm:$0xf]
          %v2518 = vld [vmem:[%s514 + $0x28] sm:$0xf]
          %v2519 = vld [vmem:[%s514 + $0x2c] sm:$0xf]
          %v2520 = vld [vmem:[%s514 + $0x30] sm:$0xf]
          %v2521 = vld [vmem:[%s514 + $0x34] sm:$0xf]
          %v2522 = vld [vmem:[%s514 + $0x38] sm:$0xf]
          %v2523 = vld [vmem:[%s514 + $0x3c] sm:$0xf]
          %v2524 = vld [vmem:[%s514 + $0x40] sm:$0xf]
          %v2525 = vld [vmem:[%s514 + $0x44] sm:$0xf]
          %v2526 = vld [vmem:[%s514 + $0x48] sm:$0xf]
          %v2527 = vld [vmem:[%s514 + $0x4c] sm:$0xf]
          %v2528 = vld [vmem:[%s514 + $0x50] sm:$0xf]
          %v2529 = vld [vmem:[%s514 + $0x54] sm:$0xf]
          %v2530 = vld [vmem:[%s514 + $0x58] sm:$0xf]
          %v2531 = vld [vmem:[%s514 + $0x5c] sm:$0xf]
          %v2532 = vld [vmem:[%s514 + $0x60] sm:$0xf]
          %v2533 = vld [vmem:[%s514 + $0x64] sm:$0xf]
          %v2534 = vld [vmem:[%s514 + $0x68] sm:$0xf]
          %v2535 = vld [vmem:[%s514 + $0x6c] sm:$0xf]
          %v2536 = vld [vmem:[%s514 + $0x70] sm:$0xf]
          %v2537 = vld [vmem:[%s514 + $0x74] sm:$0xf]
          %v2538 = vld [vmem:[%s514 + $0x78] sm:$0xf]
          %v2539 = vld [vmem:[%s514 + $0x7c] sm:$0xf]
          %v2540 = vld [vmem:[%s514 + $0x80] sm:$0xf]
          %v2541 = vld [vmem:[%s514 + $0x84] sm:$0xf]
          %v2542 = vld [vmem:[%s514 + $0x88] sm:$0xf]
          %v2543 = vld [vmem:[%s514 + $0x8c] sm:$0xf]
          %v2544 = vld [vmem:[%s514 + $0x90] sm:$0xf]
          %v2545 = vld [vmem:[%s514 + $0x94] sm:$0xf]
          %v2546 = vld [vmem:[%s514 + $0x98] sm:$0xf]
          %v2547 = vld [vmem:[%s514 + $0x9c] sm:$0xf]
          %v2548 = vld [vmem:[%s514 + $0xa0] sm:$0xf]
          %v2549 = vld [vmem:[%s514 + $0xa4] sm:$0xf]
          %v2550 = vld [vmem:[%s514 + $0xa8] sm:$0xf]
          %v2551 = vld [vmem:[%s514 + $0xac] sm:$0xf]
          %v2552 = vld [vmem:[%s514 + $0xb0] sm:$0xf]
          %v2553 = vld [vmem:[%s514 + $0xb4] sm:$0xf]
          %v2554 = vld [vmem:[%s514 + $0xb8] sm:$0xf]
          %v2555 = vld [vmem:[%s514 + $0xbc] sm:$0xf]
          %v2588 = vunpack.c.l.b16 %v2476
          %v2589 = vunpack.c.h.b16 %v2476
          %v2590 = vunpack.c.l.b16 %v2477
          %v2591 = vunpack.c.l.b16 %v2478
          %v2592 = vunpack.c.h.b16 %v2478
          %v2593 = vunpack.c.l.b16 %v2479
          %v2594 = vunpack.c.l.b16 %v2480
          %v2595 = vunpack.c.h.b16 %v2480
          %v2596 = vunpack.c.l.b16 %v2481
          %v2597 = vunpack.c.l.b16 %v2482
          %v2598 = vunpack.c.h.b16 %v2482
          %v2599 = vunpack.c.l.b16 %v2483
          %v2600 = vunpack.c.l.b16 %v2484
          %v2601 = vunpack.c.h.b16 %v2484
          %v2602 = vunpack.c.l.b16 %v2485
          %v2603 = vunpack.c.l.b16 %v2486
          %v2604 = vunpack.c.h.b16 %v2486
          %v2605 = vunpack.c.l.b16 %v2487
          %v2606 = vunpack.c.l.b16 %v2488
          %v2607 = vunpack.c.h.b16 %v2488
          %v2608 = vunpack.c.l.b16 %v2489
          %v2609 = vunpack.c.l.b16 %v2490
          %v2610 = vunpack.c.h.b16 %v2490
          %v2611 = vunpack.c.l.b16 %v2491
          %v2612 = vunpack.c.l.b16 %v2492
          %v2613 = vunpack.c.h.b16 %v2492
          %v2614 = vunpack.c.l.b16 %v2493
          %v2615 = vunpack.c.l.b16 %v2494
          %v2616 = vunpack.c.h.b16 %v2494
          %v2617 = vunpack.c.l.b16 %v2495
          %v2618 = vunpack.c.l.b16 %v2496
          %v2619 = vunpack.c.h.b16 %v2496
          %v2620 = vunpack.c.l.b16 %v2497
          %v2621 = vunpack.c.l.b16 %v2498
          %v2622 = vunpack.c.h.b16 %v2498
          %v2623 = vunpack.c.l.b16 %v2499
          %v2624 = vunpack.c.l.b16 %v2500
          %v2625 = vunpack.c.h.b16 %v2500
          %v2626 = vunpack.c.l.b16 %v2501
          %v2627 = vunpack.c.l.b16 %v2502
          %v2628 = vunpack.c.h.b16 %v2502
          %v2629 = vunpack.c.l.b16 %v2503
          %v2630 = vunpack.c.l.b16 %v2504
          %v2631 = vunpack.c.h.b16 %v2504
          %v2632 = vunpack.c.l.b16 %v2505
          %v2633 = vunpack.c.l.b16 %v2506
          %v2634 = vunpack.c.h.b16 %v2506
          %v2635 = vunpack.c.l.b16 %v2507
          %v2636 = vpack.c.b16 %v2591, %v2588
          %v2637 = vpack.c.b16 %v2592, %v2589
          %v2638 = vpack.c.b16 %v2593, %v2590
          %v2639 = vpack.c.b16 %v2597, %v2594
          %v2640 = vpack.c.b16 %v2598, %v2595
          %v2641 = vpack.c.b16 %v2599, %v2596
          %v2642 = vpack.c.b16 %v2603, %v2600
          %v2643 = vpack.c.b16 %v2604, %v2601
          %v2644 = vpack.c.b16 %v2605, %v2602
          %v2645 = vpack.c.b16 %v2609, %v2606
          %v2646 = vpack.c.b16 %v2610, %v2607
          %v2647 = vpack.c.b16 %v2611, %v2608
          %v2648 = vpack.c.b16 %v2615, %v2612
          %v2649 = vpack.c.b16 %v2616, %v2613
          %v2650 = vpack.c.b16 %v2617, %v2614
          %v2651 = vpack.c.b16 %v2621, %v2618
          %v2652 = vpack.c.b16 %v2622, %v2619
          %v2653 = vpack.c.b16 %v2623, %v2620
          %v2654 = vpack.c.b16 %v2627, %v2624
          %v2655 = vpack.c.b16 %v2628, %v2625
          %v2656 = vpack.c.b16 %v2629, %v2626
          %v2657 = vpack.c.b16 %v2633, %v2630
          %v2658 = vpack.c.b16 %v2634, %v2631
          %v2659 = vpack.c.b16 %v2635, %v2632
          %v2732 = vunpack.c.l.b16 %v2508
          %v2733 = vunpack.c.l.b16 %v2509
          %v2734 = vunpack.c.l.b16 %v2510
          %v2735 = vunpack.c.l.b16 %v2511
          %v2736 = vunpack.c.l.b16 %v2512
          %v2737 = vunpack.c.l.b16 %v2513
          %v2738 = vunpack.c.l.b16 %v2514
          %v2739 = vunpack.c.l.b16 %v2515
          %v2740 = vunpack.c.l.b16 %v2516
          %v2741 = vunpack.c.l.b16 %v2517
          %v2742 = vunpack.c.l.b16 %v2518
          %v2743 = vunpack.c.l.b16 %v2519
          %v2744 = vunpack.c.l.b16 %v2520
          %v2745 = vunpack.c.l.b16 %v2521
          %v2746 = vunpack.c.l.b16 %v2522
          %v2747 = vunpack.c.l.b16 %v2523
          %v2748 = vunpack.c.l.b16 %v2524
          %v2749 = vunpack.c.l.b16 %v2525
          %v2750 = vunpack.c.l.b16 %v2526
          %v2751 = vunpack.c.l.b16 %v2527
          %v2752 = vunpack.c.l.b16 %v2528
          %v2753 = vunpack.c.l.b16 %v2529
          %v2754 = vunpack.c.l.b16 %v2530
          %v2755 = vunpack.c.l.b16 %v2531
          %v2756 = vunpack.c.l.b16 %v2532
          %v2757 = vunpack.c.l.b16 %v2533
          %v2758 = vunpack.c.l.b16 %v2534
          %v2759 = vunpack.c.l.b16 %v2535
          %v2760 = vunpack.c.l.b16 %v2536
          %v2761 = vunpack.c.l.b16 %v2537
          %v2762 = vunpack.c.l.b16 %v2538
          %v2763 = vunpack.c.l.b16 %v2539
          %v2764 = vunpack.c.l.b16 %v2540
          %v2765 = vunpack.c.l.b16 %v2541
          %v2766 = vunpack.c.l.b16 %v2542
          %v2767 = vunpack.c.l.b16 %v2543
          %v2768 = vunpack.c.l.b16 %v2544
          %v2769 = vunpack.c.l.b16 %v2545
          %v2770 = vunpack.c.l.b16 %v2546
          %v2771 = vunpack.c.l.b16 %v2547
          %v2772 = vunpack.c.l.b16 %v2548
          %v2773 = vunpack.c.l.b16 %v2549
          %v2774 = vunpack.c.l.b16 %v2550
          %v2775 = vunpack.c.l.b16 %v2551
          %v2776 = vunpack.c.l.b16 %v2552
          %v2777 = vunpack.c.l.b16 %v2553
          %v2778 = vunpack.c.l.b16 %v2554
          %v2779 = vunpack.c.l.b16 %v2555
          %v2780 = vpack.c.b16 %v2733, %v2732
          %v2781 = vpack.c.b16 %v2735, %v2734
          %v2782 = vpack.c.b16 %v2737, %v2736
          %v2783 = vpack.c.b16 %v2739, %v2738
          %v2784 = vpack.c.b16 %v2741, %v2740
          %v2785 = vpack.c.b16 %v2743, %v2742
          %v2786 = vpack.c.b16 %v2745, %v2744
          %v2787 = vpack.c.b16 %v2747, %v2746
          %v2788 = vpack.c.b16 %v2749, %v2748
          %v2789 = vpack.c.b16 %v2751, %v2750
          %v2790 = vpack.c.b16 %v2753, %v2752
          %v2791 = vpack.c.b16 %v2755, %v2754
          %v2792 = vpack.c.b16 %v2757, %v2756
          %v2793 = vpack.c.b16 %v2759, %v2758
          %v2794 = vpack.c.b16 %v2761, %v2760
          %v2795 = vpack.c.b16 %v2763, %v2762
          %v2796 = vpack.c.b16 %v2765, %v2764
          %v2797 = vpack.c.b16 %v2767, %v2766
          %v2798 = vpack.c.b16 %v2769, %v2768
          %v2799 = vpack.c.b16 %v2771, %v2770
          %v2800 = vpack.c.b16 %v2773, %v2772
          %v2801 = vpack.c.b16 %v2775, %v2774
          %v2802 = vpack.c.b16 %v2777, %v2776
          %v2803 = vpack.c.b16 %v2779, %v2778
          %2828 = vmatprep.subr.bf16.mxu0 0
          %2829 = vmatpush1.bf16.msra.mxu0 %v2787
          %2830 = vmatprep.subr.bf16.mxu0 0
          %2831 = vmatpush1.bf16.msra.mxu0 %v2786
          %2832 = vmatprep.subr.bf16.mxu0 0
          %2833 = vmatpush1.bf16.msra.mxu0 %v2785
          %2834 = vmatprep.subr.bf16.mxu0 0
          %2835 = vmatpush1.bf16.msra.mxu0 %v2784
          %2836 = vmatprep.subr.bf16.mxu0 0
          %2837 = vmatpush1.bf16.msra.mxu0 %v2783
          %2838 = vmatprep.subr.bf16.mxu0 0
          %2839 = vmatpush1.bf16.msra.mxu0 %v2782
          %2840 = vmatprep.subr.bf16.mxu0 0
          %2841 = vmatpush1.bf16.msra.mxu0 %v2781
          %2842 = vmatprep.subr.bf16.mxu0 0
          %2843 = vmatpush1.bf16.msra.mxu0 %v2780
          %2844 = vmatprep.subr.bf16.mxu0 0
          %2845 = vmatpush2.bf16.msra.mxu0 %v2795
          %2846 = vmatprep.subr.bf16.mxu0 0
          %2847 = vmatpush2.bf16.msra.mxu0 %v2794
          %2848 = vmatprep.subr.bf16.mxu0 0
          %2849 = vmatpush2.bf16.msra.mxu0 %v2793
          %2850 = vmatprep.subr.bf16.mxu0 0
          %2851 = vmatpush2.bf16.msra.mxu0 %v2792
          %2852 = vmatprep.subr.bf16.mxu0 0
          %2853 = vmatpush2.bf16.msra.mxu0 %v2791
          %2854 = vmatprep.subr.bf16.mxu0 0
          %2855 = vmatpush2.bf16.msra.mxu0 %v2790
          %2856 = vmatprep.subr.bf16.mxu0 0
          %2857 = vmatpush2.bf16.msra.mxu0 %v2789
          %2858 = vmatprep.subr.bf16.mxu0 0
          %2859 = vmatpush2.bf16.msra.mxu0 %v2788
          %2860 = vmatprep.mubr.bf16.mxu0 %v2637
          %2861 = vmatmul.mubr.bf16.gmra.mxu0 %v2636
          %v2862 = vpop.f32.mrf.mxu0
          %v2863 = vadd.f32 0.0, %v2862
          %v2864 = vpop.f32.mrf.mxu0
          %v2865 = vpop.f32.mrf.mxu0
          %v2866 = vadd.f32 0.0, %v2865
          %v2867 = vpop.f32.mrf.mxu0
          %2868 = vmatprep.mubr.bf16.mxu0 %v2640
          %2869 = vmatmul.mubr.bf16.gmra.mxu0 %v2639
          %v2870 = vpop.f32.mrf.mxu0
          %v2871 = vadd.f32 0.0, %v2870
          %v2872 = vpop.f32.mrf.mxu0
          %v2873 = vpop.f32.mrf.mxu0
          %v2874 = vadd.f32 0.0, %v2873
          %v2875 = vpop.f32.mrf.mxu0
          %2876 = vmatprep.mubr.bf16.mxu0 %v2643
          %2877 = vmatmul.mubr.bf16.gmra.mxu0 %v2642
          %v2878 = vpop.f32.mrf.mxu0
          %v2879 = vadd.f32 0.0, %v2878
          %v2880 = vpop.f32.mrf.mxu0
          %v2881 = vpop.f32.mrf.mxu0
          %v2882 = vadd.f32 0.0, %v2881
          %v2883 = vpop.f32.mrf.mxu0
          %2884 = vmatprep.mubr.bf16.mxu0 %v2646
          %2885 = vmatmul.mubr.bf16.gmra.mxu0 %v2645
          %v2886 = vpop.f32.mrf.mxu0
          %v2887 = vadd.f32 0.0, %v2886
          %v2888 = vpop.f32.mrf.mxu0
          %v2889 = vpop.f32.mrf.mxu0
          %v2890 = vadd.f32 0.0, %v2889
          %v2891 = vpop.f32.mrf.mxu0
          %2892 = vmatprep.mubr.bf16.mxu0 %v2649
          %2893 = vmatmul.mubr.bf16.gmra.mxu0 %v2648
          %v2894 = vpop.f32.mrf.mxu0
          %v2895 = vadd.f32 0.0, %v2894
          %v2896 = vpop.f32.mrf.mxu0
          %v2897 = vpop.f32.mrf.mxu0
          %v2898 = vadd.f32 0.0, %v2897
          %v2899 = vpop.f32.mrf.mxu0
          %2900 = vmatprep.mubr.bf16.mxu0 %v2652
          %2901 = vmatmul.mubr.bf16.gmra.mxu0 %v2651
          %v2902 = vpop.f32.mrf.mxu0
          %v2903 = vadd.f32 0.0, %v2902
          %v2904 = vpop.f32.mrf.mxu0
          %v2905 = vpop.f32.mrf.mxu0
          %v2906 = vadd.f32 0.0, %v2905
          %v2907 = vpop.f32.mrf.mxu0
          %2908 = vmatprep.mubr.bf16.mxu0 %v2655
          %2909 = vmatmul.mubr.bf16.gmra.mxu0 %v2654
          %v2910 = vpop.f32.mrf.mxu0
          %v2911 = vadd.f32 0.0, %v2910
          %v2912 = vpop.f32.mrf.mxu0
          %v2913 = vpop.f32.mrf.mxu0
          %v2914 = vadd.f32 0.0, %v2913
          %v2915 = vpop.f32.mrf.mxu0
          %2916 = vmatprep.mubr.bf16.mxu0 %v2658
          %2917 = vmatmul.mubr.bf16.gmra.mxu0 %v2657
          %v2918 = vpop.f32.mrf.mxu0
          %v2919 = vadd.f32 0.0, %v2918
          %v2920 = vpop.f32.mrf.mxu0
          %v2921 = vpop.f32.mrf.mxu0
          %v2922 = vadd.f32 0.0, %v2921
          %v2923 = vpop.f32.mrf.mxu0
          %2924 = vdwg.mxu0
          %2925 = vmatprep.subr.bf16.mxu0 0
          %2926 = vmatpush1.bf16.msra.mxu0 %v2803
          %2927 = vmatprep.subr.bf16.mxu0 0
          %2928 = vmatpush1.bf16.msra.mxu0 %v2802
          %2929 = vmatprep.subr.bf16.mxu0 0
          %2930 = vmatpush1.bf16.msra.mxu0 %v2801
          %2931 = vmatprep.subr.bf16.mxu0 0
          %2932 = vmatpush1.bf16.msra.mxu0 %v2800
          %2933 = vmatprep.subr.bf16.mxu0 0
          %2934 = vmatpush1.bf16.msra.mxu0 %v2799
          %2935 = vmatprep.subr.bf16.mxu0 0
          %2936 = vmatpush1.bf16.msra.mxu0 %v2798
          %2937 = vmatprep.subr.bf16.mxu0 0
          %2938 = vmatpush1.bf16.msra.mxu0 %v2797
          %2939 = vmatprep.subr.bf16.mxu0 0
          %2940 = vmatpush1.bf16.msra.mxu0 %v2796
          %2941 = vmatprep.subr.bf16.mxu0 0
          %2942 = vmatpush2.bf16.msra.mxu0 0
          %2943 = vmatprep.subr.bf16.mxu0 0
          %2944 = vmatpush2.bf16.msra.mxu0 0
          %2945 = vmatprep.subr.bf16.mxu0 0
          %2946 = vmatpush2.bf16.msra.mxu0 0
          %2947 = vmatprep.subr.bf16.mxu0 0
          %2948 = vmatpush2.bf16.msra.mxu0 0
          %2949 = vmatprep.subr.bf16.mxu0 0
          %2950 = vmatpush2.bf16.msra.mxu0 0
          %2951 = vmatprep.subr.bf16.mxu0 0
          %2952 = vmatpush2.bf16.msra.mxu0 0
          %2953 = vmatprep.subr.bf16.mxu0 0
          %2954 = vmatpush2.bf16.msra.mxu0 0
          %2955 = vmatprep.subr.bf16.mxu0 0
          %2956 = vmatpush2.bf16.msra.mxu0 0
          %2957 = vmatprep.mubr.bf16.mxu0 0
          %2958 = vmatmul.mubr.bf16.gmra.mxu0 %v2638
          %v2959 = vpop.f32.mrf.mxu0
          %v2960 = vadd.f32 %v2863, %v2959
          %v2961 = vpop.f32.mrf.mxu0
          %v2962 = vpop.f32.mrf.mxu0
          %v2963 = vadd.f32 %v2866, %v2962
          %v2964 = vpop.f32.mrf.mxu0
          %2965 = vmatprep.mubr.bf16.mxu0 0
          %2966 = vmatmul.mubr.bf16.gmra.mxu0 %v2641
          %v2967 = vpop.f32.mrf.mxu0
          %v2968 = vadd.f32 %v2871, %v2967
          %v2969 = vpop.f32.mrf.mxu0
          %v2970 = vpop.f32.mrf.mxu0
          %v2971 = vadd.f32 %v2874, %v2970
          %v2972 = vpop.f32.mrf.mxu0
          %2973 = vmatprep.mubr.bf16.mxu0 0
          %2974 = vmatmul.mubr.bf16.gmra.mxu0 %v2644
          %v2975 = vpop.f32.mrf.mxu0
          %v2976 = vadd.f32 %v2879, %v2975
          %v2977 = vpop.f32.mrf.mxu0
          %v2978 = vpop.f32.mrf.mxu0
          %v2979 = vadd.f32 %v2882, %v2978
          %v2980 = vpop.f32.mrf.mxu0
          %2981 = vmatprep.mubr.bf16.mxu0 0
          %2982 = vmatmul.mubr.bf16.gmra.mxu0 %v2647
          %v2983 = vpop.f32.mrf.mxu0
          %v2984 = vadd.f32 %v2887, %v2983
          %v2985 = vpop.f32.mrf.mxu0
          %v2986 = vpop.f32.mrf.mxu0
          %v2987 = vadd.f32 %v2890, %v2986
          %v2988 = vpop.f32.mrf.mxu0
          %2989 = vmatprep.mubr.bf16.mxu0 0
          %2990 = vmatmul.mubr.bf16.gmra.mxu0 %v2650
          %v2991 = vpop.f32.mrf.mxu0
          %v2992 = vadd.f32 %v2895, %v2991
          %v2993 = vpop.f32.mrf.mxu0
          %v2994 = vpop.f32.mrf.mxu0
          %v2995 = vadd.f32 %v2898, %v2994
          %v2996 = vpop.f32.mrf.mxu0
          %2997 = vmatprep.mubr.bf16.mxu0 0
          %2998 = vmatmul.mubr.bf16.gmra.mxu0 %v2653
          %v2999 = vpop.f32.mrf.mxu0
          %v3000 = vadd.f32 %v2903, %v2999
          %v3001 = vpop.f32.mrf.mxu0
          %v3002 = vpop.f32.mrf.mxu0
          %v3003 = vadd.f32 %v2906, %v3002
          %v3004 = vpop.f32.mrf.mxu0
          %3005 = vmatprep.mubr.bf16.mxu0 0
          %3006 = vmatmul.mubr.bf16.gmra.mxu0 %v2656
          %v3007 = vpop.f32.mrf.mxu0
          %v3008 = vadd.f32 %v2911, %v3007
          %v3009 = vpop.f32.mrf.mxu0
          %v3010 = vpop.f32.mrf.mxu0
          %v3011 = vadd.f32 %v2914, %v3010
          %v3012 = vpop.f32.mrf.mxu0
          %3013 = vmatprep.mubr.bf16.mxu0 0
          %3014 = vmatmul.mubr.bf16.gmra.mxu0 %v2659
          %v3015 = vpop.f32.mrf.mxu0
          %v3016 = vadd.f32 %v2919, %v3015
          %v3017 = vpop.f32.mrf.mxu0
          %v3018 = vpop.f32.mrf.mxu0
          %v3019 = vadd.f32 %v2922, %v3018
          %v3020 = vpop.f32.mrf.mxu0
          %3021 = vdwg.mxu0
          %v3023 = vlaneseq
          %v3024 = vshrl.u32 %v3023, 7
          %v3025 = vsub.s32 0, %v3024
          %v3026 = vrot.slane %v603, %v3025
          %v3028 = vadd.f32 %v2960, %v3026
          %v3029 = vadd.f32 %v2963, %v3026
          %v3030 = vadd.f32 %v2968, %v3026
          %v3031 = vadd.f32 %v2971, %v3026
          %v3032 = vadd.f32 %v2976, %v3026
          %v3033 = vadd.f32 %v2979, %v3026
          %v3034 = vadd.f32 %v2984, %v3026
          %v3035 = vadd.f32 %v2987, %v3026
          %v3036 = vadd.f32 %v2992, %v3026
          %v3037 = vadd.f32 %v2995, %v3026
          %v3038 = vadd.f32 %v3000, %v3026
          %v3039 = vadd.f32 %v3003, %v3026
          %v3040 = vadd.f32 %v3008, %v3026
          %v3041 = vadd.f32 %v3011, %v3026
          %v3042 = vadd.f32 %v3016, %v3026
          %v3043 = vadd.f32 %v3019, %v3026
          %v3044 = vadd.f32 %v3028, %v935
          %v3045 = vadd.f32 %v3029, %v936
          %v3046 = vadd.f32 %v3030, %v937
          %v3047 = vadd.f32 %v3031, %v938
          %v3048 = vadd.f32 %v3032, %v939
          %v3049 = vadd.f32 %v3033, %v940
          %v3050 = vadd.f32 %v3034, %v941
          %v3051 = vadd.f32 %v3035, %v942
          %v3052 = vadd.f32 %v3036, %v943
          %v3053 = vadd.f32 %v3037, %v944
          %v3054 = vadd.f32 %v3038, %v945
          %v3055 = vadd.f32 %v3039, %v946
          %v3056 = vadd.f32 %v3040, %v947
          %v3057 = vadd.f32 %v3041, %v948
          %v3058 = vadd.f32 %v3042, %v949
          %v3059 = vadd.f32 %v3043, %v950
          %3060 = vst [vmem:[#allocation3] sm:$0xff] %v3044
          %3061 = vst [vmem:[#allocation3 + $0x8] sm:$0xff] %v3045
          %3062 = vst [vmem:[#allocation3 + $0x10] sm:$0xff] %v3046
          %3063 = vst [vmem:[#allocation3 + $0x18] sm:$0xff] %v3047
          %3064 = vst [vmem:[#allocation3 + $0x20] sm:$0xff] %v3048
          %3065 = vst [vmem:[#allocation3 + $0x28] sm:$0xff] %v3049
          %3066 = vst [vmem:[#allocation3 + $0x30] sm:$0xff] %v3050
          %3067 = vst [vmem:[#allocation3 + $0x38] sm:$0xff] %v3051
          %3068 = vst [vmem:[#allocation3 + $0x40] sm:$0xff] %v3052
          %3069 = vst [vmem:[#allocation3 + $0x48] sm:$0xff] %v3053
          %3070 = vst [vmem:[#allocation3 + $0x50] sm:$0xff] %v3054
          %3071 = vst [vmem:[#allocation3 + $0x58] sm:$0xff] %v3055
          %3072 = vst [vmem:[#allocation3 + $0x60] sm:$0xff] %v3056
          %3073 = vst [vmem:[#allocation3 + $0x68] sm:$0xff] %v3057
          %3074 = vst [vmem:[#allocation3 + $0x70] sm:$0xff] %v3058
          %3075 = vst [vmem:[#allocation3 + $0x78] sm:$0xff] %v3059
        $region107: #{unaligned_token_representation.1} parent=63 // pred_fallthru
          _
        %p3076 = scmp.eq.s32.totalorder %s24, 1
        // Predicated region
        $region108: #{unaligned_token_representation.1} parent=63 // pred_check
          %p3077 = pneg %p3076
        $region109: #{unaligned_token_representation.1} parent=63 // pred_check_branch
          %3079 = sbr.rel (%p3077) target = $region111
        $region110: #{unaligned_token_representation.1} parent=63 // pred_region
          %v3080 = vld [vmem:[#allocation3] sm:$0xff]
          %v3081 = vld [vmem:[#allocation3 + $0x8] sm:$0xff]
          %v3082 = vld [vmem:[#allocation3 + $0x10] sm:$0xff]
          %v3083 = vld [vmem:[#allocation3 + $0x18] sm:$0xff]
          %v3084 = vld [vmem:[#allocation3 + $0x20] sm:$0xff]
          %v3085 = vld [vmem:[#allocation3 + $0x28] sm:$0xff]
          %v3086 = vld [vmem:[#allocation3 + $0x30] sm:$0xff]
          %v3087 = vld [vmem:[#allocation3 + $0x38] sm:$0xff]
          %v3088 = vld [vmem:[#allocation3 + $0x40] sm:$0xff]
          %v3089 = vld [vmem:[#allocation3 + $0x48] sm:$0xff]
          %v3090 = vld [vmem:[#allocation3 + $0x50] sm:$0xff]
          %v3091 = vld [vmem:[#allocation3 + $0x58] sm:$0xff]
          %v3092 = vld [vmem:[#allocation3 + $0x60] sm:$0xff]
          %v3093 = vld [vmem:[#allocation3 + $0x68] sm:$0xff]
          %v3094 = vld [vmem:[#allocation3 + $0x70] sm:$0xff]
          %v3095 = vld [vmem:[#allocation3 + $0x78] sm:$0xff]
          %v3096 = vadd.f32 %v3080, %v3081
          %v3097 = vadd.f32 %v3096, %v3082
          %v3098 = vadd.f32 %v3097, %v3083
          %v3099 = vadd.f32 %v3098, %v3084
          %v3100 = vadd.f32 %v3099, %v3085
          %v3101 = vadd.f32 %v3100, %v3086
          %v3102 = vadd.f32 %v3101, %v3087
          %v3103 = vadd.f32 %v3102, %v3088
          %v3104 = vadd.f32 %v3103, %v3089
          %v3105 = vadd.f32 %v3104, %v3090
          %v3106 = vadd.f32 %v3105, %v3091
          %v3107 = vadd.f32 %v3106, %v3092
          %v3108 = vadd.f32 %v3107, %v3093
          %v3109 = vadd.f32 %v3108, %v3094
          %v3110 = vadd.f32 %v3109, %v3095
          %v3111 = vrot.slane %v3110, 4
          %v3112 = vadd.f32 %v3110, %v3111
          %v3113 = vrot.slane %v3112, 2
          %v3114 = vadd.f32 %v3112, %v3113
          %v3115 = vrot.slane %v3114, 1
          %v3116 = vadd.f32 %v3114, %v3115
          %v3117 = vrcp.pop 128.0
          %v3118 = vmul.f32 %v3116, %v3117
          %v3119 = vmul.f32 %v3080, %v3080
          %v3120 = vmul.f32 %v3081, %v3081
          %v3121 = vmul.f32 %v3082, %v3082
          %v3122 = vmul.f32 %v3083, %v3083
          %v3123 = vmul.f32 %v3084, %v3084
          %v3124 = vmul.f32 %v3085, %v3085
          %v3125 = vmul.f32 %v3086, %v3086
          %v3126 = vmul.f32 %v3087, %v3087
          %v3127 = vmul.f32 %v3088, %v3088
          %v3128 = vmul.f32 %v3089, %v3089
          %v3129 = vmul.f32 %v3090, %v3090
          %v3130 = vmul.f32 %v3091, %v3091
          %v3131 = vmul.f32 %v3092, %v3092
          %v3132 = vmul.f32 %v3093, %v3093
          %v3133 = vmul.f32 %v3094, %v3094
          %v3134 = vmul.f32 %v3095, %v3095
          %v3135 = vadd.f32 %v3119, %v3120
          %v3136 = vadd.f32 %v3135, %v3121
          %v3137 = vadd.f32 %v3136, %v3122
          %v3138 = vadd.f32 %v3137, %v3123
          %v3139 = vadd.f32 %v3138, %v3124
          %v3140 = vadd.f32 %v3139, %v3125
          %v3141 = vadd.f32 %v3140, %v3126
          %v3142 = vadd.f32 %v3141, %v3127
          %v3143 = vadd.f32 %v3142, %v3128
          %v3144 = vadd.f32 %v3143, %v3129
          %v3145 = vadd.f32 %v3144, %v3130
          %v3146 = vadd.f32 %v3145, %v3131
          %v3147 = vadd.f32 %v3146, %v3132
          %v3148 = vadd.f32 %v3147, %v3133
          %v3149 = vadd.f32 %v3148, %v3134
          %v3150 = vrot.slane %v3149, 4
          %v3151 = vadd.f32 %v3149, %v3150
          %v3152 = vrot.slane %v3151, 2
          %v3153 = vadd.f32 %v3151, %v3152
          %v3154 = vrot.slane %v3153, 1
          %v3155 = vadd.f32 %v3153, %v3154
          %v3156 = vmul.f32 %v3155, %v3117
          %v3157 = vmul.f32 %v3118, %v3118
          %v3158 = vsub.f32 %v3156, %v3157
          %v3159 = vmax.f32 %v3158, 0.0
          %v3160 = vadd.f32 %v3159, 1e-05
          %v3161 = vrsqrt.pop %v3160
          %v3162 = vmul.f32 %v600, %v3161
          %v3163 = vmul.f32 %v3118, %v3162
          %v3164 = vsub.f32 %v601, %v3163
          %v3166 = vlaneseq
          %v3167 = vshrl.u32 %v3166, 7
          %v3168 = vsub.s32 0, %v3167
          %v3169 = vrot.slane %v3162, %v3168
          %v3171 = vmul.f32 %v3080, %v3169
          %v3172 = vmul.f32 %v3081, %v3169
          %v3173 = vmul.f32 %v3082, %v3169
          %v3174 = vmul.f32 %v3083, %v3169
          %v3175 = vmul.f32 %v3084, %v3169
          %v3176 = vmul.f32 %v3085, %v3169
          %v3177 = vmul.f32 %v3086, %v3169
          %v3178 = vmul.f32 %v3087, %v3169
          %v3179 = vmul.f32 %v3088, %v3169
          %v3180 = vmul.f32 %v3089, %v3169
          %v3181 = vmul.f32 %v3090, %v3169
          %v3182 = vmul.f32 %v3091, %v3169
          %v3183 = vmul.f32 %v3092, %v3169
          %v3184 = vmul.f32 %v3093, %v3169
          %v3185 = vmul.f32 %v3094, %v3169
          %v3186 = vmul.f32 %v3095, %v3169
          %v3188 = vlaneseq
          %v3189 = vshrl.u32 %v3188, 7
          %v3190 = vsub.s32 0, %v3189
          %v3191 = vrot.slane %v3164, %v3190
          %v3193 = vadd.f32 %v3171, %v3191
          %v3194 = vadd.f32 %v3172, %v3191
          %v3195 = vadd.f32 %v3173, %v3191
          %v3196 = vadd.f32 %v3174, %v3191
          %v3197 = vadd.f32 %v3175, %v3191
          %v3198 = vadd.f32 %v3176, %v3191
          %v3199 = vadd.f32 %v3177, %v3191
          %v3200 = vadd.f32 %v3178, %v3191
          %v3201 = vadd.f32 %v3179, %v3191
          %v3202 = vadd.f32 %v3180, %v3191
          %v3203 = vadd.f32 %v3181, %v3191
          %v3204 = vadd.f32 %v3182, %v3191
          %v3205 = vadd.f32 %v3183, %v3191
          %v3206 = vadd.f32 %v3184, %v3191
          %v3207 = vadd.f32 %v3185, %v3191
          %v3208 = vadd.f32 %v3186, %v3191
          %v3209 = vmul.f32 %v705, %v3193
          %v3210 = vmul.f32 %v709, %v3194
          %v3211 = vmul.f32 %v713, %v3195
          %v3212 = vmul.f32 %v717, %v3196
          %v3213 = vmul.f32 %v721, %v3197
          %v3214 = vmul.f32 %v725, %v3198
          %v3215 = vmul.f32 %v729, %v3199
          %v3216 = vmul.f32 %v733, %v3200
          %v3217 = vmul.f32 %v740, %v3201
          %v3218 = vmul.f32 %v744, %v3202
          %v3219 = vmul.f32 %v748, %v3203
          %v3220 = vmul.f32 %v752, %v3204
          %v3221 = vmul.f32 %v756, %v3205
          %v3222 = vmul.f32 %v760, %v3206
          %v3223 = vmul.f32 %v764, %v3207
          %v3224 = vmul.f32 %v768, %v3208
          %v3225 = vadd.f32 %v3209, %v868
          %v3226 = vadd.f32 %v3210, %v872
          %v3227 = vadd.f32 %v3211, %v876
          %v3228 = vadd.f32 %v3212, %v880
          %v3229 = vadd.f32 %v3213, %v884
          %v3230 = vadd.f32 %v3214, %v888
          %v3231 = vadd.f32 %v3215, %v892
          %v3232 = vadd.f32 %v3216, %v896
          %v3233 = vadd.f32 %v3217, %v903
          %v3234 = vadd.f32 %v3218, %v907
          %v3235 = vadd.f32 %v3219, %v911
          %v3236 = vadd.f32 %v3220, %v915
          %v3237 = vadd.f32 %v3221, %v919
          %v3238 = vadd.f32 %v3222, %v923
          %v3239 = vadd.f32 %v3223, %v927
          %v3240 = vadd.f32 %v3224, %v931
          %v3241 = vmax.f32 %v3225, 0.0
          %v3242 = vmax.f32 %v3226, 0.0
          %v3243 = vmax.f32 %v3227, 0.0
          %v3244 = vmax.f32 %v3228, 0.0
          %v3245 = vmax.f32 %v3229, 0.0
          %v3246 = vmax.f32 %v3230, 0.0
          %v3247 = vmax.f32 %v3231, 0.0
          %v3248 = vmax.f32 %v3232, 0.0
          %v3249 = vmax.f32 %v3233, 0.0
          %v3250 = vmax.f32 %v3234, 0.0
          %v3251 = vmax.f32 %v3235, 0.0
          %v3252 = vmax.f32 %v3236, 0.0
          %v3253 = vmax.f32 %v3237, 0.0
          %v3254 = vmax.f32 %v3238, 0.0
          %v3255 = vmax.f32 %v3239, 0.0
          %v3256 = vmax.f32 %v3240, 0.0
          %v3257 = vrot.slane %v3241, 6
          %v3258 = vrot.slane %v3242, 6
          %v3259 = vrot.slane %v3243, 6
          %v3260 = vrot.slane %v3244, 6
          %v3261 = vrot.slane %v3245, 6
          %v3262 = vrot.slane %v3246, 6
          %v3263 = vrot.slane %v3247, 6
          %v3264 = vrot.slane %v3248, 6
          %v3265 = vrot.slane %v3249, 6
          %v3266 = vrot.slane %v3250, 6
          %v3267 = vrot.slane %v3251, 6
          %v3268 = vrot.slane %v3252, 6
          %v3269 = vrot.slane %v3253, 6
          %v3270 = vrot.slane %v3254, 6
          %v3271 = vrot.slane %v3255, 6
          %v3272 = vrot.slane %v3256, 6
          %v3273 = vlaneseq
          %v3274 = vshrl.u32 %v3273, 7
          %vm3275 = vcmp.lt.s32.totalorder %v3274, 2
          %v3276 = vsel %vm3275, %v3271, %v3272
          %v3277 = vsel %vm3275, %v3270, %v3271
          %v3278 = vsel %vm3275, %v3269, %v3270
          %v3279 = vsel %vm3275, %v3268, %v3269
          %v3280 = vsel %vm3275, %v3267, %v3268
          %v3281 = vsel %vm3275, %v3266, %v3267
          %v3282 = vsel %vm3275, %v3265, %v3266
          %v3283 = vsel %vm3275, %v3264, %v3265
          %v3284 = vsel %vm3275, %v3263, %v3264
          %v3285 = vsel %vm3275, %v3262, %v3263
          %v3286 = vsel %vm3275, %v3261, %v3262
          %v3287 = vsel %vm3275, %v3260, %v3261
          %v3288 = vsel %vm3275, %v3259, %v3260
          %v3289 = vsel %vm3275, %v3258, %v3259
          %v3290 = vsel %vm3275, %v3257, %v3258
          %v3291 = vsel %vm3275, %v3272, %v3257
          %v3292 = vpack.c.bf16 %v3290, %v3291
          %v3293 = vpack.c.bf16 %v3288, %v3289
          %v3294 = vpack.c.bf16 %v3286, %v3287
          %v3295 = vpack.c.bf16 %v3284, %v3285
          %v3296 = vpack.c.bf16 %v3282, %v3283
          %v3297 = vpack.c.bf16 %v3280, %v3281
          %v3298 = vpack.c.bf16 %v3278, %v3279
          %v3299 = vpack.c.bf16 %v3276, %v3277
          %v3308 = vunpack.c.l.b16 %v3292
          %v3309 = vunpack.c.h.b16 %v3292
          %v3310 = vunpack.c.l.b16 %v3293
          %v3311 = vunpack.c.h.b16 %v3293
          %v3312 = vunpack.c.l.b16 %v3294
          %v3313 = vunpack.c.h.b16 %v3294
          %v3314 = vunpack.c.l.b16 %v3295
          %v3315 = vunpack.c.h.b16 %v3295
          %v3316 = vunpack.c.l.b16 %v3296
          %v3317 = vunpack.c.h.b16 %v3296
          %v3318 = vunpack.c.l.b16 %v3297
          %v3319 = vunpack.c.h.b16 %v3297
          %v3320 = vunpack.c.l.b16 %v3298
          %v3321 = vunpack.c.h.b16 %v3298
          %v3322 = vunpack.c.l.b16 %v3299
          %v3323 = vunpack.c.h.b16 %v3299
          %v3324 = vpack.c.b16 %v3308, %v3308
          %v3325 = vpack.c.b16 %v3309, %v3309
          %v3326 = vpack.c.b16 %v3310, %v3310
          %v3327 = vpack.c.b16 %v3311, %v3311
          %v3328 = vpack.c.b16 %v3312, %v3312
          %v3329 = vpack.c.b16 %v3313, %v3313
          %v3330 = vpack.c.b16 %v3314, %v3314
          %v3331 = vpack.c.b16 %v3315, %v3315
          %v3332 = vpack.c.b16 %v3316, %v3316
          %v3333 = vpack.c.b16 %v3317, %v3317
          %v3334 = vpack.c.b16 %v3318, %v3318
          %v3335 = vpack.c.b16 %v3319, %v3319
          %v3336 = vpack.c.b16 %v3320, %v3320
          %v3337 = vpack.c.b16 %v3321, %v3321
          %v3338 = vpack.c.b16 %v3322, %v3322
          %v3339 = vpack.c.b16 %v3323, %v3323
          %3356 = vst [vmem:[#allocation2] sm:$0xf] %v3324
          %3357 = vst [vmem:[#allocation2 + $0xc] sm:$0xf] %v3325
          %3358 = vst [vmem:[#allocation2 + $0x18] sm:$0xf] %v3326
          %3359 = vst [vmem:[#allocation2 + $0x24] sm:$0xf] %v3327
          %3360 = vst [vmem:[#allocation2 + $0x30] sm:$0xf] %v3328
          %3361 = vst [vmem:[#allocation2 + $0x3c] sm:$0xf] %v3329
          %3362 = vst [vmem:[#allocation2 + $0x48] sm:$0xf] %v3330
          %3363 = vst [vmem:[#allocation2 + $0x54] sm:$0xf] %v3331
          %3364 = vst [vmem:[#allocation2 + $0x60] sm:$0xf] %v3332
          %3365 = vst [vmem:[#allocation2 + $0x6c] sm:$0xf] %v3333
          %3366 = vst [vmem:[#allocation2 + $0x78] sm:$0xf] %v3334
          %3367 = vst [vmem:[#allocation2 + $0x84] sm:$0xf] %v3335
          %3368 = vst [vmem:[#allocation2 + $0x90] sm:$0xf] %v3336
          %3369 = vst [vmem:[#allocation2 + $0x9c] sm:$0xf] %v3337
          %3370 = vst [vmem:[#allocation2 + $0xa8] sm:$0xf] %v3338
          %3371 = vst [vmem:[#allocation2 + $0xb4] sm:$0xf] %v3339
          %3372 = vst [vmem:[#allocation2] sm:$0x1] 0
          %3373 = vst [vmem:[#allocation2 + $0x60] sm:$0x1] 0
          %v3374 = vpack.c.bf16 %v3242, %v3241
          %v3375 = vpack.c.bf16 %v3244, %v3243
          %v3376 = vpack.c.bf16 %v3246, %v3245
          %v3377 = vpack.c.bf16 %v3248, %v3247
          %v3378 = vpack.c.bf16 %v3250, %v3249
          %v3379 = vpack.c.bf16 %v3252, %v3251
          %v3380 = vpack.c.bf16 %v3254, %v3253
          %v3381 = vpack.c.bf16 %v3256, %v3255
          %v3390 = vunpack.c.l.b16 %v3374
          %v3391 = vunpack.c.h.b16 %v3374
          %v3392 = vunpack.c.l.b16 %v3375
          %v3393 = vunpack.c.h.b16 %v3375
          %v3394 = vunpack.c.l.b16 %v3376
          %v3395 = vunpack.c.h.b16 %v3376
          %v3396 = vunpack.c.l.b16 %v3377
          %v3397 = vunpack.c.h.b16 %v3377
          %v3398 = vunpack.c.l.b16 %v3378
          %v3399 = vunpack.c.h.b16 %v3378
          %v3400 = vunpack.c.l.b16 %v3379
          %v3401 = vunpack.c.h.b16 %v3379
          %v3402 = vunpack.c.l.b16 %v3380
          %v3403 = vunpack.c.h.b16 %v3380
          %v3404 = vunpack.c.l.b16 %v3381
          %v3405 = vunpack.c.h.b16 %v3381
          %v3406 = vpack.c.b16 %v3390, %v3390
          %v3407 = vpack.c.b16 %v3391, %v3391
          %v3408 = vpack.c.b16 %v3392, %v3392
          %v3409 = vpack.c.b16 %v3393, %v3393
          %v3410 = vpack.c.b16 %v3394, %v3394
          %v3411 = vpack.c.b16 %v3395, %v3395
          %v3412 = vpack.c.b16 %v3396, %v3396
          %v3413 = vpack.c.b16 %v3397, %v3397
          %v3414 = vpack.c.b16 %v3398, %v3398
          %v3415 = vpack.c.b16 %v3399, %v3399
          %v3416 = vpack.c.b16 %v3400, %v3400
          %v3417 = vpack.c.b16 %v3401, %v3401
          %v3418 = vpack.c.b16 %v3402, %v3402
          %v3419 = vpack.c.b16 %v3403, %v3403
          %v3420 = vpack.c.b16 %v3404, %v3404
          %v3421 = vpack.c.b16 %v3405, %v3405
          %3438 = vst [vmem:[#allocation2 + $0x4] sm:$0xf] %v3406
          %3439 = vst [vmem:[#allocation2 + $0x10] sm:$0xf] %v3407
          %3440 = vst [vmem:[#allocation2 + $0x1c] sm:$0xf] %v3408
          %3441 = vst [vmem:[#allocation2 + $0x28] sm:$0xf] %v3409
          %3442 = vst [vmem:[#allocation2 + $0x34] sm:$0xf] %v3410
          %3443 = vst [vmem:[#allocation2 + $0x40] sm:$0xf] %v3411
          %3444 = vst [vmem:[#allocation2 + $0x4c] sm:$0xf] %v3412
          %3445 = vst [vmem:[#allocation2 + $0x58] sm:$0xf] %v3413
          %3446 = vst [vmem:[#allocation2 + $0x64] sm:$0xf] %v3414
          %3447 = vst [vmem:[#allocation2 + $0x70] sm:$0xf] %v3415
          %3448 = vst [vmem:[#allocation2 + $0x7c] sm:$0xf] %v3416
          %3449 = vst [vmem:[#allocation2 + $0x88] sm:$0xf] %v3417
          %3450 = vst [vmem:[#allocation2 + $0x94] sm:$0xf] %v3418
          %3451 = vst [vmem:[#allocation2 + $0xa0] sm:$0xf] %v3419
          %3452 = vst [vmem:[#allocation2 + $0xac] sm:$0xf] %v3420
          %3453 = vst [vmem:[#allocation2 + $0xb8] sm:$0xf] %v3421
          %v3454 = vrot.slane %v3241, 2
          %v3455 = vrot.slane %v3242, 2
          %v3456 = vrot.slane %v3243, 2
          %v3457 = vrot.slane %v3244, 2
          %v3458 = vrot.slane %v3245, 2
          %v3459 = vrot.slane %v3246, 2
          %v3460 = vrot.slane %v3247, 2
          %v3461 = vrot.slane %v3248, 2
          %v3462 = vrot.slane %v3249, 2
          %v3463 = vrot.slane %v3250, 2
          %v3464 = vrot.slane %v3251, 2
          %v3465 = vrot.slane %v3252, 2
          %v3466 = vrot.slane %v3253, 2
          %v3467 = vrot.slane %v3254, 2
          %v3468 = vrot.slane %v3255, 2
          %v3469 = vrot.slane %v3256, 2
          %vm3470 = vcmp.lt.s32.totalorder %v3274, 6
          %v3471 = vsel %vm3470, %v3468, %v3469
          %v3472 = vsel %vm3470, %v3467, %v3468
          %v3473 = vsel %vm3470, %v3466, %v3467
          %v3474 = vsel %vm3470, %v3465, %v3466
          %v3475 = vsel %vm3470, %v3464, %v3465
          %v3476 = vsel %vm3470, %v3463, %v3464
          %v3477 = vsel %vm3470, %v3462, %v3463
          %v3478 = vsel %vm3470, %v3461, %v3462
          %v3479 = vsel %vm3470, %v3460, %v3461
          %v3480 = vsel %vm3470, %v3459, %v3460
          %v3481 = vsel %vm3470, %v3458, %v3459
          %v3482 = vsel %vm3470, %v3457, %v3458
          %v3483 = vsel %vm3470, %v3456, %v3457
          %v3484 = vsel %vm3470, %v3455, %v3456
          %v3485 = vsel %vm3470, %v3454, %v3455
          %v3486 = vsel %vm3470, %v3469, %v3454
          %v3487 = vpack.c.bf16 %v3484, %v3485
          %v3488 = vpack.c.bf16 %v3482, %v3483
          %v3489 = vpack.c.bf16 %v3480, %v3481
          %v3490 = vpack.c.bf16 %v3478, %v3479
          %v3491 = vpack.c.bf16 %v3476, %v3477
          %v3492 = vpack.c.bf16 %v3474, %v3475
          %v3493 = vpack.c.bf16 %v3472, %v3473
          %v3494 = vpack.c.bf16 %v3486, %v3471
          %v3503 = vunpack.c.l.b16 %v3487
          %v3504 = vunpack.c.h.b16 %v3487
          %v3505 = vunpack.c.l.b16 %v3488
          %v3506 = vunpack.c.h.b16 %v3488
          %v3507 = vunpack.c.l.b16 %v3489
          %v3508 = vunpack.c.h.b16 %v3489
          %v3509 = vunpack.c.l.b16 %v3490
          %v3510 = vunpack.c.h.b16 %v3490
          %v3511 = vunpack.c.l.b16 %v3491
          %v3512 = vunpack.c.h.b16 %v3491
          %v3513 = vunpack.c.l.b16 %v3492
          %v3514 = vunpack.c.h.b16 %v3492
          %v3515 = vunpack.c.l.b16 %v3493
          %v3516 = vunpack.c.h.b16 %v3493
          %v3517 = vunpack.c.l.b16 %v3494
          %v3518 = vunpack.c.h.b16 %v3494
          %v3519 = vpack.c.b16 %v3503, %v3503
          %v3520 = vpack.c.b16 %v3504, %v3504
          %v3521 = vpack.c.b16 %v3505, %v3505
          %v3522 = vpack.c.b16 %v3506, %v3506
          %v3523 = vpack.c.b16 %v3507, %v3507
          %v3524 = vpack.c.b16 %v3508, %v3508
          %v3525 = vpack.c.b16 %v3509, %v3509
          %v3526 = vpack.c.b16 %v3510, %v3510
          %v3527 = vpack.c.b16 %v3511, %v3511
          %v3528 = vpack.c.b16 %v3512, %v3512
          %v3529 = vpack.c.b16 %v3513, %v3513
          %v3530 = vpack.c.b16 %v3514, %v3514
          %v3531 = vpack.c.b16 %v3515, %v3515
          %v3532 = vpack.c.b16 %v3516, %v3516
          %v3533 = vpack.c.b16 %v3517, %v3517
          %v3534 = vpack.c.b16 %v3518, %v3518
          %3551 = vst [vmem:[#allocation2 + $0x8] sm:$0xf] %v3519
          %3552 = vst [vmem:[#allocation2 + $0x14] sm:$0xf] %v3520
          %3553 = vst [vmem:[#allocation2 + $0x20] sm:$0xf] %v3521
          %3554 = vst [vmem:[#allocation2 + $0x2c] sm:$0xf] %v3522
          %3555 = vst [vmem:[#allocation2 + $0x38] sm:$0xf] %v3523
          %3556 = vst [vmem:[#allocation2 + $0x44] sm:$0xf] %v3524
          %3557 = vst [vmem:[#allocation2 + $0x50] sm:$0xf] %v3525
          %3558 = vst [vmem:[#allocation2 + $0x5c] sm:$0xf] %v3526
          %3559 = vst [vmem:[#allocation2 + $0x68] sm:$0xf] %v3527
          %3560 = vst [vmem:[#allocation2 + $0x74] sm:$0xf] %v3528
          %3561 = vst [vmem:[#allocation2 + $0x80] sm:$0xf] %v3529
          %3562 = vst [vmem:[#allocation2 + $0x8c] sm:$0xf] %v3530
          %3563 = vst [vmem:[#allocation2 + $0x98] sm:$0xf] %v3531
          %3564 = vst [vmem:[#allocation2 + $0xa4] sm:$0xf] %v3532
          %3565 = vst [vmem:[#allocation2 + $0xb0] sm:$0xf] %v3533
          %3566 = vst [vmem:[#allocation2 + $0xbc] sm:$0xf] %v3534
          %3567 = vst [vmem:[#allocation2 + $0x5c] sm:$0x8] 0
          %3568 = vst [vmem:[#allocation2 + $0xbc] sm:$0x8] 0
          %v3569 = vld [vmem:[#allocation2] sm:$0xff]
          %v3570 = vld [vmem:[#allocation2 + $0x8] sm:$0xf]
          %v3571 = vld [vmem:[#allocation2 + $0xc] sm:$0xff]
          %v3572 = vld [vmem:[#allocation2 + $0x14] sm:$0xf]
          %v3573 = vld [vmem:[#allocation2 + $0x18] sm:$0xff]
          %v3574 = vld [vmem:[#allocation2 + $0x20] sm:$0xf]
          %v3575 = vld [vmem:[#allocation2 + $0x24] sm:$0xff]
          %v3576 = vld [vmem:[#allocation2 + $0x2c] sm:$0xf]
          %v3577 = vld [vmem:[#allocation2 + $0x30] sm:$0xff]
          %v3578 = vld [vmem:[#allocation2 + $0x38] sm:$0xf]
          %v3579 = vld [vmem:[#allocation2 + $0x3c] sm:$0xff]
          %v3580 = vld [vmem:[#allocation2 + $0x44] sm:$0xf]
          %v3581 = vld [vmem:[#allocation2 + $0x48] sm:$0xff]
          %v3582 = vld [vmem:[#allocation2 + $0x50] sm:$0xf]
          %v3583 = vld [vmem:[#allocation2 + $0x54] sm:$0xff]
          %v3584 = vld [vmem:[#allocation2 + $0x5c] sm:$0xf]
          %v3585 = vld [vmem:[#allocation2 + $0x60] sm:$0xff]
          %v3586 = vld [vmem:[#allocation2 + $0x68] sm:$0xf]
          %v3587 = vld [vmem:[#allocation2 + $0x6c] sm:$0xff]
          %v3588 = vld [vmem:[#allocation2 + $0x74] sm:$0xf]
          %v3589 = vld [vmem:[#allocation2 + $0x78] sm:$0xff]
          %v3590 = vld [vmem:[#allocation2 + $0x80] sm:$0xf]
          %v3591 = vld [vmem:[#allocation2 + $0x84] sm:$0xff]
          %v3592 = vld [vmem:[#allocation2 + $0x8c] sm:$0xf]
          %v3593 = vld [vmem:[#allocation2 + $0x90] sm:$0xff]
          %v3594 = vld [vmem:[#allocation2 + $0x98] sm:$0xf]
          %v3595 = vld [vmem:[#allocation2 + $0x9c] sm:$0xff]
          %v3596 = vld [vmem:[#allocation2 + $0xa4] sm:$0xf]
          %v3597 = vld [vmem:[#allocation2 + $0xa8] sm:$0xff]
          %v3598 = vld [vmem:[#allocation2 + $0xb0] sm:$0xf]
          %v3599 = vld [vmem:[#allocation2 + $0xb4] sm:$0xff]
          %v3600 = vld [vmem:[#allocation2 + $0xbc] sm:$0xf]
          %v3601 = vld [vmem:[%s506] sm:$0xf]
          %v3602 = vld [vmem:[%s506 + $0x4] sm:$0xf]
          %v3603 = vld [vmem:[%s506 + $0x8] sm:$0xf]
          %v3604 = vld [vmem:[%s506 + $0xc] sm:$0xf]
          %v3605 = vld [vmem:[%s506 + $0x10] sm:$0xf]
          %v3606 = vld [vmem:[%s506 + $0x14] sm:$0xf]
          %v3607 = vld [vmem:[%s506 + $0x18] sm:$0xf]
          %v3608 = vld [vmem:[%s506 + $0x1c] sm:$0xf]
          %v3609 = vld [vmem:[%s506 + $0x20] sm:$0xf]
          %v3610 = vld [vmem:[%s506 + $0x24] sm:$0xf]
          %v3611 = vld [vmem:[%s506 + $0x28] sm:$0xf]
          %v3612 = vld [vmem:[%s506 + $0x2c] sm:$0xf]
          %v3613 = vld [vmem:[%s506 + $0x30] sm:$0xf]
          %v3614 = vld [vmem:[%s506 + $0x34] sm:$0xf]
          %v3615 = vld [vmem:[%s506 + $0x38] sm:$0xf]
          %v3616 = vld [vmem:[%s506 + $0x3c] sm:$0xf]
          %v3617 = vld [vmem:[%s506 + $0x40] sm:$0xf]
          %v3618 = vld [vmem:[%s506 + $0x44] sm:$0xf]
          %v3619 = vld [vmem:[%s506 + $0x48] sm:$0xf]
          %v3620 = vld [vmem:[%s506 + $0x4c] sm:$0xf]
          %v3621 = vld [vmem:[%s506 + $0x50] sm:$0xf]
          %v3622 = vld [vmem:[%s506 + $0x54] sm:$0xf]
          %v3623 = vld [vmem:[%s506 + $0x58] sm:$0xf]
          %v3624 = vld [vmem:[%s506 + $0x5c] sm:$0xf]
          %v3625 = vld [vmem:[%s506 + $0x60] sm:$0xf]
          %v3626 = vld [vmem:[%s506 + $0x64] sm:$0xf]
          %v3627 = vld [vmem:[%s506 + $0x68] sm:$0xf]
          %v3628 = vld [vmem:[%s506 + $0x6c] sm:$0xf]
          %v3629 = vld [vmem:[%s506 + $0x70] sm:$0xf]
          %v3630 = vld [vmem:[%s506 + $0x74] sm:$0xf]
          %v3631 = vld [vmem:[%s506 + $0x78] sm:$0xf]
          %v3632 = vld [vmem:[%s506 + $0x7c] sm:$0xf]
          %v3633 = vld [vmem:[%s506 + $0x80] sm:$0xf]
          %v3634 = vld [vmem:[%s506 + $0x84] sm:$0xf]
          %v3635 = vld [vmem:[%s506 + $0x88] sm:$0xf]
          %v3636 = vld [vmem:[%s506 + $0x8c] sm:$0xf]
          %v3637 = vld [vmem:[%s506 + $0x90] sm:$0xf]
          %v3638 = vld [vmem:[%s506 + $0x94] sm:$0xf]
          %v3639 = vld [vmem:[%s506 + $0x98] sm:$0xf]
          %v3640 = vld [vmem:[%s506 + $0x9c] sm:$0xf]
          %v3641 = vld [vmem:[%s506 + $0xa0] sm:$0xf]
          %v3642 = vld [vmem:[%s506 + $0xa4] sm:$0xf]
          %v3643 = vld [vmem:[%s506 + $0xa8] sm:$0xf]
          %v3644 = vld [vmem:[%s506 + $0xac] sm:$0xf]
          %v3645 = vld [vmem:[%s506 + $0xb0] sm:$0xf]
          %v3646 = vld [vmem:[%s506 + $0xb4] sm:$0xf]
          %v3647 = vld [vmem:[%s506 + $0xb8] sm:$0xf]
          %v3648 = vld [vmem:[%s506 + $0xbc] sm:$0xf]
          %v3681 = vunpack.c.l.b16 %v3569
          %v3682 = vunpack.c.h.b16 %v3569
          %v3683 = vunpack.c.l.b16 %v3570
          %v3684 = vunpack.c.l.b16 %v3571
          %v3685 = vunpack.c.h.b16 %v3571
          %v3686 = vunpack.c.l.b16 %v3572
          %v3687 = vunpack.c.l.b16 %v3573
          %v3688 = vunpack.c.h.b16 %v3573
          %v3689 = vunpack.c.l.b16 %v3574
          %v3690 = vunpack.c.l.b16 %v3575
          %v3691 = vunpack.c.h.b16 %v3575
          %v3692 = vunpack.c.l.b16 %v3576
          %v3693 = vunpack.c.l.b16 %v3577
          %v3694 = vunpack.c.h.b16 %v3577
          %v3695 = vunpack.c.l.b16 %v3578
          %v3696 = vunpack.c.l.b16 %v3579
          %v3697 = vunpack.c.h.b16 %v3579
          %v3698 = vunpack.c.l.b16 %v3580
          %v3699 = vunpack.c.l.b16 %v3581
          %v3700 = vunpack.c.h.b16 %v3581
          %v3701 = vunpack.c.l.b16 %v3582
          %v3702 = vunpack.c.l.b16 %v3583
          %v3703 = vunpack.c.h.b16 %v3583
          %v3704 = vunpack.c.l.b16 %v3584
          %v3705 = vunpack.c.l.b16 %v3585
          %v3706 = vunpack.c.h.b16 %v3585
          %v3707 = vunpack.c.l.b16 %v3586
          %v3708 = vunpack.c.l.b16 %v3587
          %v3709 = vunpack.c.h.b16 %v3587
          %v3710 = vunpack.c.l.b16 %v3588
          %v3711 = vunpack.c.l.b16 %v3589
          %v3712 = vunpack.c.h.b16 %v3589
          %v3713 = vunpack.c.l.b16 %v3590
          %v3714 = vunpack.c.l.b16 %v3591
          %v3715 = vunpack.c.h.b16 %v3591
          %v3716 = vunpack.c.l.b16 %v3592
          %v3717 = vunpack.c.l.b16 %v3593
          %v3718 = vunpack.c.h.b16 %v3593
          %v3719 = vunpack.c.l.b16 %v3594
          %v3720 = vunpack.c.l.b16 %v3595
          %v3721 = vunpack.c.h.b16 %v3595
          %v3722 = vunpack.c.l.b16 %v3596
          %v3723 = vunpack.c.l.b16 %v3597
          %v3724 = vunpack.c.h.b16 %v3597
          %v3725 = vunpack.c.l.b16 %v3598
          %v3726 = vunpack.c.l.b16 %v3599
          %v3727 = vunpack.c.h.b16 %v3599
          %v3728 = vunpack.c.l.b16 %v3600
          %v3729 = vpack.c.b16 %v3684, %v3681
          %v3730 = vpack.c.b16 %v3685, %v3682
          %v3731 = vpack.c.b16 %v3686, %v3683
          %v3732 = vpack.c.b16 %v3690, %v3687
          %v3733 = vpack.c.b16 %v3691, %v3688
          %v3734 = vpack.c.b16 %v3692, %v3689
          %v3735 = vpack.c.b16 %v3696, %v3693
          %v3736 = vpack.c.b16 %v3697, %v3694
          %v3737 = vpack.c.b16 %v3698, %v3695
          %v3738 = vpack.c.b16 %v3702, %v3699
          %v3739 = vpack.c.b16 %v3703, %v3700
          %v3740 = vpack.c.b16 %v3704, %v3701
          %v3741 = vpack.c.b16 %v3708, %v3705
          %v3742 = vpack.c.b16 %v3709, %v3706
          %v3743 = vpack.c.b16 %v3710, %v3707
          %v3744 = vpack.c.b16 %v3714, %v3711
          %v3745 = vpack.c.b16 %v3715, %v3712
          %v3746 = vpack.c.b16 %v3716, %v3713
          %v3747 = vpack.c.b16 %v3720, %v3717
          %v3748 = vpack.c.b16 %v3721, %v3718
          %v3749 = vpack.c.b16 %v3722, %v3719
          %v3750 = vpack.c.b16 %v3726, %v3723
          %v3751 = vpack.c.b16 %v3727, %v3724
          %v3752 = vpack.c.b16 %v3728, %v3725
          %v3825 = vunpack.c.l.b16 %v3601
          %v3826 = vunpack.c.l.b16 %v3602
          %v3827 = vunpack.c.l.b16 %v3603
          %v3828 = vunpack.c.l.b16 %v3604
          %v3829 = vunpack.c.l.b16 %v3605
          %v3830 = vunpack.c.l.b16 %v3606
          %v3831 = vunpack.c.l.b16 %v3607
          %v3832 = vunpack.c.l.b16 %v3608
          %v3833 = vunpack.c.l.b16 %v3609
          %v3834 = vunpack.c.l.b16 %v3610
          %v3835 = vunpack.c.l.b16 %v3611
          %v3836 = vunpack.c.l.b16 %v3612
          %v3837 = vunpack.c.l.b16 %v3613
          %v3838 = vunpack.c.l.b16 %v3614
          %v3839 = vunpack.c.l.b16 %v3615
          %v3840 = vunpack.c.l.b16 %v3616
          %v3841 = vunpack.c.l.b16 %v3617
          %v3842 = vunpack.c.l.b16 %v3618
          %v3843 = vunpack.c.l.b16 %v3619
          %v3844 = vunpack.c.l.b16 %v3620
          %v3845 = vunpack.c.l.b16 %v3621
          %v3846 = vunpack.c.l.b16 %v3622
          %v3847 = vunpack.c.l.b16 %v3623
          %v3848 = vunpack.c.l.b16 %v3624
          %v3849 = vunpack.c.l.b16 %v3625
          %v3850 = vunpack.c.l.b16 %v3626
          %v3851 = vunpack.c.l.b16 %v3627
          %v3852 = vunpack.c.l.b16 %v3628
          %v3853 = vunpack.c.l.b16 %v3629
          %v3854 = vunpack.c.l.b16 %v3630
          %v3855 = vunpack.c.l.b16 %v3631
          %v3856 = vunpack.c.l.b16 %v3632
          %v3857 = vunpack.c.l.b16 %v3633
          %v3858 = vunpack.c.l.b16 %v3634
          %v3859 = vunpack.c.l.b16 %v3635
          %v3860 = vunpack.c.l.b16 %v3636
          %v3861 = vunpack.c.l.b16 %v3637
          %v3862 = vunpack.c.l.b16 %v3638
          %v3863 = vunpack.c.l.b16 %v3639
          %v3864 = vunpack.c.l.b16 %v3640
          %v3865 = vunpack.c.l.b16 %v3641
          %v3866 = vunpack.c.l.b16 %v3642
          %v3867 = vunpack.c.l.b16 %v3643
          %v3868 = vunpack.c.l.b16 %v3644
          %v3869 = vunpack.c.l.b16 %v3645
          %v3870 = vunpack.c.l.b16 %v3646
          %v3871 = vunpack.c.l.b16 %v3647
          %v3872 = vunpack.c.l.b16 %v3648
          %v3873 = vpack.c.b16 %v3826, %v3825
          %v3874 = vpack.c.b16 %v3828, %v3827
          %v3875 = vpack.c.b16 %v3830, %v3829
          %v3876 = vpack.c.b16 %v3832, %v3831
          %v3877 = vpack.c.b16 %v3834, %v3833
          %v3878 = vpack.c.b16 %v3836, %v3835
          %v3879 = vpack.c.b16 %v3838, %v3837
          %v3880 = vpack.c.b16 %v3840, %v3839
          %v3881 = vpack.c.b16 %v3842, %v3841
          %v3882 = vpack.c.b16 %v3844, %v3843
          %v3883 = vpack.c.b16 %v3846, %v3845
          %v3884 = vpack.c.b16 %v3848, %v3847
          %v3885 = vpack.c.b16 %v3850, %v3849
          %v3886 = vpack.c.b16 %v3852, %v3851
          %v3887 = vpack.c.b16 %v3854, %v3853
          %v3888 = vpack.c.b16 %v3856, %v3855
          %v3889 = vpack.c.b16 %v3858, %v3857
          %v3890 = vpack.c.b16 %v3860, %v3859
          %v3891 = vpack.c.b16 %v3862, %v3861
          %v3892 = vpack.c.b16 %v3864, %v3863
          %v3893 = vpack.c.b16 %v3866, %v3865
          %v3894 = vpack.c.b16 %v3868, %v3867
          %v3895 = vpack.c.b16 %v3870, %v3869
          %v3896 = vpack.c.b16 %v3872, %v3871
          %3921 = vmatprep.subr.bf16.mxu0 0
          %3922 = vmatpush1.bf16.msra.mxu0 %v3880
          %3923 = vmatprep.subr.bf16.mxu0 0
          %3924 = vmatpush1.bf16.msra.mxu0 %v3879
          %3925 = vmatprep.subr.bf16.mxu0 0
          %3926 = vmatpush1.bf16.msra.mxu0 %v3878
          %3927 = vmatprep.subr.bf16.mxu0 0
          %3928 = vmatpush1.bf16.msra.mxu0 %v3877
          %3929 = vmatprep.subr.bf16.mxu0 0
          %3930 = vmatpush1.bf16.msra.mxu0 %v3876
          %3931 = vmatprep.subr.bf16.mxu0 0
          %3932 = vmatpush1.bf16.msra.mxu0 %v3875
          %3933 = vmatprep.subr.bf16.mxu0 0
          %3934 = vmatpush1.bf16.msra.mxu0 %v3874
          %3935 = vmatprep.subr.bf16.mxu0 0
          %3936 = vmatpush1.bf16.msra.mxu0 %v3873
          %3937 = vmatprep.subr.bf16.mxu0 0
          %3938 = vmatpush2.bf16.msra.mxu0 %v3888
          %3939 = vmatprep.subr.bf16.mxu0 0
          %3940 = vmatpush2.bf16.msra.mxu0 %v3887
          %3941 = vmatprep.subr.bf16.mxu0 0
          %3942 = vmatpush2.bf16.msra.mxu0 %v3886
          %3943 = vmatprep.subr.bf16.mxu0 0
          %3944 = vmatpush2.bf16.msra.mxu0 %v3885
          %3945 = vmatprep.subr.bf16.mxu0 0
          %3946 = vmatpush2.bf16.msra.mxu0 %v3884
          %3947 = vmatprep.subr.bf16.mxu0 0
          %3948 = vmatpush2.bf16.msra.mxu0 %v3883
          %3949 = vmatprep.subr.bf16.mxu0 0
          %3950 = vmatpush2.bf16.msra.mxu0 %v3882
          %3951 = vmatprep.subr.bf16.mxu0 0
          %3952 = vmatpush2.bf16.msra.mxu0 %v3881
          %3953 = vmatprep.mubr.bf16.mxu0 %v3730
          %3954 = vmatmul.mubr.bf16.gmra.mxu0 %v3729
          %v3955 = vpop.f32.mrf.mxu0
          %v3956 = vadd.f32 0.0, %v3955
          %v3957 = vpop.f32.mrf.mxu0
          %v3958 = vpop.f32.mrf.mxu0
          %v3959 = vadd.f32 0.0, %v3958
          %v3960 = vpop.f32.mrf.mxu0
          %3961 = vmatprep.mubr.bf16.mxu0 %v3733
          %3962 = vmatmul.mubr.bf16.gmra.mxu0 %v3732
          %v3963 = vpop.f32.mrf.mxu0
          %v3964 = vadd.f32 0.0, %v3963
          %v3965 = vpop.f32.mrf.mxu0
          %v3966 = vpop.f32.mrf.mxu0
          %v3967 = vadd.f32 0.0, %v3966
          %v3968 = vpop.f32.mrf.mxu0
          %3969 = vmatprep.mubr.bf16.mxu0 %v3736
          %3970 = vmatmul.mubr.bf16.gmra.mxu0 %v3735
          %v3971 = vpop.f32.mrf.mxu0
          %v3972 = vadd.f32 0.0, %v3971
          %v3973 = vpop.f32.mrf.mxu0
          %v3974 = vpop.f32.mrf.mxu0
          %v3975 = vadd.f32 0.0, %v3974
          %v3976 = vpop.f32.mrf.mxu0
          %3977 = vmatprep.mubr.bf16.mxu0 %v3739
          %3978 = vmatmul.mubr.bf16.gmra.mxu0 %v3738
          %v3979 = vpop.f32.mrf.mxu0
          %v3980 = vadd.f32 0.0, %v3979
          %v3981 = vpop.f32.mrf.mxu0
          %v3982 = vpop.f32.mrf.mxu0
          %v3983 = vadd.f32 0.0, %v3982
          %v3984 = vpop.f32.mrf.mxu0
          %3985 = vmatprep.mubr.bf16.mxu0 %v3742
          %3986 = vmatmul.mubr.bf16.gmra.mxu0 %v3741
          %v3987 = vpop.f32.mrf.mxu0
          %v3988 = vadd.f32 0.0, %v3987
          %v3989 = vpop.f32.mrf.mxu0
          %v3990 = vpop.f32.mrf.mxu0
          %v3991 = vadd.f32 0.0, %v3990
          %v3992 = vpop.f32.mrf.mxu0
          %3993 = vmatprep.mubr.bf16.mxu0 %v3745
          %3994 = vmatmul.mubr.bf16.gmra.mxu0 %v3744
          %v3995 = vpop.f32.mrf.mxu0
          %v3996 = vadd.f32 0.0, %v3995
          %v3997 = vpop.f32.mrf.mxu0
          %v3998 = vpop.f32.mrf.mxu0
          %v3999 = vadd.f32 0.0, %v3998
          %v4000 = vpop.f32.mrf.mxu0
          %4001 = vmatprep.mubr.bf16.mxu0 %v3748
          %4002 = vmatmul.mubr.bf16.gmra.mxu0 %v3747
          %v4003 = vpop.f32.mrf.mxu0
          %v4004 = vadd.f32 0.0, %v4003
          %v4005 = vpop.f32.mrf.mxu0
          %v4006 = vpop.f32.mrf.mxu0
          %v4007 = vadd.f32 0.0, %v4006
          %v4008 = vpop.f32.mrf.mxu0
          %4009 = vmatprep.mubr.bf16.mxu0 %v3751
          %4010 = vmatmul.mubr.bf16.gmra.mxu0 %v3750
          %v4011 = vpop.f32.mrf.mxu0
          %v4012 = vadd.f32 0.0, %v4011
          %v4013 = vpop.f32.mrf.mxu0
          %v4014 = vpop.f32.mrf.mxu0
          %v4015 = vadd.f32 0.0, %v4014
          %v4016 = vpop.f32.mrf.mxu0
          %4017 = vdwg.mxu0
          %4018 = vmatprep.subr.bf16.mxu0 0
          %4019 = vmatpush1.bf16.msra.mxu0 %v3896
          %4020 = vmatprep.subr.bf16.mxu0 0
          %4021 = vmatpush1.bf16.msra.mxu0 %v3895
          %4022 = vmatprep.subr.bf16.mxu0 0
          %4023 = vmatpush1.bf16.msra.mxu0 %v3894
          %4024 = vmatprep.subr.bf16.mxu0 0
          %4025 = vmatpush1.bf16.msra.mxu0 %v3893
          %4026 = vmatprep.subr.bf16.mxu0 0
          %4027 = vmatpush1.bf16.msra.mxu0 %v3892
          %4028 = vmatprep.subr.bf16.mxu0 0
          %4029 = vmatpush1.bf16.msra.mxu0 %v3891
          %4030 = vmatprep.subr.bf16.mxu0 0
          %4031 = vmatpush1.bf16.msra.mxu0 %v3890
          %4032 = vmatprep.subr.bf16.mxu0 0
          %4033 = vmatpush1.bf16.msra.mxu0 %v3889
          %4034 = vmatprep.subr.bf16.mxu0 0
          %4035 = vmatpush2.bf16.msra.mxu0 0
          %4036 = vmatprep.subr.bf16.mxu0 0
          %4037 = vmatpush2.bf16.msra.mxu0 0
          %4038 = vmatprep.subr.bf16.mxu0 0
          %4039 = vmatpush2.bf16.msra.mxu0 0
          %4040 = vmatprep.subr.bf16.mxu0 0
          %4041 = vmatpush2.bf16.msra.mxu0 0
          %4042 = vmatprep.subr.bf16.mxu0 0
          %4043 = vmatpush2.bf16.msra.mxu0 0
          %4044 = vmatprep.subr.bf16.mxu0 0
          %4045 = vmatpush2.bf16.msra.mxu0 0
          %4046 = vmatprep.subr.bf16.mxu0 0
          %4047 = vmatpush2.bf16.msra.mxu0 0
          %4048 = vmatprep.subr.bf16.mxu0 0
          %4049 = vmatpush2.bf16.msra.mxu0 0
          %4050 = vmatprep.mubr.bf16.mxu0 0
          %4051 = vmatmul.mubr.bf16.gmra.mxu0 %v3731
          %v4052 = vpop.f32.mrf.mxu0
          %v4053 = vadd.f32 %v3956, %v4052
          %v4054 = vpop.f32.mrf.mxu0
          %v4055 = vpop.f32.mrf.mxu0
          %v4056 = vadd.f32 %v3959, %v4055
          %v4057 = vpop.f32.mrf.mxu0
          %4058 = vmatprep.mubr.bf16.mxu0 0
          %4059 = vmatmul.mubr.bf16.gmra.mxu0 %v3734
          %v4060 = vpop.f32.mrf.mxu0
          %v4061 = vadd.f32 %v3964, %v4060
          %v4062 = vpop.f32.mrf.mxu0
          %v4063 = vpop.f32.mrf.mxu0
          %v4064 = vadd.f32 %v3967, %v4063
          %v4065 = vpop.f32.mrf.mxu0
          %4066 = vmatprep.mubr.bf16.mxu0 0
          %4067 = vmatmul.mubr.bf16.gmra.mxu0 %v3737
          %v4068 = vpop.f32.mrf.mxu0
          %v4069 = vadd.f32 %v3972, %v4068
          %v4070 = vpop.f32.mrf.mxu0
          %v4071 = vpop.f32.mrf.mxu0
          %v4072 = vadd.f32 %v3975, %v4071
          %v4073 = vpop.f32.mrf.mxu0
          %4074 = vmatprep.mubr.bf16.mxu0 0
          %4075 = vmatmul.mubr.bf16.gmra.mxu0 %v3740
          %v4076 = vpop.f32.mrf.mxu0
          %v4077 = vadd.f32 %v3980, %v4076
          %v4078 = vpop.f32.mrf.mxu0
          %v4079 = vpop.f32.mrf.mxu0
          %v4080 = vadd.f32 %v3983, %v4079
          %v4081 = vpop.f32.mrf.mxu0
          %4082 = vmatprep.mubr.bf16.mxu0 0
          %4083 = vmatmul.mubr.bf16.gmra.mxu0 %v3743
          %v4084 = vpop.f32.mrf.mxu0
          %v4085 = vadd.f32 %v3988, %v4084
          %v4086 = vpop.f32.mrf.mxu0
          %v4087 = vpop.f32.mrf.mxu0
          %v4088 = vadd.f32 %v3991, %v4087
          %v4089 = vpop.f32.mrf.mxu0
          %4090 = vmatprep.mubr.bf16.mxu0 0
          %4091 = vmatmul.mubr.bf16.gmra.mxu0 %v3746
          %v4092 = vpop.f32.mrf.mxu0
          %v4093 = vadd.f32 %v3996, %v4092
          %v4094 = vpop.f32.mrf.mxu0
          %v4095 = vpop.f32.mrf.mxu0
          %v4096 = vadd.f32 %v3999, %v4095
          %v4097 = vpop.f32.mrf.mxu0
          %4098 = vmatprep.mubr.bf16.mxu0 0
          %4099 = vmatmul.mubr.bf16.gmra.mxu0 %v3749
          %v4100 = vpop.f32.mrf.mxu0
          %v4101 = vadd.f32 %v4004, %v4100
          %v4102 = vpop.f32.mrf.mxu0
          %v4103 = vpop.f32.mrf.mxu0
          %v4104 = vadd.f32 %v4007, %v4103
          %v4105 = vpop.f32.mrf.mxu0
          %4106 = vmatprep.mubr.bf16.mxu0 0
          %4107 = vmatmul.mubr.bf16.gmra.mxu0 %v3752
          %v4108 = vpop.f32.mrf.mxu0
          %v4109 = vadd.f32 %v4012, %v4108
          %v4110 = vpop.f32.mrf.mxu0
          %v4111 = vpop.f32.mrf.mxu0
          %v4112 = vadd.f32 %v4015, %v4111
          %v4113 = vpop.f32.mrf.mxu0
          %4114 = vdwg.mxu0
          %v4116 = vlaneseq
          %v4117 = vshrl.u32 %v4116, 7
          %v4118 = vsub.s32 0, %v4117
          %v4119 = vrot.slane %v602, %v4118
          %v4121 = vadd.f32 %v4053, %v4119
          %v4122 = vadd.f32 %v4056, %v4119
          %v4123 = vadd.f32 %v4061, %v4119
          %v4124 = vadd.f32 %v4064, %v4119
          %v4125 = vadd.f32 %v4069, %v4119
          %v4126 = vadd.f32 %v4072, %v4119
          %v4127 = vadd.f32 %v4077, %v4119
          %v4128 = vadd.f32 %v4080, %v4119
          %v4129 = vadd.f32 %v4085, %v4119
          %v4130 = vadd.f32 %v4088, %v4119
          %v4131 = vadd.f32 %v4093, %v4119
          %v4132 = vadd.f32 %v4096, %v4119
          %v4133 = vadd.f32 %v4101, %v4119
          %v4134 = vadd.f32 %v4104, %v4119
          %v4135 = vadd.f32 %v4109, %v4119
          %v4136 = vadd.f32 %v4112, %v4119
          %v4137 = vadd.f32 %v4121, %v4122
          %v4138 = vadd.f32 %v4137, %v4123
          %v4139 = vadd.f32 %v4138, %v4124
          %v4140 = vadd.f32 %v4139, %v4125
          %v4141 = vadd.f32 %v4140, %v4126
          %v4142 = vadd.f32 %v4141, %v4127
          %v4143 = vadd.f32 %v4142, %v4128
          %v4144 = vadd.f32 %v4143, %v4129
          %v4145 = vadd.f32 %v4144, %v4130
          %v4146 = vadd.f32 %v4145, %v4131
          %v4147 = vadd.f32 %v4146, %v4132
          %v4148 = vadd.f32 %v4147, %v4133
          %v4149 = vadd.f32 %v4148, %v4134
          %v4150 = vadd.f32 %v4149, %v4135
          %v4151 = vadd.f32 %v4150, %v4136
          %v4152 = vrot.slane %v4151, 4
          %v4153 = vadd.f32 %v4151, %v4152
          %v4154 = vrot.slane %v4153, 2
          %v4155 = vadd.f32 %v4153, %v4154
          %v4156 = vrot.slane %v4155, 1
          %v4157 = vadd.f32 %v4155, %v4156
          %v4158 = vmul.f32 %v4157, %v3117
          %v4159 = vmul.f32 %v4121, %v4121
          %v4160 = vmul.f32 %v4122, %v4122
          %v4161 = vmul.f32 %v4123, %v4123
          %v4162 = vmul.f32 %v4124, %v4124
          %v4163 = vmul.f32 %v4125, %v4125
          %v4164 = vmul.f32 %v4126, %v4126
          %v4165 = vmul.f32 %v4127, %v4127
          %v4166 = vmul.f32 %v4128, %v4128
          %v4167 = vmul.f32 %v4129, %v4129
          %v4168 = vmul.f32 %v4130, %v4130
          %v4169 = vmul.f32 %v4131, %v4131
          %v4170 = vmul.f32 %v4132, %v4132
          %v4171 = vmul.f32 %v4133, %v4133
          %v4172 = vmul.f32 %v4134, %v4134
          %v4173 = vmul.f32 %v4135, %v4135
          %v4174 = vmul.f32 %v4136, %v4136
          %v4175 = vadd.f32 %v4159, %v4160
          %v4176 = vadd.f32 %v4175, %v4161
          %v4177 = vadd.f32 %v4176, %v4162
          %v4178 = vadd.f32 %v4177, %v4163
          %v4179 = vadd.f32 %v4178, %v4164
          %v4180 = vadd.f32 %v4179, %v4165
          %v4181 = vadd.f32 %v4180, %v4166
          %v4182 = vadd.f32 %v4181, %v4167
          %v4183 = vadd.f32 %v4182, %v4168
          %v4184 = vadd.f32 %v4183, %v4169
          %v4185 = vadd.f32 %v4184, %v4170
          %v4186 = vadd.f32 %v4185, %v4171
          %v4187 = vadd.f32 %v4186, %v4172
          %v4188 = vadd.f32 %v4187, %v4173
          %v4189 = vadd.f32 %v4188, %v4174
          %v4190 = vrot.slane %v4189, 4
          %v4191 = vadd.f32 %v4189, %v4190
          %v4192 = vrot.slane %v4191, 2
          %v4193 = vadd.f32 %v4191, %v4192
          %v4194 = vrot.slane %v4193, 1
          %v4195 = vadd.f32 %v4193, %v4194
          %v4196 = vmul.f32 %v4195, %v3117
          %v4197 = vmul.f32 %v4158, %v4158
          %v4198 = vsub.f32 %v4196, %v4197
          %v4199 = vmax.f32 %v4198, 0.0
          %v4200 = vadd.f32 %v4199, 1e-05
          %v4201 = vrsqrt.pop %v4200
          %v4202 = vmul.f32 %v600, %v4201
          %v4203 = vmul.f32 %v4158, %v4202
          %v4204 = vsub.f32 %v601, %v4203
          %v4206 = vlaneseq
          %v4207 = vshrl.u32 %v4206, 7
          %v4208 = vsub.s32 0, %v4207
          %v4209 = vrot.slane %v4202, %v4208
          %v4211 = vmul.f32 %v4121, %v4209
          %v4212 = vmul.f32 %v4122, %v4209
          %v4213 = vmul.f32 %v4123, %v4209
          %v4214 = vmul.f32 %v4124, %v4209
          %v4215 = vmul.f32 %v4125, %v4209
          %v4216 = vmul.f32 %v4126, %v4209
          %v4217 = vmul.f32 %v4127, %v4209
          %v4218 = vmul.f32 %v4128, %v4209
          %v4219 = vmul.f32 %v4129, %v4209
          %v4220 = vmul.f32 %v4130, %v4209
          %v4221 = vmul.f32 %v4131, %v4209
          %v4222 = vmul.f32 %v4132, %v4209
          %v4223 = vmul.f32 %v4133, %v4209
          %v4224 = vmul.f32 %v4134, %v4209
          %v4225 = vmul.f32 %v4135, %v4209
          %v4226 = vmul.f32 %v4136, %v4209
          %v4228 = vlaneseq
          %v4229 = vshrl.u32 %v4228, 7
          %v4230 = vsub.s32 0, %v4229
          %v4231 = vrot.slane %v4204, %v4230
          %v4233 = vadd.f32 %v4211, %v4231
          %v4234 = vadd.f32 %v4212, %v4231
          %v4235 = vadd.f32 %v4213, %v4231
          %v4236 = vadd.f32 %v4214, %v4231
          %v4237 = vadd.f32 %v4215, %v4231
          %v4238 = vadd.f32 %v4216, %v4231
          %v4239 = vadd.f32 %v4217, %v4231
          %v4240 = vadd.f32 %v4218, %v4231
          %v4241 = vadd.f32 %v4219, %v4231
          %v4242 = vadd.f32 %v4220, %v4231
          %v4243 = vadd.f32 %v4221, %v4231
          %v4244 = vadd.f32 %v4222, %v4231
          %v4245 = vadd.f32 %v4223, %v4231
          %v4246 = vadd.f32 %v4224, %v4231
          %v4247 = vadd.f32 %v4225, %v4231
          %v4248 = vadd.f32 %v4226, %v4231
          %v4249 = vmul.f32 %v705, %v4233
          %v4250 = vmul.f32 %v709, %v4234
          %v4251 = vmul.f32 %v713, %v4235
          %v4252 = vmul.f32 %v717, %v4236
          %v4253 = vmul.f32 %v721, %v4237
          %v4254 = vmul.f32 %v725, %v4238
          %v4255 = vmul.f32 %v729, %v4239
          %v4256 = vmul.f32 %v733, %v4240
          %v4257 = vmul.f32 %v740, %v4241
          %v4258 = vmul.f32 %v744, %v4242
          %v4259 = vmul.f32 %v748, %v4243
          %v4260 = vmul.f32 %v752, %v4244
          %v4261 = vmul.f32 %v756, %v4245
          %v4262 = vmul.f32 %v760, %v4246
          %v4263 = vmul.f32 %v764, %v4247
          %v4264 = vmul.f32 %v768, %v4248
          %v4265 = vadd.f32 %v4249, %v868
          %v4266 = vadd.f32 %v4250, %v872
          %v4267 = vadd.f32 %v4251, %v876
          %v4268 = vadd.f32 %v4252, %v880
          %v4269 = vadd.f32 %v4253, %v884
          %v4270 = vadd.f32 %v4254, %v888
          %v4271 = vadd.f32 %v4255, %v892
          %v4272 = vadd.f32 %v4256, %v896
          %v4273 = vadd.f32 %v4257, %v903
          %v4274 = vadd.f32 %v4258, %v907
          %v4275 = vadd.f32 %v4259, %v911
          %v4276 = vadd.f32 %v4260, %v915
          %v4277 = vadd.f32 %v4261, %v919
          %v4278 = vadd.f32 %v4262, %v923
          %v4279 = vadd.f32 %v4263, %v927
          %v4280 = vadd.f32 %v4264, %v931
          %v4281 = vmax.f32 %v4265, 0.0
          %v4282 = vmax.f32 %v4266, 0.0
          %v4283 = vmax.f32 %v4267, 0.0
          %v4284 = vmax.f32 %v4268, 0.0
          %v4285 = vmax.f32 %v4269, 0.0
          %v4286 = vmax.f32 %v4270, 0.0
          %v4287 = vmax.f32 %v4271, 0.0
          %v4288 = vmax.f32 %v4272, 0.0
          %v4289 = vmax.f32 %v4273, 0.0
          %v4290 = vmax.f32 %v4274, 0.0
          %v4291 = vmax.f32 %v4275, 0.0
          %v4292 = vmax.f32 %v4276, 0.0
          %v4293 = vmax.f32 %v4277, 0.0
          %v4294 = vmax.f32 %v4278, 0.0
          %v4295 = vmax.f32 %v4279, 0.0
          %v4296 = vmax.f32 %v4280, 0.0
          %v4297 = vrot.slane %v4281, 4
          %v4298 = vrot.slane %v4282, 4
          %v4299 = vrot.slane %v4283, 4
          %v4300 = vrot.slane %v4284, 4
          %v4301 = vrot.slane %v4285, 4
          %v4302 = vrot.slane %v4286, 4
          %v4303 = vrot.slane %v4287, 4
          %v4304 = vrot.slane %v4288, 4
          %v4305 = vrot.slane %v4289, 4
          %v4306 = vrot.slane %v4290, 4
          %v4307 = vrot.slane %v4291, 4
          %v4308 = vrot.slane %v4292, 4
          %v4309 = vrot.slane %v4293, 4
          %v4310 = vrot.slane %v4294, 4
          %v4311 = vrot.slane %v4295, 4
          %v4312 = vrot.slane %v4296, 4
          %vm4313 = vcmp.lt.s32.totalorder %v3274, 4
          %v4314 = vsel %vm4313, %v4311, %v4312
          %v4315 = vsel %vm4313, %v4310, %v4311
          %v4316 = vsel %vm4313, %v4309, %v4310
          %v4317 = vsel %vm4313, %v4308, %v4309
          %v4318 = vsel %vm4313, %v4307, %v4308
          %v4319 = vsel %vm4313, %v4306, %v4307
          %v4320 = vsel %vm4313, %v4305, %v4306
          %v4321 = vsel %vm4313, %v4304, %v4305
          %v4322 = vsel %vm4313, %v4303, %v4304
          %v4323 = vsel %vm4313, %v4302, %v4303
          %v4324 = vsel %vm4313, %v4301, %v4302
          %v4325 = vsel %vm4313, %v4300, %v4301
          %v4326 = vsel %vm4313, %v4299, %v4300
          %v4327 = vsel %vm4313, %v4298, %v4299
          %v4328 = vsel %vm4313, %v4297, %v4298
          %v4329 = vsel %vm4313, %v4312, %v4297
          %v4330 = vpack.c.bf16 %v4328, %v4329
          %v4331 = vpack.c.bf16 %v4326, %v4327
          %v4332 = vpack.c.bf16 %v4324, %v4325
          %v4333 = vpack.c.bf16 %v4322, %v4323
          %v4334 = vpack.c.bf16 %v4320, %v4321
          %v4335 = vpack.c.bf16 %v4318, %v4319
          %v4336 = vpack.c.bf16 %v4316, %v4317
          %v4337 = vpack.c.bf16 %v4314, %v4315
          %v4346 = vunpack.c.l.b16 %v4330
          %v4347 = vunpack.c.h.b16 %v4330
          %v4348 = vunpack.c.l.b16 %v4331
          %v4349 = vunpack.c.h.b16 %v4331
          %v4350 = vunpack.c.l.b16 %v4332
          %v4351 = vunpack.c.h.b16 %v4332
          %v4352 = vunpack.c.l.b16 %v4333
          %v4353 = vunpack.c.h.b16 %v4333
          %v4354 = vunpack.c.l.b16 %v4334
          %v4355 = vunpack.c.h.b16 %v4334
          %v4356 = vunpack.c.l.b16 %v4335
          %v4357 = vunpack.c.h.b16 %v4335
          %v4358 = vunpack.c.l.b16 %v4336
          %v4359 = vunpack.c.h.b16 %v4336
          %v4360 = vunpack.c.l.b16 %v4337
          %v4361 = vunpack.c.h.b16 %v4337
          %v4362 = vpack.c.b16 %v4346, %v4346
          %v4363 = vpack.c.b16 %v4347, %v4347
          %v4364 = vpack.c.b16 %v4348, %v4348
          %v4365 = vpack.c.b16 %v4349, %v4349
          %v4366 = vpack.c.b16 %v4350, %v4350
          %v4367 = vpack.c.b16 %v4351, %v4351
          %v4368 = vpack.c.b16 %v4352, %v4352
          %v4369 = vpack.c.b16 %v4353, %v4353
          %v4370 = vpack.c.b16 %v4354, %v4354
          %v4371 = vpack.c.b16 %v4355, %v4355
          %v4372 = vpack.c.b16 %v4356, %v4356
          %v4373 = vpack.c.b16 %v4357, %v4357
          %v4374 = vpack.c.b16 %v4358, %v4358
          %v4375 = vpack.c.b16 %v4359, %v4359
          %v4376 = vpack.c.b16 %v4360, %v4360
          %v4377 = vpack.c.b16 %v4361, %v4361
          %4394 = vst [vmem:[#allocation2] sm:$0xf] %v4362
          %4395 = vst [vmem:[#allocation2 + $0xc] sm:$0xf] %v4363
          %4396 = vst [vmem:[#allocation2 + $0x18] sm:$0xf] %v4364
          %4397 = vst [vmem:[#allocation2 + $0x24] sm:$0xf] %v4365
          %4398 = vst [vmem:[#allocation2 + $0x30] sm:$0xf] %v4366
          %4399 = vst [vmem:[#allocation2 + $0x3c] sm:$0xf] %v4367
          %4400 = vst [vmem:[#allocation2 + $0x48] sm:$0xf] %v4368
          %4401 = vst [vmem:[#allocation2 + $0x54] sm:$0xf] %v4369
          %4402 = vst [vmem:[#allocation2 + $0x60] sm:$0xf] %v4370
          %4403 = vst [vmem:[#allocation2 + $0x6c] sm:$0xf] %v4371
          %4404 = vst [vmem:[#allocation2 + $0x78] sm:$0xf] %v4372
          %4405 = vst [vmem:[#allocation2 + $0x84] sm:$0xf] %v4373
          %4406 = vst [vmem:[#allocation2 + $0x90] sm:$0xf] %v4374
          %4407 = vst [vmem:[#allocation2 + $0x9c] sm:$0xf] %v4375
          %4408 = vst [vmem:[#allocation2 + $0xa8] sm:$0xf] %v4376
          %4409 = vst [vmem:[#allocation2 + $0xb4] sm:$0xf] %v4377
          %4410 = vst [vmem:[#allocation2] sm:$0x3] 0
          %4411 = vst [vmem:[#allocation2 + $0x60] sm:$0x3] 0
          %v4412 = vpack.c.bf16 %v4282, %v4281
          %v4413 = vpack.c.bf16 %v4284, %v4283
          %v4414 = vpack.c.bf16 %v4286, %v4285
          %v4415 = vpack.c.bf16 %v4288, %v4287
          %v4416 = vpack.c.bf16 %v4290, %v4289
          %v4417 = vpack.c.bf16 %v4292, %v4291
          %v4418 = vpack.c.bf16 %v4294, %v4293
          %v4419 = vpack.c.bf16 %v4296, %v4295
          %v4428 = vunpack.c.l.b16 %v4412
          %v4429 = vunpack.c.h.b16 %v4412
          %v4430 = vunpack.c.l.b16 %v4413
          %v4431 = vunpack.c.h.b16 %v4413
          %v4432 = vunpack.c.l.b16 %v4414
          %v4433 = vunpack.c.h.b16 %v4414
          %v4434 = vunpack.c.l.b16 %v4415
          %v4435 = vunpack.c.h.b16 %v4415
          %v4436 = vunpack.c.l.b16 %v4416
          %v4437 = vunpack.c.h.b16 %v4416
          %v4438 = vunpack.c.l.b16 %v4417
          %v4439 = vunpack.c.h.b16 %v4417
          %v4440 = vunpack.c.l.b16 %v4418
          %v4441 = vunpack.c.h.b16 %v4418
          %v4442 = vunpack.c.l.b16 %v4419
          %v4443 = vunpack.c.h.b16 %v4419
          %v4444 = vpack.c.b16 %v4428, %v4428
          %v4445 = vpack.c.b16 %v4429, %v4429
          %v4446 = vpack.c.b16 %v4430, %v4430
          %v4447 = vpack.c.b16 %v4431, %v4431
          %v4448 = vpack.c.b16 %v4432, %v4432
          %v4449 = vpack.c.b16 %v4433, %v4433
          %v4450 = vpack.c.b16 %v4434, %v4434
          %v4451 = vpack.c.b16 %v4435, %v4435
          %v4452 = vpack.c.b16 %v4436, %v4436
          %v4453 = vpack.c.b16 %v4437, %v4437
          %v4454 = vpack.c.b16 %v4438, %v4438
          %v4455 = vpack.c.b16 %v4439, %v4439
          %v4456 = vpack.c.b16 %v4440, %v4440
          %v4457 = vpack.c.b16 %v4441, %v4441
          %v4458 = vpack.c.b16 %v4442, %v4442
          %v4459 = vpack.c.b16 %v4443, %v4443
          %4476 = vst [vmem:[#allocation2 + $0x4] sm:$0xf] %v4444
          %4477 = vst [vmem:[#allocation2 + $0x10] sm:$0xf] %v4445
          %4478 = vst [vmem:[#allocation2 + $0x1c] sm:$0xf] %v4446
          %4479 = vst [vmem:[#allocation2 + $0x28] sm:$0xf] %v4447
          %4480 = vst [vmem:[#allocation2 + $0x34] sm:$0xf] %v4448
          %4481 = vst [vmem:[#allocation2 + $0x40] sm:$0xf] %v4449
          %4482 = vst [vmem:[#allocation2 + $0x4c] sm:$0xf] %v4450
          %4483 = vst [vmem:[#allocation2 + $0x58] sm:$0xf] %v4451
          %4484 = vst [vmem:[#allocation2 + $0x64] sm:$0xf] %v4452
          %4485 = vst [vmem:[#allocation2 + $0x70] sm:$0xf] %v4453
          %4486 = vst [vmem:[#allocation2 + $0x7c] sm:$0xf] %v4454
          %4487 = vst [vmem:[#allocation2 + $0x88] sm:$0xf] %v4455
          %4488 = vst [vmem:[#allocation2 + $0x94] sm:$0xf] %v4456
          %4489 = vst [vmem:[#allocation2 + $0xa0] sm:$0xf] %v4457
          %4490 = vst [vmem:[#allocation2 + $0xac] sm:$0xf] %v4458
          %4491 = vst [vmem:[#allocation2 + $0xb8] sm:$0xf] %v4459
          %v4492 = vpack.c.bf16 %v4327, %v4328
          %v4493 = vpack.c.bf16 %v4325, %v4326
          %v4494 = vpack.c.bf16 %v4323, %v4324
          %v4495 = vpack.c.bf16 %v4321, %v4322
          %v4496 = vpack.c.bf16 %v4319, %v4320
          %v4497 = vpack.c.bf16 %v4317, %v4318
          %v4498 = vpack.c.bf16 %v4315, %v4316
          %v4499 = vpack.c.bf16 %v4329, %v4314
          %v4508 = vunpack.c.l.b16 %v4492
          %v4509 = vunpack.c.h.b16 %v4492
          %v4510 = vunpack.c.l.b16 %v4493
          %v4511 = vunpack.c.h.b16 %v4493
          %v4512 = vunpack.c.l.b16 %v4494
          %v4513 = vunpack.c.h.b16 %v4494
          %v4514 = vunpack.c.l.b16 %v4495
          %v4515 = vunpack.c.h.b16 %v4495
          %v4516 = vunpack.c.l.b16 %v4496
          %v4517 = vunpack.c.h.b16 %v4496
          %v4518 = vunpack.c.l.b16 %v4497
          %v4519 = vunpack.c.h.b16 %v4497
          %v4520 = vunpack.c.l.b16 %v4498
          %v4521 = vunpack.c.h.b16 %v4498
          %v4522 = vunpack.c.l.b16 %v4499
          %v4523 = vunpack.c.h.b16 %v4499
          %v4524 = vpack.c.b16 %v4508, %v4508
          %v4525 = vpack.c.b16 %v4509, %v4509
          %v4526 = vpack.c.b16 %v4510, %v4510
          %v4527 = vpack.c.b16 %v4511, %v4511
          %v4528 = vpack.c.b16 %v4512, %v4512
          %v4529 = vpack.c.b16 %v4513, %v4513
          %v4530 = vpack.c.b16 %v4514, %v4514
          %v4531 = vpack.c.b16 %v4515, %v4515
          %v4532 = vpack.c.b16 %v4516, %v4516
          %v4533 = vpack.c.b16 %v4517, %v4517
          %v4534 = vpack.c.b16 %v4518, %v4518
          %v4535 = vpack.c.b16 %v4519, %v4519
          %v4536 = vpack.c.b16 %v4520, %v4520
          %v4537 = vpack.c.b16 %v4521, %v4521
          %v4538 = vpack.c.b16 %v4522, %v4522
          %v4539 = vpack.c.b16 %v4523, %v4523
          %4556 = vst [vmem:[#allocation2 + $0x8] sm:$0xf] %v4524
          %4557 = vst [vmem:[#allocation2 + $0x14] sm:$0xf] %v4525
          %4558 = vst [vmem:[#allocation2 + $0x20] sm:$0xf] %v4526
          %4559 = vst [vmem:[#allocation2 + $0x2c] sm:$0xf] %v4527
          %4560 = vst [vmem:[#allocation2 + $0x38] sm:$0xf] %v4528
          %4561 = vst [vmem:[#allocation2 + $0x44] sm:$0xf] %v4529
          %4562 = vst [vmem:[#allocation2 + $0x50] sm:$0xf] %v4530
          %4563 = vst [vmem:[#allocation2 + $0x5c] sm:$0xf] %v4531
          %4564 = vst [vmem:[#allocation2 + $0x68] sm:$0xf] %v4532
          %4565 = vst [vmem:[#allocation2 + $0x74] sm:$0xf] %v4533
          %4566 = vst [vmem:[#allocation2 + $0x80] sm:$0xf] %v4534
          %4567 = vst [vmem:[#allocation2 + $0x8c] sm:$0xf] %v4535
          %4568 = vst [vmem:[#allocation2 + $0x98] sm:$0xf] %v4536
          %4569 = vst [vmem:[#allocation2 + $0xa4] sm:$0xf] %v4537
          %4570 = vst [vmem:[#allocation2 + $0xb0] sm:$0xf] %v4538
          %4571 = vst [vmem:[#allocation2 + $0xbc] sm:$0xf] %v4539
          %4572 = vst [vmem:[#allocation2 + $0x5c] sm:$0xc] 0
          %4573 = vst [vmem:[#allocation2 + $0xbc] sm:$0xc] 0
          %v4574 = vld [vmem:[#allocation2] sm:$0xff]
          %v4575 = vld [vmem:[#allocation2 + $0x8] sm:$0xf]
          %v4576 = vld [vmem:[#allocation2 + $0xc] sm:$0xff]
          %v4577 = vld [vmem:[#allocation2 + $0x14] sm:$0xf]
          %v4578 = vld [vmem:[#allocation2 + $0x18] sm:$0xff]
          %v4579 = vld [vmem:[#allocation2 + $0x20] sm:$0xf]
          %v4580 = vld [vmem:[#allocation2 + $0x24] sm:$0xff]
          %v4581 = vld [vmem:[#allocation2 + $0x2c] sm:$0xf]
          %v4582 = vld [vmem:[#allocation2 + $0x30] sm:$0xff]
          %v4583 = vld [vmem:[#allocation2 + $0x38] sm:$0xf]
          %v4584 = vld [vmem:[#allocation2 + $0x3c] sm:$0xff]
          %v4585 = vld [vmem:[#allocation2 + $0x44] sm:$0xf]
          %v4586 = vld [vmem:[#allocation2 + $0x48] sm:$0xff]
          %v4587 = vld [vmem:[#allocation2 + $0x50] sm:$0xf]
          %v4588 = vld [vmem:[#allocation2 + $0x54] sm:$0xff]
          %v4589 = vld [vmem:[#allocation2 + $0x5c] sm:$0xf]
          %v4590 = vld [vmem:[#allocation2 + $0x60] sm:$0xff]
          %v4591 = vld [vmem:[#allocation2 + $0x68] sm:$0xf]
          %v4592 = vld [vmem:[#allocation2 + $0x6c] sm:$0xff]
          %v4593 = vld [vmem:[#allocation2 + $0x74] sm:$0xf]
          %v4594 = vld [vmem:[#allocation2 + $0x78] sm:$0xff]
          %v4595 = vld [vmem:[#allocation2 + $0x80] sm:$0xf]
          %v4596 = vld [vmem:[#allocation2 + $0x84] sm:$0xff]
          %v4597 = vld [vmem:[#allocation2 + $0x8c] sm:$0xf]
          %v4598 = vld [vmem:[#allocation2 + $0x90] sm:$0xff]
          %v4599 = vld [vmem:[#allocation2 + $0x98] sm:$0xf]
          %v4600 = vld [vmem:[#allocation2 + $0x9c] sm:$0xff]
          %v4601 = vld [vmem:[#allocation2 + $0xa4] sm:$0xf]
          %v4602 = vld [vmem:[#allocation2 + $0xa8] sm:$0xff]
          %v4603 = vld [vmem:[#allocation2 + $0xb0] sm:$0xf]
          %v4604 = vld [vmem:[#allocation2 + $0xb4] sm:$0xff]
          %v4605 = vld [vmem:[#allocation2 + $0xbc] sm:$0xf]
          %v4606 = vld [vmem:[%s514] sm:$0xf]
          %v4607 = vld [vmem:[%s514 + $0x4] sm:$0xf]
          %v4608 = vld [vmem:[%s514 + $0x8] sm:$0xf]
          %v4609 = vld [vmem:[%s514 + $0xc] sm:$0xf]
          %v4610 = vld [vmem:[%s514 + $0x10] sm:$0xf]
          %v4611 = vld [vmem:[%s514 + $0x14] sm:$0xf]
          %v4612 = vld [vmem:[%s514 + $0x18] sm:$0xf]
          %v4613 = vld [vmem:[%s514 + $0x1c] sm:$0xf]
          %v4614 = vld [vmem:[%s514 + $0x20] sm:$0xf]
          %v4615 = vld [vmem:[%s514 + $0x24] sm:$0xf]
          %v4616 = vld [vmem:[%s514 + $0x28] sm:$0xf]
          %v4617 = vld [vmem:[%s514 + $0x2c] sm:$0xf]
          %v4618 = vld [vmem:[%s514 + $0x30] sm:$0xf]
          %v4619 = vld [vmem:[%s514 + $0x34] sm:$0xf]
          %v4620 = vld [vmem:[%s514 + $0x38] sm:$0xf]
          %v4621 = vld [vmem:[%s514 + $0x3c] sm:$0xf]
          %v4622 = vld [vmem:[%s514 + $0x40] sm:$0xf]
          %v4623 = vld [vmem:[%s514 + $0x44] sm:$0xf]
          %v4624 = vld [vmem:[%s514 + $0x48] sm:$0xf]
          %v4625 = vld [vmem:[%s514 + $0x4c] sm:$0xf]
          %v4626 = vld [vmem:[%s514 + $0x50] sm:$0xf]
          %v4627 = vld [vmem:[%s514 + $0x54] sm:$0xf]
          %v4628 = vld [vmem:[%s514 + $0x58] sm:$0xf]
          %v4629 = vld [vmem:[%s514 + $0x5c] sm:$0xf]
          %v4630 = vld [vmem:[%s514 + $0x60] sm:$0xf]
          %v4631 = vld [vmem:[%s514 + $0x64] sm:$0xf]
          %v4632 = vld [vmem:[%s514 + $0x68] sm:$0xf]
          %v4633 = vld [vmem:[%s514 + $0x6c] sm:$0xf]
          %v4634 = vld [vmem:[%s514 + $0x70] sm:$0xf]
          %v4635 = vld [vmem:[%s514 + $0x74] sm:$0xf]
          %v4636 = vld [vmem:[%s514 + $0x78] sm:$0xf]
          %v4637 = vld [vmem:[%s514 + $0x7c] sm:$0xf]
          %v4638 = vld [vmem:[%s514 + $0x80] sm:$0xf]
          %v4639 = vld [vmem:[%s514 + $0x84] sm:$0xf]
          %v4640 = vld [vmem:[%s514 + $0x88] sm:$0xf]
          %v4641 = vld [vmem:[%s514 + $0x8c] sm:$0xf]
          %v4642 = vld [vmem:[%s514 + $0x90] sm:$0xf]
          %v4643 = vld [vmem:[%s514 + $0x94] sm:$0xf]
          %v4644 = vld [vmem:[%s514 + $0x98] sm:$0xf]
          %v4645 = vld [vmem:[%s514 + $0x9c] sm:$0xf]
          %v4646 = vld [vmem:[%s514 + $0xa0] sm:$0xf]
          %v4647 = vld [vmem:[%s514 + $0xa4] sm:$0xf]
          %v4648 = vld [vmem:[%s514 + $0xa8] sm:$0xf]
          %v4649 = vld [vmem:[%s514 + $0xac] sm:$0xf]
          %v4650 = vld [vmem:[%s514 + $0xb0] sm:$0xf]
          %v4651 = vld [vmem:[%s514 + $0xb4] sm:$0xf]
          %v4652 = vld [vmem:[%s514 + $0xb8] sm:$0xf]
          %v4653 = vld [vmem:[%s514 + $0xbc] sm:$0xf]
          %v4686 = vunpack.c.l.b16 %v4574
          %v4687 = vunpack.c.h.b16 %v4574
          %v4688 = vunpack.c.l.b16 %v4575
          %v4689 = vunpack.c.l.b16 %v4576
          %v4690 = vunpack.c.h.b16 %v4576
          %v4691 = vunpack.c.l.b16 %v4577
          %v4692 = vunpack.c.l.b16 %v4578
          %v4693 = vunpack.c.h.b16 %v4578
          %v4694 = vunpack.c.l.b16 %v4579
          %v4695 = vunpack.c.l.b16 %v4580
          %v4696 = vunpack.c.h.b16 %v4580
          %v4697 = vunpack.c.l.b16 %v4581
          %v4698 = vunpack.c.l.b16 %v4582
          %v4699 = vunpack.c.h.b16 %v4582
          %v4700 = vunpack.c.l.b16 %v4583
          %v4701 = vunpack.c.l.b16 %v4584
          %v4702 = vunpack.c.h.b16 %v4584
          %v4703 = vunpack.c.l.b16 %v4585
          %v4704 = vunpack.c.l.b16 %v4586
          %v4705 = vunpack.c.h.b16 %v4586
          %v4706 = vunpack.c.l.b16 %v4587
          %v4707 = vunpack.c.l.b16 %v4588
          %v4708 = vunpack.c.h.b16 %v4588
          %v4709 = vunpack.c.l.b16 %v4589
          %v4710 = vunpack.c.l.b16 %v4590
          %v4711 = vunpack.c.h.b16 %v4590
          %v4712 = vunpack.c.l.b16 %v4591
          %v4713 = vunpack.c.l.b16 %v4592
          %v4714 = vunpack.c.h.b16 %v4592
          %v4715 = vunpack.c.l.b16 %v4593
          %v4716 = vunpack.c.l.b16 %v4594
          %v4717 = vunpack.c.h.b16 %v4594
          %v4718 = vunpack.c.l.b16 %v4595
          %v4719 = vunpack.c.l.b16 %v4596
          %v4720 = vunpack.c.h.b16 %v4596
          %v4721 = vunpack.c.l.b16 %v4597
          %v4722 = vunpack.c.l.b16 %v4598
          %v4723 = vunpack.c.h.b16 %v4598
          %v4724 = vunpack.c.l.b16 %v4599
          %v4725 = vunpack.c.l.b16 %v4600
          %v4726 = vunpack.c.h.b16 %v4600
          %v4727 = vunpack.c.l.b16 %v4601
          %v4728 = vunpack.c.l.b16 %v4602
          %v4729 = vunpack.c.h.b16 %v4602
          %v4730 = vunpack.c.l.b16 %v4603
          %v4731 = vunpack.c.l.b16 %v4604
          %v4732 = vunpack.c.h.b16 %v4604
          %v4733 = vunpack.c.l.b16 %v4605
          %v4734 = vpack.c.b16 %v4689, %v4686
          %v4735 = vpack.c.b16 %v4690, %v4687
          %v4736 = vpack.c.b16 %v4691, %v4688
          %v4737 = vpack.c.b16 %v4695, %v4692
          %v4738 = vpack.c.b16 %v4696, %v4693
          %v4739 = vpack.c.b16 %v4697, %v4694
          %v4740 = vpack.c.b16 %v4701, %v4698
          %v4741 = vpack.c.b16 %v4702, %v4699
          %v4742 = vpack.c.b16 %v4703, %v4700
          %v4743 = vpack.c.b16 %v4707, %v4704
          %v4744 = vpack.c.b16 %v4708, %v4705
          %v4745 = vpack.c.b16 %v4709, %v4706
          %v4746 = vpack.c.b16 %v4713, %v4710
          %v4747 = vpack.c.b16 %v4714, %v4711
          %v4748 = vpack.c.b16 %v4715, %v4712
          %v4749 = vpack.c.b16 %v4719, %v4716
          %v4750 = vpack.c.b16 %v4720, %v4717
          %v4751 = vpack.c.b16 %v4721, %v4718
          %v4752 = vpack.c.b16 %v4725, %v4722
          %v4753 = vpack.c.b16 %v4726, %v4723
          %v4754 = vpack.c.b16 %v4727, %v4724
          %v4755 = vpack.c.b16 %v4731, %v4728
          %v4756 = vpack.c.b16 %v4732, %v4729
          %v4757 = vpack.c.b16 %v4733, %v4730
          %v4830 = vunpack.c.l.b16 %v4606
          %v4831 = vunpack.c.l.b16 %v4607
          %v4832 = vunpack.c.l.b16 %v4608
          %v4833 = vunpack.c.l.b16 %v4609
          %v4834 = vunpack.c.l.b16 %v4610
          %v4835 = vunpack.c.l.b16 %v4611
          %v4836 = vunpack.c.l.b16 %v4612
          %v4837 = vunpack.c.l.b16 %v4613
          %v4838 = vunpack.c.l.b16 %v4614
          %v4839 = vunpack.c.l.b16 %v4615
          %v4840 = vunpack.c.l.b16 %v4616
          %v4841 = vunpack.c.l.b16 %v4617
          %v4842 = vunpack.c.l.b16 %v4618
          %v4843 = vunpack.c.l.b16 %v4619
          %v4844 = vunpack.c.l.b16 %v4620
          %v4845 = vunpack.c.l.b16 %v4621
          %v4846 = vunpack.c.l.b16 %v4622
          %v4847 = vunpack.c.l.b16 %v4623
          %v4848 = vunpack.c.l.b16 %v4624
          %v4849 = vunpack.c.l.b16 %v4625
          %v4850 = vunpack.c.l.b16 %v4626
          %v4851 = vunpack.c.l.b16 %v4627
          %v4852 = vunpack.c.l.b16 %v4628
          %v4853 = vunpack.c.l.b16 %v4629
          %v4854 = vunpack.c.l.b16 %v4630
          %v4855 = vunpack.c.l.b16 %v4631
          %v4856 = vunpack.c.l.b16 %v4632
          %v4857 = vunpack.c.l.b16 %v4633
          %v4858 = vunpack.c.l.b16 %v4634
          %v4859 = vunpack.c.l.b16 %v4635
          %v4860 = vunpack.c.l.b16 %v4636
          %v4861 = vunpack.c.l.b16 %v4637
          %v4862 = vunpack.c.l.b16 %v4638
          %v4863 = vunpack.c.l.b16 %v4639
          %v4864 = vunpack.c.l.b16 %v4640
          %v4865 = vunpack.c.l.b16 %v4641
          %v4866 = vunpack.c.l.b16 %v4642
          %v4867 = vunpack.c.l.b16 %v4643
          %v4868 = vunpack.c.l.b16 %v4644
          %v4869 = vunpack.c.l.b16 %v4645
          %v4870 = vunpack.c.l.b16 %v4646
          %v4871 = vunpack.c.l.b16 %v4647
          %v4872 = vunpack.c.l.b16 %v4648
          %v4873 = vunpack.c.l.b16 %v4649
          %v4874 = vunpack.c.l.b16 %v4650
          %v4875 = vunpack.c.l.b16 %v4651
          %v4876 = vunpack.c.l.b16 %v4652
          %v4877 = vunpack.c.l.b16 %v4653
          %v4878 = vpack.c.b16 %v4831, %v4830
          %v4879 = vpack.c.b16 %v4833, %v4832
          %v4880 = vpack.c.b16 %v4835, %v4834
          %v4881 = vpack.c.b16 %v4837, %v4836
          %v4882 = vpack.c.b16 %v4839, %v4838
          %v4883 = vpack.c.b16 %v4841, %v4840
          %v4884 = vpack.c.b16 %v4843, %v4842
          %v4885 = vpack.c.b16 %v4845, %v4844
          %v4886 = vpack.c.b16 %v4847, %v4846
          %v4887 = vpack.c.b16 %v4849, %v4848
          %v4888 = vpack.c.b16 %v4851, %v4850
          %v4889 = vpack.c.b16 %v4853, %v4852
          %v4890 = vpack.c.b16 %v4855, %v4854
          %v4891 = vpack.c.b16 %v4857, %v4856
          %v4892 = vpack.c.b16 %v4859, %v4858
          %v4893 = vpack.c.b16 %v4861, %v4860
          %v4894 = vpack.c.b16 %v4863, %v4862
          %v4895 = vpack.c.b16 %v4865, %v4864
          %v4896 = vpack.c.b16 %v4867, %v4866
          %v4897 = vpack.c.b16 %v4869, %v4868
          %v4898 = vpack.c.b16 %v4871, %v4870
          %v4899 = vpack.c.b16 %v4873, %v4872
          %v4900 = vpack.c.b16 %v4875, %v4874
          %v4901 = vpack.c.b16 %v4877, %v4876
          %4926 = vmatprep.subr.bf16.mxu0 0
          %4927 = vmatpush1.bf16.msra.mxu0 %v4885
          %4928 = vmatprep.subr.bf16.mxu0 0
          %4929 = vmatpush1.bf16.msra.mxu0 %v4884
          %4930 = vmatprep.subr.bf16.mxu0 0
          %4931 = vmatpush1.bf16.msra.mxu0 %v4883
          %4932 = vmatprep.subr.bf16.mxu0 0
          %4933 = vmatpush1.bf16.msra.mxu0 %v4882
          %4934 = vmatprep.subr.bf16.mxu0 0
          %4935 = vmatpush1.bf16.msra.mxu0 %v4881
          %4936 = vmatprep.subr.bf16.mxu0 0
          %4937 = vmatpush1.bf16.msra.mxu0 %v4880
          %4938 = vmatprep.subr.bf16.mxu0 0
          %4939 = vmatpush1.bf16.msra.mxu0 %v4879
          %4940 = vmatprep.subr.bf16.mxu0 0
          %4941 = vmatpush1.bf16.msra.mxu0 %v4878
          %4942 = vmatprep.subr.bf16.mxu0 0
          %4943 = vmatpush2.bf16.msra.mxu0 %v4893
          %4944 = vmatprep.subr.bf16.mxu0 0
          %4945 = vmatpush2.bf16.msra.mxu0 %v4892
          %4946 = vmatprep.subr.bf16.mxu0 0
          %4947 = vmatpush2.bf16.msra.mxu0 %v4891
          %4948 = vmatprep.subr.bf16.mxu0 0
          %4949 = vmatpush2.bf16.msra.mxu0 %v4890
          %4950 = vmatprep.subr.bf16.mxu0 0
          %4951 = vmatpush2.bf16.msra.mxu0 %v4889
          %4952 = vmatprep.subr.bf16.mxu0 0
          %4953 = vmatpush2.bf16.msra.mxu0 %v4888
          %4954 = vmatprep.subr.bf16.mxu0 0
          %4955 = vmatpush2.bf16.msra.mxu0 %v4887
          %4956 = vmatprep.subr.bf16.mxu0 0
          %4957 = vmatpush2.bf16.msra.mxu0 %v4886
          %4958 = vmatprep.mubr.bf16.mxu0 %v4735
          %4959 = vmatmul.mubr.bf16.gmra.mxu0 %v4734
          %v4960 = vpop.f32.mrf.mxu0
          %v4961 = vadd.f32 0.0, %v4960
          %v4962 = vpop.f32.mrf.mxu0
          %v4963 = vpop.f32.mrf.mxu0
          %v4964 = vadd.f32 0.0, %v4963
          %v4965 = vpop.f32.mrf.mxu0
          %4966 = vmatprep.mubr.bf16.mxu0 %v4738
          %4967 = vmatmul.mubr.bf16.gmra.mxu0 %v4737
          %v4968 = vpop.f32.mrf.mxu0
          %v4969 = vadd.f32 0.0, %v4968
          %v4970 = vpop.f32.mrf.mxu0
          %v4971 = vpop.f32.mrf.mxu0
          %v4972 = vadd.f32 0.0, %v4971
          %v4973 = vpop.f32.mrf.mxu0
          %4974 = vmatprep.mubr.bf16.mxu0 %v4741
          %4975 = vmatmul.mubr.bf16.gmra.mxu0 %v4740
          %v4976 = vpop.f32.mrf.mxu0
          %v4977 = vadd.f32 0.0, %v4976
          %v4978 = vpop.f32.mrf.mxu0
          %v4979 = vpop.f32.mrf.mxu0
          %v4980 = vadd.f32 0.0, %v4979
          %v4981 = vpop.f32.mrf.mxu0
          %4982 = vmatprep.mubr.bf16.mxu0 %v4744
          %4983 = vmatmul.mubr.bf16.gmra.mxu0 %v4743
          %v4984 = vpop.f32.mrf.mxu0
          %v4985 = vadd.f32 0.0, %v4984
          %v4986 = vpop.f32.mrf.mxu0
          %v4987 = vpop.f32.mrf.mxu0
          %v4988 = vadd.f32 0.0, %v4987
          %v4989 = vpop.f32.mrf.mxu0
          %4990 = vmatprep.mubr.bf16.mxu0 %v4747
          %4991 = vmatmul.mubr.bf16.gmra.mxu0 %v4746
          %v4992 = vpop.f32.mrf.mxu0
          %v4993 = vadd.f32 0.0, %v4992
          %v4994 = vpop.f32.mrf.mxu0
          %v4995 = vpop.f32.mrf.mxu0
          %v4996 = vadd.f32 0.0, %v4995
          %v4997 = vpop.f32.mrf.mxu0
          %4998 = vmatprep.mubr.bf16.mxu0 %v4750
          %4999 = vmatmul.mubr.bf16.gmra.mxu0 %v4749
          %v5000 = vpop.f32.mrf.mxu0
          %v5001 = vadd.f32 0.0, %v5000
          %v5002 = vpop.f32.mrf.mxu0
          %v5003 = vpop.f32.mrf.mxu0
          %v5004 = vadd.f32 0.0, %v5003
          %v5005 = vpop.f32.mrf.mxu0
          %5006 = vmatprep.mubr.bf16.mxu0 %v4753
          %5007 = vmatmul.mubr.bf16.gmra.mxu0 %v4752
          %v5008 = vpop.f32.mrf.mxu0
          %v5009 = vadd.f32 0.0, %v5008
          %v5010 = vpop.f32.mrf.mxu0
          %v5011 = vpop.f32.mrf.mxu0
          %v5012 = vadd.f32 0.0, %v5011
          %v5013 = vpop.f32.mrf.mxu0
          %5014 = vmatprep.mubr.bf16.mxu0 %v4756
          %5015 = vmatmul.mubr.bf16.gmra.mxu0 %v4755
          %v5016 = vpop.f32.mrf.mxu0
          %v5017 = vadd.f32 0.0, %v5016
          %v5018 = vpop.f32.mrf.mxu0
          %v5019 = vpop.f32.mrf.mxu0
          %v5020 = vadd.f32 0.0, %v5019
          %v5021 = vpop.f32.mrf.mxu0
          %5022 = vdwg.mxu0
          %5023 = vmatprep.subr.bf16.mxu0 0
          %5024 = vmatpush1.bf16.msra.mxu0 %v4901
          %5025 = vmatprep.subr.bf16.mxu0 0
          %5026 = vmatpush1.bf16.msra.mxu0 %v4900
          %5027 = vmatprep.subr.bf16.mxu0 0
          %5028 = vmatpush1.bf16.msra.mxu0 %v4899
          %5029 = vmatprep.subr.bf16.mxu0 0
          %5030 = vmatpush1.bf16.msra.mxu0 %v4898
          %5031 = vmatprep.subr.bf16.mxu0 0
          %5032 = vmatpush1.bf16.msra.mxu0 %v4897
          %5033 = vmatprep.subr.bf16.mxu0 0
          %5034 = vmatpush1.bf16.msra.mxu0 %v4896
          %5035 = vmatprep.subr.bf16.mxu0 0
          %5036 = vmatpush1.bf16.msra.mxu0 %v4895
          %5037 = vmatprep.subr.bf16.mxu0 0
          %5038 = vmatpush1.bf16.msra.mxu0 %v4894
          %5039 = vmatprep.subr.bf16.mxu0 0
          %5040 = vmatpush2.bf16.msra.mxu0 0
          %5041 = vmatprep.subr.bf16.mxu0 0
          %5042 = vmatpush2.bf16.msra.mxu0 0
          %5043 = vmatprep.subr.bf16.mxu0 0
          %5044 = vmatpush2.bf16.msra.mxu0 0
          %5045 = vmatprep.subr.bf16.mxu0 0
          %5046 = vmatpush2.bf16.msra.mxu0 0
          %5047 = vmatprep.subr.bf16.mxu0 0
          %5048 = vmatpush2.bf16.msra.mxu0 0
          %5049 = vmatprep.subr.bf16.mxu0 0
          %5050 = vmatpush2.bf16.msra.mxu0 0
          %5051 = vmatprep.subr.bf16.mxu0 0
          %5052 = vmatpush2.bf16.msra.mxu0 0
          %5053 = vmatprep.subr.bf16.mxu0 0
          %5054 = vmatpush2.bf16.msra.mxu0 0
          %5055 = vmatprep.mubr.bf16.mxu0 0
          %5056 = vmatmul.mubr.bf16.gmra.mxu0 %v4736
          %v5057 = vpop.f32.mrf.mxu0
          %v5058 = vadd.f32 %v4961, %v5057
          %v5059 = vpop.f32.mrf.mxu0
          %v5060 = vpop.f32.mrf.mxu0
          %v5061 = vadd.f32 %v4964, %v5060
          %v5062 = vpop.f32.mrf.mxu0
          %5063 = vmatprep.mubr.bf16.mxu0 0
          %5064 = vmatmul.mubr.bf16.gmra.mxu0 %v4739
          %v5065 = vpop.f32.mrf.mxu0
          %v5066 = vadd.f32 %v4969, %v5065
          %v5067 = vpop.f32.mrf.mxu0
          %v5068 = vpop.f32.mrf.mxu0
          %v5069 = vadd.f32 %v4972, %v5068
          %v5070 = vpop.f32.mrf.mxu0
          %5071 = vmatprep.mubr.bf16.mxu0 0
          %5072 = vmatmul.mubr.bf16.gmra.mxu0 %v4742
          %v5073 = vpop.f32.mrf.mxu0
          %v5074 = vadd.f32 %v4977, %v5073
          %v5075 = vpop.f32.mrf.mxu0
          %v5076 = vpop.f32.mrf.mxu0
          %v5077 = vadd.f32 %v4980, %v5076
          %v5078 = vpop.f32.mrf.mxu0
          %5079 = vmatprep.mubr.bf16.mxu0 0
          %5080 = vmatmul.mubr.bf16.gmra.mxu0 %v4745
          %v5081 = vpop.f32.mrf.mxu0
          %v5082 = vadd.f32 %v4985, %v5081
          %v5083 = vpop.f32.mrf.mxu0
          %v5084 = vpop.f32.mrf.mxu0
          %v5085 = vadd.f32 %v4988, %v5084
          %v5086 = vpop.f32.mrf.mxu0
          %5087 = vmatprep.mubr.bf16.mxu0 0
          %5088 = vmatmul.mubr.bf16.gmra.mxu0 %v4748
          %v5089 = vpop.f32.mrf.mxu0
          %v5090 = vadd.f32 %v4993, %v5089
          %v5091 = vpop.f32.mrf.mxu0
          %v5092 = vpop.f32.mrf.mxu0
          %v5093 = vadd.f32 %v4996, %v5092
          %v5094 = vpop.f32.mrf.mxu0
          %5095 = vmatprep.mubr.bf16.mxu0 0
          %5096 = vmatmul.mubr.bf16.gmra.mxu0 %v4751
          %v5097 = vpop.f32.mrf.mxu0
          %v5098 = vadd.f32 %v5001, %v5097
          %v5099 = vpop.f32.mrf.mxu0
          %v5100 = vpop.f32.mrf.mxu0
          %v5101 = vadd.f32 %v5004, %v5100
          %v5102 = vpop.f32.mrf.mxu0
          %5103 = vmatprep.mubr.bf16.mxu0 0
          %5104 = vmatmul.mubr.bf16.gmra.mxu0 %v4754
          %v5105 = vpop.f32.mrf.mxu0
          %v5106 = vadd.f32 %v5009, %v5105
          %v5107 = vpop.f32.mrf.mxu0
          %v5108 = vpop.f32.mrf.mxu0
          %v5109 = vadd.f32 %v5012, %v5108
          %v5110 = vpop.f32.mrf.mxu0
          %5111 = vmatprep.mubr.bf16.mxu0 0
          %5112 = vmatmul.mubr.bf16.gmra.mxu0 %v4757
          %v5113 = vpop.f32.mrf.mxu0
          %v5114 = vadd.f32 %v5017, %v5113
          %v5115 = vpop.f32.mrf.mxu0
          %v5116 = vpop.f32.mrf.mxu0
          %v5117 = vadd.f32 %v5020, %v5116
          %v5118 = vpop.f32.mrf.mxu0
          %5119 = vdwg.mxu0
          %v5121 = vlaneseq
          %v5122 = vshrl.u32 %v5121, 7
          %v5123 = vsub.s32 0, %v5122
          %v5124 = vrot.slane %v603, %v5123
          %v5126 = vadd.f32 %v5058, %v5124
          %v5127 = vadd.f32 %v5061, %v5124
          %v5128 = vadd.f32 %v5066, %v5124
          %v5129 = vadd.f32 %v5069, %v5124
          %v5130 = vadd.f32 %v5074, %v5124
          %v5131 = vadd.f32 %v5077, %v5124
          %v5132 = vadd.f32 %v5082, %v5124
          %v5133 = vadd.f32 %v5085, %v5124
          %v5134 = vadd.f32 %v5090, %v5124
          %v5135 = vadd.f32 %v5093, %v5124
          %v5136 = vadd.f32 %v5098, %v5124
          %v5137 = vadd.f32 %v5101, %v5124
          %v5138 = vadd.f32 %v5106, %v5124
          %v5139 = vadd.f32 %v5109, %v5124
          %v5140 = vadd.f32 %v5114, %v5124
          %v5141 = vadd.f32 %v5117, %v5124
          %v5142 = vadd.f32 %v5126, %v3080
          %v5143 = vadd.f32 %v5127, %v3081
          %v5144 = vadd.f32 %v5128, %v3082
          %v5145 = vadd.f32 %v5129, %v3083
          %v5146 = vadd.f32 %v5130, %v3084
          %v5147 = vadd.f32 %v5131, %v3085
          %v5148 = vadd.f32 %v5132, %v3086
          %v5149 = vadd.f32 %v5133, %v3087
          %v5150 = vadd.f32 %v5134, %v3088
          %v5151 = vadd.f32 %v5135, %v3089
          %v5152 = vadd.f32 %v5136, %v3090
          %v5153 = vadd.f32 %v5137, %v3091
          %v5154 = vadd.f32 %v5138, %v3092
          %v5155 = vadd.f32 %v5139, %v3093
          %v5156 = vadd.f32 %v5140, %v3094
          %v5157 = vadd.f32 %v5141, %v3095
          %5158 = vst [vmem:[#allocation3] sm:$0xff] %v5142
          %5159 = vst [vmem:[#allocation3 + $0x8] sm:$0xff] %v5143
          %5160 = vst [vmem:[#allocation3 + $0x10] sm:$0xff] %v5144
          %5161 = vst [vmem:[#allocation3 + $0x18] sm:$0xff] %v5145
          %5162 = vst [vmem:[#allocation3 + $0x20] sm:$0xff] %v5146
          %5163 = vst [vmem:[#allocation3 + $0x28] sm:$0xff] %v5147
          %5164 = vst [vmem:[#allocation3 + $0x30] sm:$0xff] %v5148
          %5165 = vst [vmem:[#allocation3 + $0x38] sm:$0xff] %v5149
          %5166 = vst [vmem:[#allocation3 + $0x40] sm:$0xff] %v5150
          %5167 = vst [vmem:[#allocation3 + $0x48] sm:$0xff] %v5151
          %5168 = vst [vmem:[#allocation3 + $0x50] sm:$0xff] %v5152
          %5169 = vst [vmem:[#allocation3 + $0x58] sm:$0xff] %v5153
          %5170 = vst [vmem:[#allocation3 + $0x60] sm:$0xff] %v5154
          %5171 = vst [vmem:[#allocation3 + $0x68] sm:$0xff] %v5155
          %5172 = vst [vmem:[#allocation3 + $0x70] sm:$0xff] %v5156
          %5173 = vst [vmem:[#allocation3 + $0x78] sm:$0xff] %v5157
        $region111: #{unaligned_token_representation.1} parent=63 // pred_fallthru
          _
        // Predicated region
        $region112: #{unaligned_token_representation.1} parent=63 // pred_check
          %p5174 = pneg %p318
        $region113: #{unaligned_token_representation.1} parent=63 // pred_check_branch
          %5176 = sbr.rel (%p5174) target = $region115
        $region114: #{unaligned_token_representation.1} parent=63 // pred_region
          %s5178 = ssub.s32 2048, 2048
          %5179 = vsyncadd [#allocation4], %s5178
          %s5180 = sshll.u32 [#allocation3], 4
          %s5181 = int_to_ptr.vmem [resolvable:$true] %s5180
          %5186 = dma.vmem_to_hbm [thread:$0]  %s5181, 2048, %s12, [#allocation4], 128, 128, 8
        $region115: #{unaligned_token_representation.1} parent=63 // pred_fallthru
          _
        // Predicated region
        $region116: #{unaligned_token_representation.1} parent=63 // pred_check
          %p5187 = pneg %p318
        $region117: #{unaligned_token_representation.1} parent=63 // pred_check_branch
          %5189 = sbr.rel (%p5187) target = $region119
        $region118: #{unaligned_token_representation.1} parent=63 // pred_region
          %5190 = dma.done [#allocation4], 2048
        $region119: #{unaligned_token_representation.1} parent=63 // pred_fallthru
          _
      $region64: #{unaligned_token_representation.1} parent=5 // pred_fallthru
        _
      %p5191 = scmp.le.s32.totalorder 2, %s19
      // Predicated region
      $region120: #{unaligned_token_representation.1} parent=5 // pred_check
        %p5192 = pneg %p5191
      $region121: #{unaligned_token_representation.1} parent=5 // pred_check_branch
        %5194 = sbr.rel (%p5192) target = $region123
      $region122: #{unaligned_token_representation.1} parent=5 // pred_region
        %s5195 = ssub.s32 %s19, 2
      $region123: #{unaligned_token_representation.1} parent=5 // pred_fallthru
        _
    $region6: #{unaligned_token_representation.1} parent=1 // loop_footer
      %s23 = sadd.s32 1, %s19
    $region7: #{unaligned_token_representation.1} parent=1 // loop_footer_branch
      %18 = sbr.rel target = $region3
    $region8: #{unaligned_token_representation.1} parent=1 // loop_exit
      _
    %5196 = vsyncpa [#allocation4], 1
    %s5197 = scalar_lea.sflag [#allocation4], 1
    %5198 = vsyncpa %s5197, 1

</llo_original>
